<compile_context>
chip_gen: v6e
topology: v6e:2x2x1
jax: 0.10.0
libtpu: 0.0.40
codegen_flags: <defaults>
</compile_context>

<pallas_src>
import jax
import jax.numpy as jnp
from jax import lax
from jax.experimental import pallas as pl
from jax.experimental.pallas import tpu as pltpu


def _sigmoid(v):
    # exp and reciprocal both route to the EUP slot; exact reciprocal.
    return pl.reciprocal(1.0 + jnp.exp(-v), approx=False)


# ------------------------------ fused kernel --------------------------------
def make_m02_kernel(T, B, H, L):
    """L-layer GRU (seq-major, (t,b)-flattened rows) + Flatten + FC head."""

    def kernel(*refs):
        x2d_ref = refs[0]                              # (T*B, I)
        pos = 1
        layers = []
        for _ in range(L):
            # wih_t (I_l, 3H), whh_t (H, 3H), bih (1, 3H), bhh (1, 3H)
            layers.append(refs[pos:pos + 4])
            pos += 4
        fw1_ref, fb1_ref, fw2_ref, fb2_ref = refs[pos:pos + 4]
        pos += 4
        y_ref, hn_ref = refs[pos], refs[pos + 1]       # (T,1), (L,B,H)
        pos += 2
        seq_ref, last_ref = refs[pos], refs[pos + 1]   # VMEM scratch

        for l, (wih_ref, whh_ref, bih_ref, bhh_ref) in enumerate(layers):
            inp2d = x2d_ref[...] if l == 0 else seq_ref[...]       # (T*B, I_l)
            # Hoisted input projection for the whole sequence: ONE matmul.
            gx_all = jnp.dot(inp2d, wih_ref[...],
                             preferred_element_type=jnp.float32) + bih_ref[...]
            whh = whh_ref[...]
            bhh = bhh_ref[...]
            h = jnp.zeros((B, H), jnp.float32)
            is_last = (l == L - 1)

            for t in range(T):                         # static unroll
                gx = gx_all[t * B:(t + 1) * B, :]      # (B, 3H) value slice
                gh = jnp.dot(h, whh,
                             preferred_element_type=jnp.float32) + bhh
                rz = _sigmoid(gx[:, :2 * H] + gh[:, :2 * H])
                r = rz[:, :H]
                z = rz[:, H:]
                n = jnp.tanh(gx[:, 2 * H:] + r * gh[:, 2 * H:])
                h = (1.0 - z) * n + z * h
                if is_last:
                    last_ref[t] = h                    # top-layer seq output
                else:
                    seq_ref[t * B:(t + 1) * B, :] = h  # feeds next layer
            hn_ref[l] = h

        # FC head. torch: Flatten((T,B,H)->(T,B*H)) @ W1^T realised as
        #   sum_b  y_top[:, b, :] @ W1^T[b*H:(b+1)*H, :]   (no in-kernel reshape)
        F1 = fw1_ref.shape[2]
        y_seq = last_ref[...]                          # (T, B, H)
        acc = jnp.zeros((T, F1), jnp.float32)
        for b in range(B):                             # static unroll, B matmuls
            acc = acc + jnp.dot(y_seq[:, b, :], fw1_ref[b],
                                preferred_element_type=jnp.float32)
        f1 = _sigmoid(acc + fb1_ref[...])              # (T, F1)
        y_ref[...] = _sigmoid(
            jnp.dot(f1, fw2_ref[...], preferred_element_type=jnp.float32)
            + fb2_ref[...])

    return kernel


# --------------------------------- wrapper -----------------------------------
def m02_forward(x, params):
    """x: (T, B, in_sz) seq-major (PyTorch GRU default layout)."""
    T, B, I = x.shape
    gru = params['gru']
    L = len(gru)
    H = gru[0][1].shape[1]                             # w_hh_l0: (3H, H)
    fcw1, fcb1, fcw2, fcb2 = params['fc']
    F1 = fcw1.shape[0]

    args = [x.reshape(T * B, I).astype(jnp.float32)]   # rows in (t, b) order
    for (w_ih, w_hh, b_ih, b_hh) in gru:
        args += [w_ih.T, w_hh.T, b_ih.reshape(1, -1), b_hh.reshape(1, -1)]
    # FC1 weight (F1, B*H): flatten order is (b, h) -> present as (B, H, F1).
    fw1 = fcw1.T.reshape(B, H, F1)
    args += [fw1, fcb1.reshape(1, -1), fcw2.T, fcb2.reshape(1, -1)]

    y, hn = pl.pallas_call(
        make_m02_kernel(T, B, H, L),
        out_shape=(jax.ShapeDtypeStruct((T, 1), jnp.float32),
                   jax.ShapeDtypeStruct((L, B, H), jnp.float32)),
        scratch_shapes=[pltpu.VMEM((T * B, H), jnp.float32),   # inter-layer seq
                        pltpu.VMEM((T, B, H), jnp.float32)],   # top-layer seq
    )(*args)
    return y, hn


# ------------------------------ pure-JAX reference ---------------------------
def ref_forward(x, params):
    inp = x
    B = x.shape[1]
    hs = []
    for (w_ih, w_hh, b_ih, b_hh) in params['gru']:
        H = w_hh.shape[1]

        def step(h, x_t, w_ih=w_ih, w_hh=w_hh, b_ih=b_ih, b_hh=b_hh, H=H):
            gx = x_t @ w_ih.T + b_ih
            gh = h @ w_hh.T + b_hh
            r = jax.nn.sigmoid(gx[:, :H] + gh[:, :H])
            z = jax.nn.sigmoid(gx[:, H:2 * H] + gh[:, H:2 * H])
            n = jnp.tanh(gx[:, 2 * H:] + r * gh[:, 2 * H:])
            h_new = (1.0 - z) * n + z * h
            return h_new, h_new

        hT, ys = lax.scan(step, jnp.zeros((B, H), jnp.float32), inp)
        inp = ys
        hs.append(hT)
    hn = jnp.stack(hs, axis=0)

    fcw1, fcb1, fcw2, fcb2 = params['fc']
    flat = inp.reshape(inp.shape[0], -1)               # (T, B*H), torch Flatten
    f1 = jax.nn.sigmoid(flat @ fcw1.T + fcb1)
    y = jax.nn.sigmoid(f1 @ fcw2.T + fcb2)
    return y, hn


if __name__ == "__main__":
    # m02(in_sz=16, out_sz=32, tap=4, hid=2): tap must equal the GRU batch dim
    # (Flatten consumes (batch, hidden)), hid = num GRU layers, seq = 8.
    IN_SZ, OUT_SZ, TAP, HID, SEQ = 16, 32, 4, 2, 8
    BATCH = TAP

    keys = iter(jax.random.split(jax.random.PRNGKey(0), 32))

    def rnd(shape, scale=0.2):
        return jax.random.normal(next(keys), shape, jnp.float32) * scale

    gru_params = []
    for layer in range(HID):
        isz = IN_SZ if layer == 0 else OUT_SZ
        gru_params.append((rnd((3 * OUT_SZ, isz)),      # W_ih
                           rnd((3 * OUT_SZ, OUT_SZ)),   # W_hh
                           rnd((3 * OUT_SZ,)),          # b_ih
                           rnd((3 * OUT_SZ,))))         # b_hh
    F_IN, F_HID = OUT_SZ * TAP, OUT_SZ * TAP // 2       # 128, 64
    fc_params = (rnd((F_HID, F_IN)), rnd((F_HID,)),     # Linear(128, 64)
                 rnd((1, F_HID)), rnd((1,)))            # Linear(64, 1)
    params = {'gru': gru_params, 'fc': fc_params}

    x = jax.random.normal(next(keys), (SEQ, BATCH, IN_SZ), jnp.float32)

    y, hn = m02_forward(x, params)
    jax.block_until_ready((y, hn))

    y_ref, hn_ref = ref_forward(x, params)
    assert y.shape == (SEQ, 1) and hn.shape == (HID, BATCH, OUT_SZ)
    assert jnp.allclose(y, y_ref, atol=2e-3, rtol=2e-3), \
        f"y mismatch, max abs diff {jnp.max(jnp.abs(y - y_ref))}"
    assert jnp.allclose(hn, hn_ref, atol=2e-3, rtol=2e-3), \
        f"hn mismatch, max abs diff {jnp.max(jnp.abs(hn - hn_ref))}"
    print("KERNEL_OK")
</pallas_src>

<mosaic_0001>
module attributes {stable_mosaic.version = 11 : i64} {
  func.func @kernel(%arg0: memref<32x16xf32, #tpu.memory_space<vmem>>, %arg1: memref<16x96xf32, #tpu.memory_space<vmem>>, %arg2: memref<32x96xf32, #tpu.memory_space<vmem>>, %arg3: memref<1x96xf32, #tpu.memory_space<vmem>>, %arg4: memref<1x96xf32, #tpu.memory_space<vmem>>, %arg5: memref<32x96xf32, #tpu.memory_space<vmem>>, %arg6: memref<32x96xf32, #tpu.memory_space<vmem>>, %arg7: memref<1x96xf32, #tpu.memory_space<vmem>>, %arg8: memref<1x96xf32, #tpu.memory_space<vmem>>, %arg9: memref<4x32x64xf32, #tpu.memory_space<vmem>>, %arg10: memref<1x64xf32, #tpu.memory_space<vmem>>, %arg11: memref<64x1xf32, #tpu.memory_space<vmem>>, %arg12: memref<1x1xf32, #tpu.memory_space<vmem>>, %arg13: memref<8x1xf32, #tpu.memory_space<vmem>>, %arg14: memref<2x4x32xf32, #tpu.memory_space<vmem>>, %arg15: memref<32x32xf32, #tpu.memory_space<vmem>>, %arg16: memref<8x4x32xf32, #tpu.memory_space<vmem>>) attributes {dimension_semantics = [], scalar_prefetch = 0 : i64, scratch_operands = 2 : i64, tpu.core_type = #tpu.core_type<tc>} {
    %c0 = arith.constant 0 : index
    %c0_0 = arith.constant 0 : index
    %0 = vector.load %arg0[%c0, %c0_0] : memref<32x16xf32, #tpu.memory_space<vmem>>, vector<32x16xf32>
    %c0_1 = arith.constant 0 : index
    %c0_2 = arith.constant 0 : index
    %1 = vector.load %arg1[%c0_1, %c0_2] : memref<16x96xf32, #tpu.memory_space<vmem>>, vector<16x96xf32>
    %cst = arith.constant dense<0.000000e+00> : vector<32x96xf32>
    %2 = tpu.matmul %0, %1, %cst {dimension_numbers = #tpu.dot_dimension_numbers<[1], [0], [0], [1], [0, 0, 1, 1], [], []>} : vector<32x16xf32>, vector<16x96xf32>, vector<32x96xf32> -> vector<32x96xf32>
    %c0_3 = arith.constant 0 : index
    %c0_4 = arith.constant 0 : index
    %3 = vector.load %arg3[%c0_3, %c0_4] : memref<1x96xf32, #tpu.memory_space<vmem>>, vector<1x96xf32>
    %4 = vector.broadcast %3 : vector<1x96xf32> to vector<32x96xf32>
    %5 = arith.addf %2, %4 : vector<32x96xf32>
    %c0_5 = arith.constant 0 : index
    %c0_6 = arith.constant 0 : index
    %6 = vector.load %arg2[%c0_5, %c0_6] : memref<32x96xf32, #tpu.memory_space<vmem>>, vector<32x96xf32>
    %c0_7 = arith.constant 0 : index
    %c0_8 = arith.constant 0 : index
    %7 = vector.load %arg4[%c0_7, %c0_8] : memref<1x96xf32, #tpu.memory_space<vmem>>, vector<1x96xf32>
    %cst_9 = arith.constant 0.000000e+00 : f32
    %8 = vector.broadcast %cst_9 : f32 to vector<4x32xf32>
    %9 = vector.extract_strided_slice %5 {offsets = [0, 0], sizes = [4, 96], strides = [1, 1]} : vector<32x96xf32> to vector<4x96xf32>
    %cst_10 = arith.constant dense<0.000000e+00> : vector<4x96xf32>
    %10 = tpu.matmul %8, %6, %cst_10 {dimension_numbers = #tpu.dot_dimension_numbers<[1], [0], [0], [1], [0, 0, 1, 1], [], []>} : vector<4x32xf32>, vector<32x96xf32>, vector<4x96xf32> -> vector<4x96xf32>
    %11 = vector.broadcast %7 : vector<1x96xf32> to vector<4x96xf32>
    %12 = arith.addf %10, %11 : vector<4x96xf32>
    %13 = vector.extract_strided_slice %9 {offsets = [0, 0], sizes = [4, 64], strides = [1, 1]} : vector<4x96xf32> to vector<4x64xf32>
    %14 = vector.extract_strided_slice %12 {offsets = [0, 0], sizes = [4, 64], strides = [1, 1]} : vector<4x96xf32> to vector<4x64xf32>
    %15 = arith.addf %13, %14 : vector<4x64xf32>
    %cst_11 = arith.constant 0.000000e+00 : f32
    %16 = vector.broadcast %cst_11 : f32 to vector<4x64xf32>
    %17 = arith.subf %16, %15 : vector<4x64xf32>
    %18 = math.exp %17 : vector<4x64xf32>
    %cst_12 = arith.constant 1.000000e+00 : f32
    %19 = vector.broadcast %cst_12 : f32 to vector<4x64xf32>
    %20 = arith.addf %19, %18 : vector<4x64xf32>
    %21 = tpu.reciprocal %20 : vector<4x64xf32> -> vector<4x64xf32>
    %22 = vector.extract_strided_slice %21 {offsets = [0, 0], sizes = [4, 32], strides = [1, 1]} : vector<4x64xf32> to vector<4x32xf32>
    %23 = vector.extract_strided_slice %21 {offsets = [0, 32], sizes = [4, 32], strides = [1, 1]} : vector<4x64xf32> to vector<4x32xf32>
    %24 = vector.extract_strided_slice %9 {offsets = [0, 64], sizes = [4, 32], strides = [1, 1]} : vector<4x96xf32> to vector<4x32xf32>
    %25 = vector.extract_strided_slice %12 {offsets = [0, 64], sizes = [4, 32], strides = [1, 1]} : vector<4x96xf32> to vector<4x32xf32>
    %26 = arith.mulf %22, %25 : vector<4x32xf32>
    %27 = arith.addf %24, %26 : vector<4x32xf32>
    %28 = math.tanh %27 : vector<4x32xf32>
    %cst_13 = arith.constant 1.000000e+00 : f32
    %29 = vector.broadcast %cst_13 : f32 to vector<4x32xf32>
    %30 = arith.subf %29, %23 : vector<4x32xf32>
    %31 = arith.mulf %30, %28 : vector<4x32xf32>
    %32 = arith.mulf %23, %8 : vector<4x32xf32>
    %33 = arith.addf %31, %32 : vector<4x32xf32>
    %c0_14 = arith.constant 0 : index
    %c0_15 = arith.constant 0 : index
    %34 = vector.load %arg15[%c0_14, %c0_15] : memref<32x32xf32, #tpu.memory_space<vmem>>, vector<4x32xf32>
    tpu.vector_store %arg15[%c0_14, %c0_15], %33 {strides = array<i32>} : memref<32x32xf32, #tpu.memory_space<vmem>>, vector<4x32xf32>,
    %35 = vector.extract_strided_slice %5 {offsets = [4, 0], sizes = [4, 96], strides = [1, 1]} : vector<32x96xf32> to vector<4x96xf32>
    %cst_16 = arith.constant dense<0.000000e+00> : vector<4x96xf32>
    %36 = tpu.matmul %33, %6, %cst_16 {dimension_numbers = #tpu.dot_dimension_numbers<[1], [0], [0], [1], [0, 0, 1, 1], [], []>} : vector<4x32xf32>, vector<32x96xf32>, vector<4x96xf32> -> vector<4x96xf32>
    %37 = vector.broadcast %7 : vector<1x96xf32> to vector<4x96xf32>
    %38 = arith.addf %36, %37 : vector<4x96xf32>
    %39 = vector.extract_strided_slice %35 {offsets = [0, 0], sizes = [4, 64], strides = [1, 1]} : vector<4x96xf32> to vector<4x64xf32>
    %40 = vector.extract_strided_slice %38 {offsets = [0, 0], sizes = [4, 64], strides = [1, 1]} : vector<4x96xf32> to vector<4x64xf32>
    %41 = arith.addf %39, %40 : vector<4x64xf32>
    %cst_17 = arith.constant 0.000000e+00 : f32
    %42 = vector.broadcast %cst_17 : f32 to vector<4x64xf32>
    %43 = arith.subf %42, %41 : vector<4x64xf32>
    %44 = math.exp %43 : vector<4x64xf32>
    %cst_18 = arith.constant 1.000000e+00 : f32
    %45 = vector.broadcast %cst_18 : f32 to vector<4x64xf32>
    %46 = arith.addf %45, %44 : vector<4x64xf32>
    %47 = tpu.reciprocal %46 : vector<4x64xf32> -> vector<4x64xf32>
    %48 = vector.extract_strided_slice %47 {offsets = [0, 0], sizes = [4, 32], strides = [1, 1]} : vector<4x64xf32> to vector<4x32xf32>
    %49 = vector.extract_strided_slice %47 {offsets = [0, 32], sizes = [4, 32], strides = [1, 1]} : vector<4x64xf32> to vector<4x32xf32>
    %50 = vector.extract_strided_slice %35 {offsets = [0, 64], sizes = [4, 32], strides = [1, 1]} : vector<4x96xf32> to vector<4x32xf32>
    %51 = vector.extract_strided_slice %38 {offsets = [0, 64], sizes = [4, 32], strides = [1, 1]} : vector<4x96xf32> to vector<4x32xf32>
    %52 = arith.mulf %48, %51 : vector<4x32xf32>
    %53 = arith.addf %50, %52 : vector<4x32xf32>
    %54 = math.tanh %53 : vector<4x32xf32>
    %cst_19 = arith.constant 1.000000e+00 : f32
    %55 = vector.broadcast %cst_19 : f32 to vector<4x32xf32>
    %56 = arith.subf %55, %49 : vector<4x32xf32>
    %57 = arith.mulf %56, %54 : vector<4x32xf32>
    %58 = arith.mulf %49, %33 : vector<4x32xf32>
    %59 = arith.addf %57, %58 : vector<4x32xf32>
    %c4 = arith.constant 4 : index
    %c0_20 = arith.constant 0 : index
    %60 = vector.load %arg15[%c4, %c0_20] : memref<32x32xf32, #tpu.memory_space<vmem>>, vector<4x32xf32>
    tpu.vector_store %arg15[%c4, %c0_20], %59 {strides = array<i32>} : memref<32x32xf32, #tpu.memory_space<vmem>>, vector<4x32xf32>,
    %61 = vector.extract_strided_slice %5 {offsets = [8, 0], sizes = [4, 96], strides = [1, 1]} : vector<32x96xf32> to vector<4x96xf32>
    %cst_21 = arith.constant dense<0.000000e+00> : vector<4x96xf32>
    %62 = tpu.matmul %59, %6, %cst_21 {dimension_numbers = #tpu.dot_dimension_numbers<[1], [0], [0], [1], [0, 0, 1, 1], [], []>} : vector<4x32xf32>, vector<32x96xf32>, vector<4x96xf32> -> vector<4x96xf32>
    %63 = vector.broadcast %7 : vector<1x96xf32> to vector<4x96xf32>
    %64 = arith.addf %62, %63 : vector<4x96xf32>
    %65 = vector.extract_strided_slice %61 {offsets = [0, 0], sizes = [4, 64], strides = [1, 1]} : vector<4x96xf32> to vector<4x64xf32>
    %66 = vector.extract_strided_slice %64 {offsets = [0, 0], sizes = [4, 64], strides = [1, 1]} : vector<4x96xf32> to vector<4x64xf32>
    %67 = arith.addf %65, %66 : vector<4x64xf32>
    %cst_22 = arith.constant 0.000000e+00 : f32
    %68 = vector.broadcast %cst_22 : f32 to vector<4x64xf32>
    %69 = arith.subf %68, %67 : vector<4x64xf32>
    %70 = math.exp %69 : vector<4x64xf32>
    %cst_23 = arith.constant 1.000000e+00 : f32
    %71 = vector.broadcast %cst_23 : f32 to vector<4x64xf32>
    %72 = arith.addf %71, %70 : vector<4x64xf32>
    %73 = tpu.reciprocal %72 : vector<4x64xf32> -> vector<4x64xf32>
    %74 = vector.extract_strided_slice %73 {offsets = [0, 0], sizes = [4, 32], strides = [1, 1]} : vector<4x64xf32> to vector<4x32xf32>
    %75 = vector.extract_strided_slice %73 {offsets = [0, 32], sizes = [4, 32], strides = [1, 1]} : vector<4x64xf32> to vector<4x32xf32>
    %76 = vector.extract_strided_slice %61 {offsets = [0, 64], sizes = [4, 32], strides = [1, 1]} : vector<4x96xf32> to vector<4x32xf32>
    %77 = vector.extract_strided_slice %64 {offsets = [0, 64], sizes = [4, 32], strides = [1, 1]} : vector<4x96xf32> to vector<4x32xf32>
    %78 = arith.mulf %74, %77 : vector<4x32xf32>
    %79 = arith.addf %76, %78 : vector<4x32xf32>
    %80 = math.tanh %79 : vector<4x32xf32>
    %cst_24 = arith.constant 1.000000e+00 : f32
    %81 = vector.broadcast %cst_24 : f32 to vector<4x32xf32>
    %82 = arith.subf %81, %75 : vector<4x32xf32>
    %83 = arith.mulf %82, %80 : vector<4x32xf32>
    %84 = arith.mulf %75, %59 : vector<4x32xf32>
    %85 = arith.addf %83, %84 : vector<4x32xf32>
    %c8 = arith.constant 8 : index
    %c0_25 = arith.constant 0 : index
    %86 = vector.load %arg15[%c8, %c0_25] : memref<32x32xf32, #tpu.memory_space<vmem>>, vector<4x32xf32>
    tpu.vector_store %arg15[%c8, %c0_25], %85 {strides = array<i32>} : memref<32x32xf32, #tpu.memory_space<vmem>>, vector<4x32xf32>,
    %87 = vector.extract_strided_slice %5 {offsets = [12, 0], sizes = [4, 96], strides = [1, 1]} : vector<32x96xf32> to vector<4x96xf32>
    %cst_26 = arith.constant dense<0.000000e+00> : vector<4x96xf32>
    %88 = tpu.matmul %85, %6, %cst_26 {dimension_numbers = #tpu.dot_dimension_numbers<[1], [0], [0], [1], [0, 0, 1, 1], [], []>} : vector<4x32xf32>, vector<32x96xf32>, vector<4x96xf32> -> vector<4x96xf32>
    %89 = vector.broadcast %7 : vector<1x96xf32> to vector<4x96xf32>
    %90 = arith.addf %88, %89 : vector<4x96xf32>
    %91 = vector.extract_strided_slice %87 {offsets = [0, 0], sizes = [4, 64], strides = [1, 1]} : vector<4x96xf32> to vector<4x64xf32>
    %92 = vector.extract_strided_slice %90 {offsets = [0, 0], sizes = [4, 64], strides = [1, 1]} : vector<4x96xf32> to vector<4x64xf32>
    %93 = arith.addf %91, %92 : vector<4x64xf32>
    %cst_27 = arith.constant 0.000000e+00 : f32
    %94 = vector.broadcast %cst_27 : f32 to vector<4x64xf32>
    %95 = arith.subf %94, %93 : vector<4x64xf32>
    %96 = math.exp %95 : vector<4x64xf32>
    %cst_28 = arith.constant 1.000000e+00 : f32
    %97 = vector.broadcast %cst_28 : f32 to vector<4x64xf32>
    %98 = arith.addf %97, %96 : vector<4x64xf32>
    %99 = tpu.reciprocal %98 : vector<4x64xf32> -> vector<4x64xf32>
    %100 = vector.extract_strided_slice %99 {offsets = [0, 0], sizes = [4, 32], strides = [1, 1]} : vector<4x64xf32> to vector<4x32xf32>
    %101 = vector.extract_strided_slice %99 {offsets = [0, 32], sizes = [4, 32], strides = [1, 1]} : vector<4x64xf32> to vector<4x32xf32>
    %102 = vector.extract_strided_slice %87 {offsets = [0, 64], sizes = [4, 32], strides = [1, 1]} : vector<4x96xf32> to vector<4x32xf32>
    %103 = vector.extract_strided_slice %90 {offsets = [0, 64], sizes = [4, 32], strides = [1, 1]} : vector<4x96xf32> to vector<4x32xf32>
    %104 = arith.mulf %100, %103 : vector<4x32xf32>
    %105 = arith.addf %102, %104 : vector<4x32xf32>
    %106 = math.tanh %105 : vector<4x32xf32>
    %cst_29 = arith.constant 1.000000e+00 : f32
    %107 = vector.broadcast %cst_29 : f32 to vector<4x32xf32>
    %108 = arith.subf %107, %101 : vector<4x32xf32>
    %109 = arith.mulf %108, %106 : vector<4x32xf32>
    %110 = arith.mulf %101, %85 : vector<4x32xf32>
    %111 = arith.addf %109, %110 : vector<4x32xf32>
    %c12 = arith.constant 12 : index
    %c0_30 = arith.constant 0 : index
    %112 = vector.load %arg15[%c12, %c0_30] : memref<32x32xf32, #tpu.memory_space<vmem>>, vector<4x32xf32>
    tpu.vector_store %arg15[%c12, %c0_30], %111 {strides = array<i32>} : memref<32x32xf32, #tpu.memory_space<vmem>>, vector<4x32xf32>,
    %113 = vector.extract_strided_slice %5 {offsets = [16, 0], sizes = [4, 96], strides = [1, 1]} : vector<32x96xf32> to vector<4x96xf32>
    %cst_31 = arith.constant dense<0.000000e+00> : vector<4x96xf32>
    %114 = tpu.matmul %111, %6, %cst_31 {dimension_numbers = #tpu.dot_dimension_numbers<[1], [0], [0], [1], [0, 0, 1, 1], [], []>} : vector<4x32xf32>, vector<32x96xf32>, vector<4x96xf32> -> vector<4x96xf32>
    %115 = vector.broadcast %7 : vector<1x96xf32> to vector<4x96xf32>
    %116 = arith.addf %114, %115 : vector<4x96xf32>
    %117 = vector.extract_strided_slice %113 {offsets = [0, 0], sizes = [4, 64], strides = [1, 1]} : vector<4x96xf32> to vector<4x64xf32>
    %118 = vector.extract_strided_slice %116 {offsets = [0, 0], sizes = [4, 64], strides = [1, 1]} : vector<4x96xf32> to vector<4x64xf32>
    %119 = arith.addf %117, %118 : vector<4x64xf32>
    %cst_32 = arith.constant 0.000000e+00 : f32
    %120 = vector.broadcast %cst_32 : f32 to vector<4x64xf32>
    %121 = arith.subf %120, %119 : vector<4x64xf32>
    %122 = math.exp %121 : vector<4x64xf32>
    %cst_33 = arith.constant 1.000000e+00 : f32
    %123 = vector.broadcast %cst_33 : f32 to vector<4x64xf32>
    %124 = arith.addf %123, %122 : vector<4x64xf32>
    %125 = tpu.reciprocal %124 : vector<4x64xf32> -> vector<4x64xf32>
    %126 = vector.extract_strided_slice %125 {offsets = [0, 0], sizes = [4, 32], strides = [1, 1]} : vector<4x64xf32> to vector<4x32xf32>
    %127 = vector.extract_strided_slice %125 {offsets = [0, 32], sizes = [4, 32], strides = [1, 1]} : vector<4x64xf32> to vector<4x32xf32>
    %128 = vector.extract_strided_slice %113 {offsets = [0, 64], sizes = [4, 32], strides = [1, 1]} : vector<4x96xf32> to vector<4x32xf32>
    %129 = vector.extract_strided_slice %116 {offsets = [0, 64], sizes = [4, 32], strides = [1, 1]} : vector<4x96xf32> to vector<4x32xf32>
    %130 = arith.mulf %126, %129 : vector<4x32xf32>
    %131 = arith.addf %128, %130 : vector<4x32xf32>
    %132 = math.tanh %131 : vector<4x32xf32>
    %cst_34 = arith.constant 1.000000e+00 : f32
    %133 = vector.broadcast %cst_34 : f32 to vector<4x32xf32>
    %134 = arith.subf %133, %127 : vector<4x32xf32>
    %135 = arith.mulf %134, %132 : vector<4x32xf32>
    %136 = arith.mulf %127, %111 : vector<4x32xf32>
    %137 = arith.addf %135, %136 : vector<4x32xf32>
    %c16 = arith.constant 16 : index
    %c0_35 = arith.constant 0 : index
    %138 = vector.load %arg15[%c16, %c0_35] : memref<32x32xf32, #tpu.memory_space<vmem>>, vector<4x32xf32>
    tpu.vector_store %arg15[%c16, %c0_35], %137 {strides = array<i32>} : memref<32x32xf32, #tpu.memory_space<vmem>>, vector<4x32xf32>,
    %139 = vector.extract_strided_slice %5 {offsets = [20, 0], sizes = [4, 96], strides = [1, 1]} : vector<32x96xf32> to vector<4x96xf32>
    %cst_36 = arith.constant dense<0.000000e+00> : vector<4x96xf32>
    %140 = tpu.matmul %137, %6, %cst_36 {dimension_numbers = #tpu.dot_dimension_numbers<[1], [0], [0], [1], [0, 0, 1, 1], [], []>} : vector<4x32xf32>, vector<32x96xf32>, vector<4x96xf32> -> vector<4x96xf32>
    %141 = vector.broadcast %7 : vector<1x96xf32> to vector<4x96xf32>
    %142 = arith.addf %140, %141 : vector<4x96xf32>
    %143 = vector.extract_strided_slice %139 {offsets = [0, 0], sizes = [4, 64], strides = [1, 1]} : vector<4x96xf32> to vector<4x64xf32>
    %144 = vector.extract_strided_slice %142 {offsets = [0, 0], sizes = [4, 64], strides = [1, 1]} : vector<4x96xf32> to vector<4x64xf32>
    %145 = arith.addf %143, %144 : vector<4x64xf32>
    %cst_37 = arith.constant 0.000000e+00 : f32
    %146 = vector.broadcast %cst_37 : f32 to vector<4x64xf32>
    %147 = arith.subf %146, %145 : vector<4x64xf32>
    %148 = math.exp %147 : vector<4x64xf32>
    %cst_38 = arith.constant 1.000000e+00 : f32
    %149 = vector.broadcast %cst_38 : f32 to vector<4x64xf32>
    %150 = arith.addf %149, %148 : vector<4x64xf32>
    %151 = tpu.reciprocal %150 : vector<4x64xf32> -> vector<4x64xf32>
    %152 = vector.extract_strided_slice %151 {offsets = [0, 0], sizes = [4, 32], strides = [1, 1]} : vector<4x64xf32> to vector<4x32xf32>
    %153 = vector.extract_strided_slice %151 {offsets = [0, 32], sizes = [4, 32], strides = [1, 1]} : vector<4x64xf32> to vector<4x32xf32>
    %154 = vector.extract_strided_slice %139 {offsets = [0, 64], sizes = [4, 32], strides = [1, 1]} : vector<4x96xf32> to vector<4x32xf32>
    %155 = vector.extract_strided_slice %142 {offsets = [0, 64], sizes = [4, 32], strides = [1, 1]} : vector<4x96xf32> to vector<4x32xf32>
    %156 = arith.mulf %152, %155 : vector<4x32xf32>
    %157 = arith.addf %154, %156 : vector<4x32xf32>
    %158 = math.tanh %157 : vector<4x32xf32>
    %cst_39 = arith.constant 1.000000e+00 : f32
    %159 = vector.broadcast %cst_39 : f32 to vector<4x32xf32>
    %160 = arith.subf %159, %153 : vector<4x32xf32>
    %161 = arith.mulf %160, %158 : vector<4x32xf32>
    %162 = arith.mulf %153, %137 : vector<4x32xf32>
    %163 = arith.addf %161, %162 : vector<4x32xf32>
    %c20 = arith.constant 20 : index
    %c0_40 = arith.constant 0 : index
    %164 = vector.load %arg15[%c20, %c0_40] : memref<32x32xf32, #tpu.memory_space<vmem>>, vector<4x32xf32>
    tpu.vector_store %arg15[%c20, %c0_40], %163 {strides = array<i32>} : memref<32x32xf32, #tpu.memory_space<vmem>>, vector<4x32xf32>,
    %165 = vector.extract_strided_slice %5 {offsets = [24, 0], sizes = [4, 96], strides = [1, 1]} : vector<32x96xf32> to vector<4x96xf32>
    %cst_41 = arith.constant dense<0.000000e+00> : vector<4x96xf32>
    %166 = tpu.matmul %163, %6, %cst_41 {dimension_numbers = #tpu.dot_dimension_numbers<[1], [0], [0], [1], [0, 0, 1, 1], [], []>} : vector<4x32xf32>, vector<32x96xf32>, vector<4x96xf32> -> vector<4x96xf32>
    %167 = vector.broadcast %7 : vector<1x96xf32> to vector<4x96xf32>
    %168 = arith.addf %166, %167 : vector<4x96xf32>
    %169 = vector.extract_strided_slice %165 {offsets = [0, 0], sizes = [4, 64], strides = [1, 1]} : vector<4x96xf32> to vector<4x64xf32>
    %170 = vector.extract_strided_slice %168 {offsets = [0, 0], sizes = [4, 64], strides = [1, 1]} : vector<4x96xf32> to vector<4x64xf32>
    %171 = arith.addf %169, %170 : vector<4x64xf32>
    %cst_42 = arith.constant 0.000000e+00 : f32
    %172 = vector.broadcast %cst_42 : f32 to vector<4x64xf32>
    %173 = arith.subf %172, %171 : vector<4x64xf32>
    %174 = math.exp %173 : vector<4x64xf32>
    %cst_43 = arith.constant 1.000000e+00 : f32
    %175 = vector.broadcast %cst_43 : f32 to vector<4x64xf32>
    %176 = arith.addf %175, %174 : vector<4x64xf32>
    %177 = tpu.reciprocal %176 : vector<4x64xf32> -> vector<4x64xf32>
    %178 = vector.extract_strided_slice %177 {offsets = [0, 0], sizes = [4, 32], strides = [1, 1]} : vector<4x64xf32> to vector<4x32xf32>
    %179 = vector.extract_strided_slice %177 {offsets = [0, 32], sizes = [4, 32], strides = [1, 1]} : vector<4x64xf32> to vector<4x32xf32>
    %180 = vector.extract_strided_slice %165 {offsets = [0, 64], sizes = [4, 32], strides = [1, 1]} : vector<4x96xf32> to vector<4x32xf32>
    %181 = vector.extract_strided_slice %168 {offsets = [0, 64], sizes = [4, 32], strides = [1, 1]} : vector<4x96xf32> to vector<4x32xf32>
    %182 = arith.mulf %178, %181 : vector<4x32xf32>
    %183 = arith.addf %180, %182 : vector<4x32xf32>
    %184 = math.tanh %183 : vector<4x32xf32>
    %cst_44 = arith.constant 1.000000e+00 : f32
    %185 = vector.broadcast %cst_44 : f32 to vector<4x32xf32>
    %186 = arith.subf %185, %179 : vector<4x32xf32>
    %187 = arith.mulf %186, %184 : vector<4x32xf32>
    %188 = arith.mulf %179, %163 : vector<4x32xf32>
    %189 = arith.addf %187, %188 : vector<4x32xf32>
    %c24 = arith.constant 24 : index
    %c0_45 = arith.constant 0 : index
    %190 = vector.load %arg15[%c24, %c0_45] : memref<32x32xf32, #tpu.memory_space<vmem>>, vector<4x32xf32>
    tpu.vector_store %arg15[%c24, %c0_45], %189 {strides = array<i32>} : memref<32x32xf32, #tpu.memory_space<vmem>>, vector<4x32xf32>,
    %191 = vector.extract_strided_slice %5 {offsets = [28, 0], sizes = [4, 96], strides = [1, 1]} : vector<32x96xf32> to vector<4x96xf32>
    %cst_46 = arith.constant dense<0.000000e+00> : vector<4x96xf32>
    %192 = tpu.matmul %189, %6, %cst_46 {dimension_numbers = #tpu.dot_dimension_numbers<[1], [0], [0], [1], [0, 0, 1, 1], [], []>} : vector<4x32xf32>, vector<32x96xf32>, vector<4x96xf32> -> vector<4x96xf32>
    %193 = vector.broadcast %7 : vector<1x96xf32> to vector<4x96xf32>
    %194 = arith.addf %192, %193 : vector<4x96xf32>
    %195 = vector.extract_strided_slice %191 {offsets = [0, 0], sizes = [4, 64], strides = [1, 1]} : vector<4x96xf32> to vector<4x64xf32>
    %196 = vector.extract_strided_slice %194 {offsets = [0, 0], sizes = [4, 64], strides = [1, 1]} : vector<4x96xf32> to vector<4x64xf32>
    %197 = arith.addf %195, %196 : vector<4x64xf32>
    %cst_47 = arith.constant 0.000000e+00 : f32
    %198 = vector.broadcast %cst_47 : f32 to vector<4x64xf32>
    %199 = arith.subf %198, %197 : vector<4x64xf32>
    %200 = math.exp %199 : vector<4x64xf32>
    %cst_48 = arith.constant 1.000000e+00 : f32
    %201 = vector.broadcast %cst_48 : f32 to vector<4x64xf32>
    %202 = arith.addf %201, %200 : vector<4x64xf32>
    %203 = tpu.reciprocal %202 : vector<4x64xf32> -> vector<4x64xf32>
    %204 = vector.extract_strided_slice %203 {offsets = [0, 0], sizes = [4, 32], strides = [1, 1]} : vector<4x64xf32> to vector<4x32xf32>
    %205 = vector.extract_strided_slice %203 {offsets = [0, 32], sizes = [4, 32], strides = [1, 1]} : vector<4x64xf32> to vector<4x32xf32>
    %206 = vector.extract_strided_slice %191 {offsets = [0, 64], sizes = [4, 32], strides = [1, 1]} : vector<4x96xf32> to vector<4x32xf32>
    %207 = vector.extract_strided_slice %194 {offsets = [0, 64], sizes = [4, 32], strides = [1, 1]} : vector<4x96xf32> to vector<4x32xf32>
    %208 = arith.mulf %204, %207 : vector<4x32xf32>
    %209 = arith.addf %206, %208 : vector<4x32xf32>
    %210 = math.tanh %209 : vector<4x32xf32>
    %cst_49 = arith.constant 1.000000e+00 : f32
    %211 = vector.broadcast %cst_49 : f32 to vector<4x32xf32>
    %212 = arith.subf %211, %205 : vector<4x32xf32>
    %213 = arith.mulf %212, %210 : vector<4x32xf32>
    %214 = arith.mulf %205, %189 : vector<4x32xf32>
    %215 = arith.addf %213, %214 : vector<4x32xf32>
    %c28 = arith.constant 28 : index
    %c0_50 = arith.constant 0 : index
    %216 = vector.load %arg15[%c28, %c0_50] : memref<32x32xf32, #tpu.memory_space<vmem>>, vector<4x32xf32>
    tpu.vector_store %arg15[%c28, %c0_50], %215 {strides = array<i32>} : memref<32x32xf32, #tpu.memory_space<vmem>>, vector<4x32xf32>,
    %c0_51 = arith.constant 0 : index
    %c0_52 = arith.constant 0 : index
    %c0_53 = arith.constant 0 : index
    %217 = vector.load %arg14[%c0_51, %c0_52, %c0_53] : memref<2x4x32xf32, #tpu.memory_space<vmem>>, vector<1x4x32xf32>
    %218 = vector.shape_cast %217 : vector<1x4x32xf32> to vector<4x32xf32>
    %219 = vector.shape_cast %215 : vector<4x32xf32> to vector<1x4x32xf32>
    tpu.vector_store %arg14[%c0_51, %c0_52, %c0_53], %219 {strides = array<i32>} : memref<2x4x32xf32, #tpu.memory_space<vmem>>, vector<1x4x32xf32>,
    %c0_54 = arith.constant 0 : index
    %c0_55 = arith.constant 0 : index
    %220 = vector.load %arg15[%c0_54, %c0_55] : memref<32x32xf32, #tpu.memory_space<vmem>>, vector<32x32xf32>
    %c0_56 = arith.constant 0 : index
    %c0_57 = arith.constant 0 : index
    %221 = vector.load %arg5[%c0_56, %c0_57] : memref<32x96xf32, #tpu.memory_space<vmem>>, vector<32x96xf32>
    %cst_58 = arith.constant dense<0.000000e+00> : vector<32x96xf32>
    %222 = tpu.matmul %220, %221, %cst_58 {dimension_numbers = #tpu.dot_dimension_numbers<[1], [0], [0], [1], [0, 0, 1, 1], [], []>} : vector<32x32xf32>, vector<32x96xf32>, vector<32x96xf32> -> vector<32x96xf32>
    %c0_59 = arith.constant 0 : index
    %c0_60 = arith.constant 0 : index
    %223 = vector.load %arg7[%c0_59, %c0_60] : memref<1x96xf32, #tpu.memory_space<vmem>>, vector<1x96xf32>
    %224 = vector.broadcast %223 : vector<1x96xf32> to vector<32x96xf32>
    %225 = arith.addf %222, %224 : vector<32x96xf32>
    %c0_61 = arith.constant 0 : index
    %c0_62 = arith.constant 0 : index
    %226 = vector.load %arg6[%c0_61, %c0_62] : memref<32x96xf32, #tpu.memory_space<vmem>>, vector<32x96xf32>
    %c0_63 = arith.constant 0 : index
    %c0_64 = arith.constant 0 : index
    %227 = vector.load %arg8[%c0_63, %c0_64] : memref<1x96xf32, #tpu.memory_space<vmem>>, vector<1x96xf32>
    %cst_65 = arith.constant 0.000000e+00 : f32
    %228 = vector.broadcast %cst_65 : f32 to vector<4x32xf32>
    %229 = vector.extract_strided_slice %225 {offsets = [0, 0], sizes = [4, 96], strides = [1, 1]} : vector<32x96xf32> to vector<4x96xf32>
    %cst_66 = arith.constant dense<0.000000e+00> : vector<4x96xf32>
    %230 = tpu.matmul %228, %226, %cst_66 {dimension_numbers = #tpu.dot_dimension_numbers<[1], [0], [0], [1], [0, 0, 1, 1], [], []>} : vector<4x32xf32>, vector<32x96xf32>, vector<4x96xf32> -> vector<4x96xf32>
    %231 = vector.broadcast %227 : vector<1x96xf32> to vector<4x96xf32>
    %232 = arith.addf %230, %231 : vector<4x96xf32>
    %233 = vector.extract_strided_slice %229 {offsets = [0, 0], sizes = [4, 64], strides = [1, 1]} : vector<4x96xf32> to vector<4x64xf32>
    %234 = vector.extract_strided_slice %232 {offsets = [0, 0], sizes = [4, 64], strides = [1, 1]} : vector<4x96xf32> to vector<4x64xf32>
    %235 = arith.addf %233, %234 : vector<4x64xf32>
    %cst_67 = arith.constant 0.000000e+00 : f32
    %236 = vector.broadcast %cst_67 : f32 to vector<4x64xf32>
    %237 = arith.subf %236, %235 : vector<4x64xf32>
    %238 = math.exp %237 : vector<4x64xf32>
    %cst_68 = arith.constant 1.000000e+00 : f32
    %239 = vector.broadcast %cst_68 : f32 to vector<4x64xf32>
    %240 = arith.addf %239, %238 : vector<4x64xf32>
    %241 = tpu.reciprocal %240 : vector<4x64xf32> -> vector<4x64xf32>
    %242 = vector.extract_strided_slice %241 {offsets = [0, 0], sizes = [4, 32], strides = [1, 1]} : vector<4x64xf32> to vector<4x32xf32>
    %243 = vector.extract_strided_slice %241 {offsets = [0, 32], sizes = [4, 32], strides = [1, 1]} : vector<4x64xf32> to vector<4x32xf32>
    %244 = vector.extract_strided_slice %229 {offsets = [0, 64], sizes = [4, 32], strides = [1, 1]} : vector<4x96xf32> to vector<4x32xf32>
    %245 = vector.extract_strided_slice %232 {offsets = [0, 64], sizes = [4, 32], strides = [1, 1]} : vector<4x96xf32> to vector<4x32xf32>
    %246 = arith.mulf %242, %245 : vector<4x32xf32>
    %247 = arith.addf %244, %246 : vector<4x32xf32>
    %248 = math.tanh %247 : vector<4x32xf32>
    %cst_69 = arith.constant 1.000000e+00 : f32
    %249 = vector.broadcast %cst_69 : f32 to vector<4x32xf32>
    %250 = arith.subf %249, %243 : vector<4x32xf32>
    %251 = arith.mulf %250, %248 : vector<4x32xf32>
    %252 = arith.mulf %243, %228 : vector<4x32xf32>
    %253 = arith.addf %251, %252 : vector<4x32xf32>
    %c0_70 = arith.constant 0 : index
    %c0_71 = arith.constant 0 : index
    %c0_72 = arith.constant 0 : index
    %254 = vector.load %arg16[%c0_70, %c0_71, %c0_72] : memref<8x4x32xf32, #tpu.memory_space<vmem>>, vector<1x4x32xf32>
    %255 = vector.shape_cast %254 : vector<1x4x32xf32> to vector<4x32xf32>
    %256 = vector.shape_cast %253 : vector<4x32xf32> to vector<1x4x32xf32>
    tpu.vector_store %arg16[%c0_70, %c0_71, %c0_72], %256 {strides = array<i32>} : memref<8x4x32xf32, #tpu.memory_space<vmem>>, vector<1x4x32xf32>,
    %257 = vector.extract_strided_slice %225 {offsets = [4, 0], sizes = [4, 96], strides = [1, 1]} : vector<32x96xf32> to vector<4x96xf32>
    %cst_73 = arith.constant dense<0.000000e+00> : vector<4x96xf32>
    %258 = tpu.matmul %253, %226, %cst_73 {dimension_numbers = #tpu.dot_dimension_numbers<[1], [0], [0], [1], [0, 0, 1, 1], [], []>} : vector<4x32xf32>, vector<32x96xf32>, vector<4x96xf32> -> vector<4x96xf32>
    %259 = vector.broadcast %227 : vector<1x96xf32> to vector<4x96xf32>
    %260 = arith.addf %258, %259 : vector<4x96xf32>
    %261 = vector.extract_strided_slice %257 {offsets = [0, 0], sizes = [4, 64], strides = [1, 1]} : vector<4x96xf32> to vector<4x64xf32>
    %262 = vector.extract_strided_slice %260 {offsets = [0, 0], sizes = [4, 64], strides = [1, 1]} : vector<4x96xf32> to vector<4x64xf32>
    %263 = arith.addf %261, %262 : vector<4x64xf32>
    %cst_74 = arith.constant 0.000000e+00 : f32
    %264 = vector.broadcast %cst_74 : f32 to vector<4x64xf32>
    %265 = arith.subf %264, %263 : vector<4x64xf32>
    %266 = math.exp %265 : vector<4x64xf32>
    %cst_75 = arith.constant 1.000000e+00 : f32
    %267 = vector.broadcast %cst_75 : f32 to vector<4x64xf32>
    %268 = arith.addf %267, %266 : vector<4x64xf32>
    %269 = tpu.reciprocal %268 : vector<4x64xf32> -> vector<4x64xf32>
    %270 = vector.extract_strided_slice %269 {offsets = [0, 0], sizes = [4, 32], strides = [1, 1]} : vector<4x64xf32> to vector<4x32xf32>
    %271 = vector.extract_strided_slice %269 {offsets = [0, 32], sizes = [4, 32], strides = [1, 1]} : vector<4x64xf32> to vector<4x32xf32>
    %272 = vector.extract_strided_slice %257 {offsets = [0, 64], sizes = [4, 32], strides = [1, 1]} : vector<4x96xf32> to vector<4x32xf32>
    %273 = vector.extract_strided_slice %260 {offsets = [0, 64], sizes = [4, 32], strides = [1, 1]} : vector<4x96xf32> to vector<4x32xf32>
    %274 = arith.mulf %270, %273 : vector<4x32xf32>
    %275 = arith.addf %272, %274 : vector<4x32xf32>
    %276 = math.tanh %275 : vector<4x32xf32>
    %cst_76 = arith.constant 1.000000e+00 : f32
    %277 = vector.broadcast %cst_76 : f32 to vector<4x32xf32>
    %278 = arith.subf %277, %271 : vector<4x32xf32>
    %279 = arith.mulf %278, %276 : vector<4x32xf32>
    %280 = arith.mulf %271, %253 : vector<4x32xf32>
    %281 = arith.addf %279, %280 : vector<4x32xf32>
    %c1 = arith.constant 1 : index
    %c0_77 = arith.constant 0 : index
    %c0_78 = arith.constant 0 : index
    %282 = vector.load %arg16[%c1, %c0_77, %c0_78] : memref<8x4x32xf32, #tpu.memory_space<vmem>>, vector<1x4x32xf32>
    %283 = vector.shape_cast %282 : vector<1x4x32xf32> to vector<4x32xf32>
    %284 = vector.shape_cast %281 : vector<4x32xf32> to vector<1x4x32xf32>
    tpu.vector_store %arg16[%c1, %c0_77, %c0_78], %284 {strides = array<i32>} : memref<8x4x32xf32, #tpu.memory_space<vmem>>, vector<1x4x32xf32>,
    %285 = vector.extract_strided_slice %225 {offsets = [8, 0], sizes = [4, 96], strides = [1, 1]} : vector<32x96xf32> to vector<4x96xf32>
    %cst_79 = arith.constant dense<0.000000e+00> : vector<4x96xf32>
    %286 = tpu.matmul %281, %226, %cst_79 {dimension_numbers = #tpu.dot_dimension_numbers<[1], [0], [0], [1], [0, 0, 1, 1], [], []>} : vector<4x32xf32>, vector<32x96xf32>, vector<4x96xf32> -> vector<4x96xf32>
    %287 = vector.broadcast %227 : vector<1x96xf32> to vector<4x96xf32>
    %288 = arith.addf %286, %287 : vector<4x96xf32>
    %289 = vector.extract_strided_slice %285 {offsets = [0, 0], sizes = [4, 64], strides = [1, 1]} : vector<4x96xf32> to vector<4x64xf32>
    %290 = vector.extract_strided_slice %288 {offsets = [0, 0], sizes = [4, 64], strides = [1, 1]} : vector<4x96xf32> to vector<4x64xf32>
    %291 = arith.addf %289, %290 : vector<4x64xf32>
    %cst_80 = arith.constant 0.000000e+00 : f32
    %292 = vector.broadcast %cst_80 : f32 to vector<4x64xf32>
    %293 = arith.subf %292, %291 : vector<4x64xf32>
    %294 = math.exp %293 : vector<4x64xf32>
    %cst_81 = arith.constant 1.000000e+00 : f32
    %295 = vector.broadcast %cst_81 : f32 to vector<4x64xf32>
    %296 = arith.addf %295, %294 : vector<4x64xf32>
    %297 = tpu.reciprocal %296 : vector<4x64xf32> -> vector<4x64xf32>
    %298 = vector.extract_strided_slice %297 {offsets = [0, 0], sizes = [4, 32], strides = [1, 1]} : vector<4x64xf32> to vector<4x32xf32>
    %299 = vector.extract_strided_slice %297 {offsets = [0, 32], sizes = [4, 32], strides = [1, 1]} : vector<4x64xf32> to vector<4x32xf32>
    %300 = vector.extract_strided_slice %285 {offsets = [0, 64], sizes = [4, 32], strides = [1, 1]} : vector<4x96xf32> to vector<4x32xf32>
    %301 = vector.extract_strided_slice %288 {offsets = [0, 64], sizes = [4, 32], strides = [1, 1]} : vector<4x96xf32> to vector<4x32xf32>
    %302 = arith.mulf %298, %301 : vector<4x32xf32>
    %303 = arith.addf %300, %302 : vector<4x32xf32>
    %304 = math.tanh %303 : vector<4x32xf32>
    %cst_82 = arith.constant 1.000000e+00 : f32
    %305 = vector.broadcast %cst_82 : f32 to vector<4x32xf32>
    %306 = arith.subf %305, %299 : vector<4x32xf32>
    %307 = arith.mulf %306, %304 : vector<4x32xf32>
    %308 = arith.mulf %299, %281 : vector<4x32xf32>
    %309 = arith.addf %307, %308 : vector<4x32xf32>
    %c2 = arith.constant 2 : index
    %c0_83 = arith.constant 0 : index
    %c0_84 = arith.constant 0 : index
    %310 = vector.load %arg16[%c2, %c0_83, %c0_84] : memref<8x4x32xf32, #tpu.memory_space<vmem>>, vector<1x4x32xf32>
    %311 = vector.shape_cast %310 : vector<1x4x32xf32> to vector<4x32xf32>
    %312 = vector.shape_cast %309 : vector<4x32xf32> to vector<1x4x32xf32>
    tpu.vector_store %arg16[%c2, %c0_83, %c0_84], %312 {strides = array<i32>} : memref<8x4x32xf32, #tpu.memory_space<vmem>>, vector<1x4x32xf32>,
    %313 = vector.extract_strided_slice %225 {offsets = [12, 0], sizes = [4, 96], strides = [1, 1]} : vector<32x96xf32> to vector<4x96xf32>
    %cst_85 = arith.constant dense<0.000000e+00> : vector<4x96xf32>
    %314 = tpu.matmul %309, %226, %cst_85 {dimension_numbers = #tpu.dot_dimension_numbers<[1], [0], [0], [1], [0, 0, 1, 1], [], []>} : vector<4x32xf32>, vector<32x96xf32>, vector<4x96xf32> -> vector<4x96xf32>
    %315 = vector.broadcast %227 : vector<1x96xf32> to vector<4x96xf32>
    %316 = arith.addf %314, %315 : vector<4x96xf32>
    %317 = vector.extract_strided_slice %313 {offsets = [0, 0], sizes = [4, 64], strides = [1, 1]} : vector<4x96xf32> to vector<4x64xf32>
    %318 = vector.extract_strided_slice %316 {offsets = [0, 0], sizes = [4, 64], strides = [1, 1]} : vector<4x96xf32> to vector<4x64xf32>
    %319 = arith.addf %317, %318 : vector<4x64xf32>
    %cst_86 = arith.constant 0.000000e+00 : f32
    %320 = vector.broadcast %cst_86 : f32 to vector<4x64xf32>
    %321 = arith.subf %320, %319 : vector<4x64xf32>
    %322 = math.exp %321 : vector<4x64xf32>
    %cst_87 = arith.constant 1.000000e+00 : f32
    %323 = vector.broadcast %cst_87 : f32 to vector<4x64xf32>
    %324 = arith.addf %323, %322 : vector<4x64xf32>
    %325 = tpu.reciprocal %324 : vector<4x64xf32> -> vector<4x64xf32>
    %326 = vector.extract_strided_slice %325 {offsets = [0, 0], sizes = [4, 32], strides = [1, 1]} : vector<4x64xf32> to vector<4x32xf32>
    %327 = vector.extract_strided_slice %325 {offsets = [0, 32], sizes = [4, 32], strides = [1, 1]} : vector<4x64xf32> to vector<4x32xf32>
    %328 = vector.extract_strided_slice %313 {offsets = [0, 64], sizes = [4, 32], strides = [1, 1]} : vector<4x96xf32> to vector<4x32xf32>
    %329 = vector.extract_strided_slice %316 {offsets = [0, 64], sizes = [4, 32], strides = [1, 1]} : vector<4x96xf32> to vector<4x32xf32>
    %330 = arith.mulf %326, %329 : vector<4x32xf32>
    %331 = arith.addf %328, %330 : vector<4x32xf32>
    %332 = math.tanh %331 : vector<4x32xf32>
    %cst_88 = arith.constant 1.000000e+00 : f32
    %333 = vector.broadcast %cst_88 : f32 to vector<4x32xf32>
    %334 = arith.subf %333, %327 : vector<4x32xf32>
    %335 = arith.mulf %334, %332 : vector<4x32xf32>
    %336 = arith.mulf %327, %309 : vector<4x32xf32>
    %337 = arith.addf %335, %336 : vector<4x32xf32>
    %c3 = arith.constant 3 : index
    %c0_89 = arith.constant 0 : index
    %c0_90 = arith.constant 0 : index
    %338 = vector.load %arg16[%c3, %c0_89, %c0_90] : memref<8x4x32xf32, #tpu.memory_space<vmem>>, vector<1x4x32xf32>
    %339 = vector.shape_cast %338 : vector<1x4x32xf32> to vector<4x32xf32>
    %340 = vector.shape_cast %337 : vector<4x32xf32> to vector<1x4x32xf32>
    tpu.vector_store %arg16[%c3, %c0_89, %c0_90], %340 {strides = array<i32>} : memref<8x4x32xf32, #tpu.memory_space<vmem>>, vector<1x4x32xf32>,
    %341 = vector.extract_strided_slice %225 {offsets = [16, 0], sizes = [4, 96], strides = [1, 1]} : vector<32x96xf32> to vector<4x96xf32>
    %cst_91 = arith.constant dense<0.000000e+00> : vector<4x96xf32>
    %342 = tpu.matmul %337, %226, %cst_91 {dimension_numbers = #tpu.dot_dimension_numbers<[1], [0], [0], [1], [0, 0, 1, 1], [], []>} : vector<4x32xf32>, vector<32x96xf32>, vector<4x96xf32> -> vector<4x96xf32>
    %343 = vector.broadcast %227 : vector<1x96xf32> to vector<4x96xf32>
    %344 = arith.addf %342, %343 : vector<4x96xf32>
    %345 = vector.extract_strided_slice %341 {offsets = [0, 0], sizes = [4, 64], strides = [1, 1]} : vector<4x96xf32> to vector<4x64xf32>
    %346 = vector.extract_strided_slice %344 {offsets = [0, 0], sizes = [4, 64], strides = [1, 1]} : vector<4x96xf32> to vector<4x64xf32>
    %347 = arith.addf %345, %346 : vector<4x64xf32>
    %cst_92 = arith.constant 0.000000e+00 : f32
    %348 = vector.broadcast %cst_92 : f32 to vector<4x64xf32>
    %349 = arith.subf %348, %347 : vector<4x64xf32>
    %350 = math.exp %349 : vector<4x64xf32>
    %cst_93 = arith.constant 1.000000e+00 : f32
    %351 = vector.broadcast %cst_93 : f32 to vector<4x64xf32>
    %352 = arith.addf %351, %350 : vector<4x64xf32>
    %353 = tpu.reciprocal %352 : vector<4x64xf32> -> vector<4x64xf32>
    %354 = vector.extract_strided_slice %353 {offsets = [0, 0], sizes = [4, 32], strides = [1, 1]} : vector<4x64xf32> to vector<4x32xf32>
    %355 = vector.extract_strided_slice %353 {offsets = [0, 32], sizes = [4, 32], strides = [1, 1]} : vector<4x64xf32> to vector<4x32xf32>
    %356 = vector.extract_strided_slice %341 {offsets = [0, 64], sizes = [4, 32], strides = [1, 1]} : vector<4x96xf32> to vector<4x32xf32>
    %357 = vector.extract_strided_slice %344 {offsets = [0, 64], sizes = [4, 32], strides = [1, 1]} : vector<4x96xf32> to vector<4x32xf32>
    %358 = arith.mulf %354, %357 : vector<4x32xf32>
    %359 = arith.addf %356, %358 : vector<4x32xf32>
    %360 = math.tanh %359 : vector<4x32xf32>
    %cst_94 = arith.constant 1.000000e+00 : f32
    %361 = vector.broadcast %cst_94 : f32 to vector<4x32xf32>
    %362 = arith.subf %361, %355 : vector<4x32xf32>
    %363 = arith.mulf %362, %360 : vector<4x32xf32>
    %364 = arith.mulf %355, %337 : vector<4x32xf32>
    %365 = arith.addf %363, %364 : vector<4x32xf32>
    %c4_95 = arith.constant 4 : index
    %c0_96 = arith.constant 0 : index
    %c0_97 = arith.constant 0 : index
    %366 = vector.load %arg16[%c4_95, %c0_96, %c0_97] : memref<8x4x32xf32, #tpu.memory_space<vmem>>, vector<1x4x32xf32>
    %367 = vector.shape_cast %366 : vector<1x4x32xf32> to vector<4x32xf32>
    %368 = vector.shape_cast %365 : vector<4x32xf32> to vector<1x4x32xf32>
    tpu.vector_store %arg16[%c4_95, %c0_96, %c0_97], %368 {strides = array<i32>} : memref<8x4x32xf32, #tpu.memory_space<vmem>>, vector<1x4x32xf32>,
    %369 = vector.extract_strided_slice %225 {offsets = [20, 0], sizes = [4, 96], strides = [1, 1]} : vector<32x96xf32> to vector<4x96xf32>
    %cst_98 = arith.constant dense<0.000000e+00> : vector<4x96xf32>
    %370 = tpu.matmul %365, %226, %cst_98 {dimension_numbers = #tpu.dot_dimension_numbers<[1], [0], [0], [1], [0, 0, 1, 1], [], []>} : vector<4x32xf32>, vector<32x96xf32>, vector<4x96xf32> -> vector<4x96xf32>
    %371 = vector.broadcast %227 : vector<1x96xf32> to vector<4x96xf32>
    %372 = arith.addf %370, %371 : vector<4x96xf32>
    %373 = vector.extract_strided_slice %369 {offsets = [0, 0], sizes = [4, 64], strides = [1, 1]} : vector<4x96xf32> to vector<4x64xf32>
    %374 = vector.extract_strided_slice %372 {offsets = [0, 0], sizes = [4, 64], strides = [1, 1]} : vector<4x96xf32> to vector<4x64xf32>
    %375 = arith.addf %373, %374 : vector<4x64xf32>
    %cst_99 = arith.constant 0.000000e+00 : f32
    %376 = vector.broadcast %cst_99 : f32 to vector<4x64xf32>
    %377 = arith.subf %376, %375 : vector<4x64xf32>
    %378 = math.exp %377 : vector<4x64xf32>
    %cst_100 = arith.constant 1.000000e+00 : f32
    %379 = vector.broadcast %cst_100 : f32 to vector<4x64xf32>
    %380 = arith.addf %379, %378 : vector<4x64xf32>
    %381 = tpu.reciprocal %380 : vector<4x64xf32> -> vector<4x64xf32>
    %382 = vector.extract_strided_slice %381 {offsets = [0, 0], sizes = [4, 32], strides = [1, 1]} : vector<4x64xf32> to vector<4x32xf32>
    %383 = vector.extract_strided_slice %381 {offsets = [0, 32], sizes = [4, 32], strides = [1, 1]} : vector<4x64xf32> to vector<4x32xf32>
    %384 = vector.extract_strided_slice %369 {offsets = [0, 64], sizes = [4, 32], strides = [1, 1]} : vector<4x96xf32> to vector<4x32xf32>
    %385 = vector.extract_strided_slice %372 {offsets = [0, 64], sizes = [4, 32], strides = [1, 1]} : vector<4x96xf32> to vector<4x32xf32>
    %386 = arith.mulf %382, %385 : vector<4x32xf32>
    %387 = arith.addf %384, %386 : vector<4x32xf32>
    %388 = math.tanh %387 : vector<4x32xf32>
    %cst_101 = arith.constant 1.000000e+00 : f32
    %389 = vector.broadcast %cst_101 : f32 to vector<4x32xf32>
    %390 = arith.subf %389, %383 : vector<4x32xf32>
    %391 = arith.mulf %390, %388 : vector<4x32xf32>
    %392 = arith.mulf %383, %365 : vector<4x32xf32>
    %393 = arith.addf %391, %392 : vector<4x32xf32>
    %c5 = arith.constant 5 : index
    %c0_102 = arith.constant 0 : index
    %c0_103 = arith.constant 0 : index
    %394 = vector.load %arg16[%c5, %c0_102, %c0_103] : memref<8x4x32xf32, #tpu.memory_space<vmem>>, vector<1x4x32xf32>
    %395 = vector.shape_cast %394 : vector<1x4x32xf32> to vector<4x32xf32>
    %396 = vector.shape_cast %393 : vector<4x32xf32> to vector<1x4x32xf32>
    tpu.vector_store %arg16[%c5, %c0_102, %c0_103], %396 {strides = array<i32>} : memref<8x4x32xf32, #tpu.memory_space<vmem>>, vector<1x4x32xf32>,
    %397 = vector.extract_strided_slice %225 {offsets = [24, 0], sizes = [4, 96], strides = [1, 1]} : vector<32x96xf32> to vector<4x96xf32>
    %cst_104 = arith.constant dense<0.000000e+00> : vector<4x96xf32>
    %398 = tpu.matmul %393, %226, %cst_104 {dimension_numbers = #tpu.dot_dimension_numbers<[1], [0], [0], [1], [0, 0, 1, 1], [], []>} : vector<4x32xf32>, vector<32x96xf32>, vector<4x96xf32> -> vector<4x96xf32>
    %399 = vector.broadcast %227 : vector<1x96xf32> to vector<4x96xf32>
    %400 = arith.addf %398, %399 : vector<4x96xf32>
    %401 = vector.extract_strided_slice %397 {offsets = [0, 0], sizes = [4, 64], strides = [1, 1]} : vector<4x96xf32> to vector<4x64xf32>
    %402 = vector.extract_strided_slice %400 {offsets = [0, 0], sizes = [4, 64], strides = [1, 1]} : vector<4x96xf32> to vector<4x64xf32>
    %403 = arith.addf %401, %402 : vector<4x64xf32>
    %cst_105 = arith.constant 0.000000e+00 : f32
    %404 = vector.broadcast %cst_105 : f32 to vector<4x64xf32>
    %405 = arith.subf %404, %403 : vector<4x64xf32>
    %406 = math.exp %405 : vector<4x64xf32>
    %cst_106 = arith.constant 1.000000e+00 : f32
    %407 = vector.broadcast %cst_106 : f32 to vector<4x64xf32>
    %408 = arith.addf %407, %406 : vector<4x64xf32>
    %409 = tpu.reciprocal %408 : vector<4x64xf32> -> vector<4x64xf32>
    %410 = vector.extract_strided_slice %409 {offsets = [0, 0], sizes = [4, 32], strides = [1, 1]} : vector<4x64xf32> to vector<4x32xf32>
    %411 = vector.extract_strided_slice %409 {offsets = [0, 32], sizes = [4, 32], strides = [1, 1]} : vector<4x64xf32> to vector<4x32xf32>
    %412 = vector.extract_strided_slice %397 {offsets = [0, 64], sizes = [4, 32], strides = [1, 1]} : vector<4x96xf32> to vector<4x32xf32>
    %413 = vector.extract_strided_slice %400 {offsets = [0, 64], sizes = [4, 32], strides = [1, 1]} : vector<4x96xf32> to vector<4x32xf32>
    %414 = arith.mulf %410, %413 : vector<4x32xf32>
    %415 = arith.addf %412, %414 : vector<4x32xf32>
    %416 = math.tanh %415 : vector<4x32xf32>
    %cst_107 = arith.constant 1.000000e+00 : f32
    %417 = vector.broadcast %cst_107 : f32 to vector<4x32xf32>
    %418 = arith.subf %417, %411 : vector<4x32xf32>
    %419 = arith.mulf %418, %416 : vector<4x32xf32>
    %420 = arith.mulf %411, %393 : vector<4x32xf32>
    %421 = arith.addf %419, %420 : vector<4x32xf32>
    %c6 = arith.constant 6 : index
    %c0_108 = arith.constant 0 : index
    %c0_109 = arith.constant 0 : index
    %422 = vector.load %arg16[%c6, %c0_108, %c0_109] : memref<8x4x32xf32, #tpu.memory_space<vmem>>, vector<1x4x32xf32>
    %423 = vector.shape_cast %422 : vector<1x4x32xf32> to vector<4x32xf32>
    %424 = vector.shape_cast %421 : vector<4x32xf32> to vector<1x4x32xf32>
    tpu.vector_store %arg16[%c6, %c0_108, %c0_109], %424 {strides = array<i32>} : memref<8x4x32xf32, #tpu.memory_space<vmem>>, vector<1x4x32xf32>,
    %425 = vector.extract_strided_slice %225 {offsets = [28, 0], sizes = [4, 96], strides = [1, 1]} : vector<32x96xf32> to vector<4x96xf32>
    %cst_110 = arith.constant dense<0.000000e+00> : vector<4x96xf32>
    %426 = tpu.matmul %421, %226, %cst_110 {dimension_numbers = #tpu.dot_dimension_numbers<[1], [0], [0], [1], [0, 0, 1, 1], [], []>} : vector<4x32xf32>, vector<32x96xf32>, vector<4x96xf32> -> vector<4x96xf32>
    %427 = vector.broadcast %227 : vector<1x96xf32> to vector<4x96xf32>
    %428 = arith.addf %426, %427 : vector<4x96xf32>
    %429 = vector.extract_strided_slice %425 {offsets = [0, 0], sizes = [4, 64], strides = [1, 1]} : vector<4x96xf32> to vector<4x64xf32>
    %430 = vector.extract_strided_slice %428 {offsets = [0, 0], sizes = [4, 64], strides = [1, 1]} : vector<4x96xf32> to vector<4x64xf32>
    %431 = arith.addf %429, %430 : vector<4x64xf32>
    %cst_111 = arith.constant 0.000000e+00 : f32
    %432 = vector.broadcast %cst_111 : f32 to vector<4x64xf32>
    %433 = arith.subf %432, %431 : vector<4x64xf32>
    %434 = math.exp %433 : vector<4x64xf32>
    %cst_112 = arith.constant 1.000000e+00 : f32
    %435 = vector.broadcast %cst_112 : f32 to vector<4x64xf32>
    %436 = arith.addf %435, %434 : vector<4x64xf32>
    %437 = tpu.reciprocal %436 : vector<4x64xf32> -> vector<4x64xf32>
    %438 = vector.extract_strided_slice %437 {offsets = [0, 0], sizes = [4, 32], strides = [1, 1]} : vector<4x64xf32> to vector<4x32xf32>
    %439 = vector.extract_strided_slice %437 {offsets = [0, 32], sizes = [4, 32], strides = [1, 1]} : vector<4x64xf32> to vector<4x32xf32>
    %440 = vector.extract_strided_slice %425 {offsets = [0, 64], sizes = [4, 32], strides = [1, 1]} : vector<4x96xf32> to vector<4x32xf32>
    %441 = vector.extract_strided_slice %428 {offsets = [0, 64], sizes = [4, 32], strides = [1, 1]} : vector<4x96xf32> to vector<4x32xf32>
    %442 = arith.mulf %438, %441 : vector<4x32xf32>
    %443 = arith.addf %440, %442 : vector<4x32xf32>
    %444 = math.tanh %443 : vector<4x32xf32>
    %cst_113 = arith.constant 1.000000e+00 : f32
    %445 = vector.broadcast %cst_113 : f32 to vector<4x32xf32>
    %446 = arith.subf %445, %439 : vector<4x32xf32>
    %447 = arith.mulf %446, %444 : vector<4x32xf32>
    %448 = arith.mulf %439, %421 : vector<4x32xf32>
    %449 = arith.addf %447, %448 : vector<4x32xf32>
    %c7 = arith.constant 7 : index
    %c0_114 = arith.constant 0 : index
    %c0_115 = arith.constant 0 : index
    %450 = vector.load %arg16[%c7, %c0_114, %c0_115] : memref<8x4x32xf32, #tpu.memory_space<vmem>>, vector<1x4x32xf32>
    %451 = vector.shape_cast %450 : vector<1x4x32xf32> to vector<4x32xf32>
    %452 = vector.shape_cast %449 : vector<4x32xf32> to vector<1x4x32xf32>
    tpu.vector_store %arg16[%c7, %c0_114, %c0_115], %452 {strides = array<i32>} : memref<8x4x32xf32, #tpu.memory_space<vmem>>, vector<1x4x32xf32>,
    %c1_116 = arith.constant 1 : index
    %c0_117 = arith.constant 0 : index
    %c0_118 = arith.constant 0 : index
    %453 = vector.load %arg14[%c1_116, %c0_117, %c0_118] : memref<2x4x32xf32, #tpu.memory_space<vmem>>, vector<1x4x32xf32>
    %454 = vector.shape_cast %453 : vector<1x4x32xf32> to vector<4x32xf32>
    %455 = vector.shape_cast %449 : vector<4x32xf32> to vector<1x4x32xf32>
    tpu.vector_store %arg14[%c1_116, %c0_117, %c0_118], %455 {strides = array<i32>} : memref<2x4x32xf32, #tpu.memory_space<vmem>>, vector<1x4x32xf32>,
    %c0_119 = arith.constant 0 : index
    %c0_120 = arith.constant 0 : index
    %c0_121 = arith.constant 0 : index
    %456 = vector.load %arg16[%c0_119, %c0_120, %c0_121] : memref<8x4x32xf32, #tpu.memory_space<vmem>>, vector<8x4x32xf32>
    %cst_122 = arith.constant 0.000000e+00 : f32
    %457 = vector.broadcast %cst_122 : f32 to vector<8x64xf32>
    %458 = vector.extract_strided_slice %456 {offsets = [0, 0, 0], sizes = [8, 1, 32], strides = [1, 1, 1]} : vector<8x4x32xf32> to vector<8x1x32xf32>
    %459 = vector.shape_cast %458 : vector<8x1x32xf32> to vector<8x32xf32>
    %c0_123 = arith.constant 0 : index
    %c0_124 = arith.constant 0 : index
    %c0_125 = arith.constant 0 : index
    %460 = vector.load %arg9[%c0_123, %c0_124, %c0_125] : memref<4x32x64xf32, #tpu.memory_space<vmem>>, vector<1x32x64xf32>
    %461 = vector.shape_cast %460 : vector<1x32x64xf32> to vector<32x64xf32>
    %cst_126 = arith.constant dense<0.000000e+00> : vector<8x64xf32>
    %462 = tpu.matmul %459, %461, %cst_126 {dimension_numbers = #tpu.dot_dimension_numbers<[1], [0], [0], [1], [0, 0, 1, 1], [], []>} : vector<8x32xf32>, vector<32x64xf32>, vector<8x64xf32> -> vector<8x64xf32>
    %463 = arith.addf %457, %462 : vector<8x64xf32>
    %464 = vector.extract_strided_slice %456 {offsets = [0, 1, 0], sizes = [8, 1, 32], strides = [1, 1, 1]} : vector<8x4x32xf32> to vector<8x1x32xf32>
    %465 = vector.shape_cast %464 : vector<8x1x32xf32> to vector<8x32xf32>
    %c1_127 = arith.constant 1 : index
    %c0_128 = arith.constant 0 : index
    %c0_129 = arith.constant 0 : index
    %466 = vector.load %arg9[%c1_127, %c0_128, %c0_129] : memref<4x32x64xf32, #tpu.memory_space<vmem>>, vector<1x32x64xf32>
    %467 = vector.shape_cast %466 : vector<1x32x64xf32> to vector<32x64xf32>
    %cst_130 = arith.constant dense<0.000000e+00> : vector<8x64xf32>
    %468 = tpu.matmul %465, %467, %cst_130 {dimension_numbers = #tpu.dot_dimension_numbers<[1], [0], [0], [1], [0, 0, 1, 1], [], []>} : vector<8x32xf32>, vector<32x64xf32>, vector<8x64xf32> -> vector<8x64xf32>
    %469 = arith.addf %463, %468 : vector<8x64xf32>
    %470 = vector.extract_strided_slice %456 {offsets = [0, 2, 0], sizes = [8, 1, 32], strides = [1, 1, 1]} : vector<8x4x32xf32> to vector<8x1x32xf32>
    %471 = vector.shape_cast %470 : vector<8x1x32xf32> to vector<8x32xf32>
    %c2_131 = arith.constant 2 : index
    %c0_132 = arith.constant 0 : index
    %c0_133 = arith.constant 0 : index
    %472 = vector.load %arg9[%c2_131, %c0_132, %c0_133] : memref<4x32x64xf32, #tpu.memory_space<vmem>>, vector<1x32x64xf32>
    %473 = vector.shape_cast %472 : vector<1x32x64xf32> to vector<32x64xf32>
    %cst_134 = arith.constant dense<0.000000e+00> : vector<8x64xf32>
    %474 = tpu.matmul %471, %473, %cst_134 {dimension_numbers = #tpu.dot_dimension_numbers<[1], [0], [0], [1], [0, 0, 1, 1], [], []>} : vector<8x32xf32>, vector<32x64xf32>, vector<8x64xf32> -> vector<8x64xf32>
    %475 = arith.addf %469, %474 : vector<8x64xf32>
    %476 = vector.extract_strided_slice %456 {offsets = [0, 3, 0], sizes = [8, 1, 32], strides = [1, 1, 1]} : vector<8x4x32xf32> to vector<8x1x32xf32>
    %477 = vector.shape_cast %476 : vector<8x1x32xf32> to vector<8x32xf32>
    %c3_135 = arith.constant 3 : index
    %c0_136 = arith.constant 0 : index
    %c0_137 = arith.constant 0 : index
    %478 = vector.load %arg9[%c3_135, %c0_136, %c0_137] : memref<4x32x64xf32, #tpu.memory_space<vmem>>, vector<1x32x64xf32>
    %479 = vector.shape_cast %478 : vector<1x32x64xf32> to vector<32x64xf32>
    %cst_138 = arith.constant dense<0.000000e+00> : vector<8x64xf32>
    %480 = tpu.matmul %477, %479, %cst_138 {dimension_numbers = #tpu.dot_dimension_numbers<[1], [0], [0], [1], [0, 0, 1, 1], [], []>} : vector<8x32xf32>, vector<32x64xf32>, vector<8x64xf32> -> vector<8x64xf32>
    %481 = arith.addf %475, %480 : vector<8x64xf32>
    %c0_139 = arith.constant 0 : index
    %c0_140 = arith.constant 0 : index
    %482 = vector.load %arg10[%c0_139, %c0_140] : memref<1x64xf32, #tpu.memory_space<vmem>>, vector<1x64xf32>
    %483 = vector.broadcast %482 : vector<1x64xf32> to vector<8x64xf32>
    %484 = arith.addf %481, %483 : vector<8x64xf32>
    %cst_141 = arith.constant 0.000000e+00 : f32
    %485 = vector.broadcast %cst_141 : f32 to vector<8x64xf32>
    %486 = arith.subf %485, %484 : vector<8x64xf32>
    %487 = math.exp %486 : vector<8x64xf32>
    %cst_142 = arith.constant 1.000000e+00 : f32
    %488 = vector.broadcast %cst_142 : f32 to vector<8x64xf32>
    %489 = arith.addf %488, %487 : vector<8x64xf32>
    %490 = tpu.reciprocal %489 : vector<8x64xf32> -> vector<8x64xf32>
    %c0_143 = arith.constant 0 : index
    %c0_144 = arith.constant 0 : index
    %491 = vector.load %arg11[%c0_143, %c0_144] : memref<64x1xf32, #tpu.memory_space<vmem>>, vector<64x1xf32>
    %cst_145 = arith.constant dense<0.000000e+00> : vector<8x1xf32>
    %492 = tpu.matmul %490, %491, %cst_145 {dimension_numbers = #tpu.dot_dimension_numbers<[1], [0], [0], [1], [0, 0, 1, 1], [], []>} : vector<8x64xf32>, vector<64x1xf32>, vector<8x1xf32> -> vector<8x1xf32>
    %c0_146 = arith.constant 0 : index
    %c0_147 = arith.constant 0 : index
    %493 = vector.load %arg12[%c0_146, %c0_147] : memref<1x1xf32, #tpu.memory_space<vmem>>, vector<1x1xf32>
    %494 = vector.broadcast %493 : vector<1x1xf32> to vector<8x1xf32>
    %495 = arith.addf %492, %494 : vector<8x1xf32>
    %cst_148 = arith.constant 0.000000e+00 : f32
    %496 = vector.broadcast %cst_148 : f32 to vector<8x1xf32>
    %497 = arith.subf %496, %495 : vector<8x1xf32>
    %498 = math.exp %497 : vector<8x1xf32>
    %cst_149 = arith.constant 1.000000e+00 : f32
    %499 = vector.broadcast %cst_149 : f32 to vector<8x1xf32>
    %500 = arith.addf %499, %498 : vector<8x1xf32>
    %501 = tpu.reciprocal %500 : vector<8x1xf32> -> vector<8x1xf32>
    %c0_150 = arith.constant 0 : index
    %c0_151 = arith.constant 0 : index
    %502 = vector.load %arg13[%c0_150, %c0_151] : memref<8x1xf32, #tpu.memory_space<vmem>>, vector<8x1xf32>
    tpu.vector_store %arg13[%c0_150, %c0_151], %501 {strides = array<i32>} : memref<8x1xf32, #tpu.memory_space<vmem>>, vector<8x1xf32>,
    return
  }
}

</mosaic_0001>

<llo_original>
// kernel: tpu_custom_call.1
$region0: #{tpu_custom_call.1}
  #allocation0 [shape = 'u32[]', space=smem, size = 0x4, offset = 0x4, fixed_abs, tag = 'smem constant byte address 0x4 - core index']
  #allocation1 [shape = 'u32[144,128]{1,0:T(1,128)}', space=vmem, size = 0x12000, scoped, tag = 'internal scratch']
  #allocation2 [shape = 'f32[32,32]{1,0:T(8,128)}', space=vmem, size = 0x4000, scoped, tag = 'scratch operand']
  #allocation3 [shape = 'f32[8,4,32]{2,1,0:T(4,128)}', space=vmem, size = 0x4000, scoped, tag = 'scratch operand']
  #allocation4 [shape = 'f32[1,1]{1,0:T(1,128)S(1)}', space=vmem, size = 0x200, scoped, tag = 'scoped memory for tpu_custom_call.1']
  %s0 = inlined_call_operand.vmem [shape: f32[32,16], index: 0, kind: input, shape index: {}]
  %s1 = inlined_call_operand.hbm [shape: f32[16,96], index: 1, kind: input, shape index: {}]
  %s2 = inlined_call_operand.hbm [shape: f32[32,96], index: 2, kind: input, shape index: {}]
  %s3 = inlined_call_operand.vmem [shape: f32[1,96], index: 3, kind: input, shape index: {}]
  %s4 = inlined_call_operand.vmem [shape: f32[1,96], index: 4, kind: input, shape index: {}]
  %s5 = inlined_call_operand.hbm [shape: f32[32,96], index: 5, kind: input, shape index: {}]
  %s6 = inlined_call_operand.hbm [shape: f32[32,96], index: 6, kind: input, shape index: {}]
  %s7 = inlined_call_operand.vmem [shape: f32[1,96], index: 7, kind: input, shape index: {}]
  %s8 = inlined_call_operand.hbm [shape: f32[1,96], index: 8, kind: input, shape index: {}]
  %s9 = inlined_call_operand.vmem [shape: f32[4,32,64], index: 9, kind: input, shape index: {}]
  %s10 = inlined_call_operand.vmem [shape: f32[1,64], index: 10, kind: input, shape index: {}]
  %s11 = inlined_call_operand.vmem [shape: f32[64,1], index: 11, kind: input, shape index: {}]
  %s12 = inlined_call_operand.<no memory space> [shape: f32[1,1], index: 12, kind: input, shape index: {}]
  %s13 = inlined_call_operand.vmem [shape: f32[8,1], index: 13, kind: output, shape index: {0}]
  %s14 = inlined_call_operand.hbm [shape: f32[2,4,32], index: 14, kind: output, shape index: {1}]
  %15 = xla_tuple %s13, %s14
  %s16 = sld [smem:[#allocation0]]
  $region90: #{tpu_custom_call.1} parent=0
    _
  %s18 = ssub.s32 1, %s16
  %s19 = scalar_select 0, %s18, %s16
  %v20 = vstv %s12
  %21 = vst [vmem:[#allocation4] sm:$0x1] %v20
  $region1: #{tpu_custom_call.1} parent=0
    #allocation5 [shape = 'u8[8192]{0}', space=vmem, size = 0x2000, scoped, tag = 'input window, operand 1, single buffered']
    #allocation6 [shape = 's32[1]{0}', space=sflag, size = 0x4, scoped, tag = 'scoped memory for tpu_custom_call.1']
    #allocation7 [shape = 's32[1]{0}', space=sflag, size = 0x4, scoped, tag = 'scoped memory for tpu_custom_call.1']
    #allocation8 [shape = 'u8[16384]{0}', space=vmem, size = 0x4000, scoped, tag = 'input window, operand 2, single buffered']
    #allocation9 [shape = 's32[1]{0}', space=sflag, size = 0x4, scoped, tag = 'scoped memory for tpu_custom_call.1']
    #allocation10 [shape = 'u8[16384]{0}', space=vmem, size = 0x4000, scoped, tag = 'input window, operand 5, single buffered']
    #allocation11 [shape = 'u8[16384]{0}', space=vmem, size = 0x4000, scoped, tag = 'input window, operand 6, single buffered']
    #allocation12 [shape = 's32[1]{0}', space=sflag, size = 0x4, scoped, tag = 'scoped memory for tpu_custom_call.1']
    #allocation13 [shape = 'u8[512]{0}', space=vmem, size = 0x400, scoped, tag = 'input window, operand 8, single buffered']
    #allocation14 [shape = 'u8[4096]{0}', space=vmem, size = 0x1000, scoped, tag = 'output window, operand 1, single buffered']
    %22 = vsyncpa [#allocation6], 0
    %23 = vsyncpa [#allocation9], 0
    %24 = vsyncpa [#allocation12], 0
    %25 = vsyncpa [#allocation7], 0
    // Predicated region
    $region2: #{tpu_custom_call.1} parent=1 // pred_check
      _
    $region3: #{tpu_custom_call.1} parent=1 // pred_check_branch
      %27 = sbr.rel (0) target = $region5
    $region4: #{tpu_custom_call.1} parent=1 // pred_region
      _
    $region5: #{tpu_custom_call.1} parent=1 // pred_fallthru
      _
    // Predicated region
    $region6: #{tpu_custom_call.1} parent=1 // pred_check
      _
    $region7: #{tpu_custom_call.1} parent=1 // pred_check_branch
      %29 = sbr.rel (0) target = $region9
    $region8: #{tpu_custom_call.1} parent=1 // pred_region
      %s31 = ssub.s32 256, 256
      %32 = vsyncadd [#allocation6], %s31
      %s33 = sshll.u32 [#allocation5], 4
      %s34 = int_to_ptr.vmem [resolvable:$true] %s33
      %39 = dma.hbm_to_vmem [thread:$0]  %s1, 256, %s34, [#allocation6], 128, 128, 8
    $region9: #{tpu_custom_call.1} parent=1 // pred_fallthru
      _
    // Predicated region
    $region10: #{tpu_custom_call.1} parent=1 // pred_check
      _
    $region11: #{tpu_custom_call.1} parent=1 // pred_check_branch
      %41 = sbr.rel (0) target = $region13
    $region12: #{tpu_custom_call.1} parent=1 // pred_region
      %s43 = ssub.s32 512, 512
      %44 = vsyncadd [#allocation9], %s43
      %s45 = sshll.u32 [#allocation8], 4
      %s46 = int_to_ptr.vmem [resolvable:$true] %s45
      %51 = dma.hbm_to_vmem [thread:$0]  %s2, 512, %s46, [#allocation9], 128, 128, 8
    $region13: #{tpu_custom_call.1} parent=1 // pred_fallthru
      _
    // Predicated region
    $region14: #{tpu_custom_call.1} parent=1 // pred_check
      _
    $region15: #{tpu_custom_call.1} parent=1 // pred_check_branch
      %53 = sbr.rel (0) target = $region17
    $region16: #{tpu_custom_call.1} parent=1 // pred_region
      _
    $region17: #{tpu_custom_call.1} parent=1 // pred_fallthru
      _
    // Predicated region
    $region18: #{tpu_custom_call.1} parent=1 // pred_check
      _
    $region19: #{tpu_custom_call.1} parent=1 // pred_check_branch
      %55 = sbr.rel (0) target = $region21
    $region20: #{tpu_custom_call.1} parent=1 // pred_region
      _
    $region21: #{tpu_custom_call.1} parent=1 // pred_fallthru
      _
    // Predicated region
    $region22: #{tpu_custom_call.1} parent=1 // pred_check
      _
    $region23: #{tpu_custom_call.1} parent=1 // pred_check_branch
      %57 = sbr.rel (0) target = $region25
    $region24: #{tpu_custom_call.1} parent=1 // pred_region
      %s59 = ssub.s32 512, 512
      %60 = vsyncadd [#allocation9], %s59
      %s61 = sshll.u32 [#allocation10], 4
      %s62 = int_to_ptr.vmem [resolvable:$true] %s61
      %67 = dma.hbm_to_vmem [thread:$0]  %s5, 512, %s62, [#allocation9], 128, 128, 8
    $region25: #{tpu_custom_call.1} parent=1 // pred_fallthru
      _
    // Predicated region
    $region26: #{tpu_custom_call.1} parent=1 // pred_check
      _
    $region27: #{tpu_custom_call.1} parent=1 // pred_check_branch
      %69 = sbr.rel (0) target = $region29
    $region28: #{tpu_custom_call.1} parent=1 // pred_region
      %s71 = ssub.s32 512, 512
      %72 = vsyncadd [#allocation12], %s71
      %s73 = sshll.u32 [#allocation11], 4
      %s74 = int_to_ptr.vmem [resolvable:$true] %s73
      %79 = dma.hbm_to_vmem [thread:$0]  %s6, 512, %s74, [#allocation12], 128, 128, 8
    $region29: #{tpu_custom_call.1} parent=1 // pred_fallthru
      _
    // Predicated region
    $region30: #{tpu_custom_call.1} parent=1 // pred_check
      _
    $region31: #{tpu_custom_call.1} parent=1 // pred_check_branch
      %81 = sbr.rel (0) target = $region33
    $region32: #{tpu_custom_call.1} parent=1 // pred_region
      _
    $region33: #{tpu_custom_call.1} parent=1 // pred_fallthru
      _
    // Predicated region
    $region34: #{tpu_custom_call.1} parent=1 // pred_check
      _
    $region35: #{tpu_custom_call.1} parent=1 // pred_check_branch
      %83 = sbr.rel (0) target = $region37
    $region36: #{tpu_custom_call.1} parent=1 // pred_region
      %s85 = ssub.s32 16, 16
      %86 = vsyncadd [#allocation12], %s85
      %s88 = sshll.u32 [#allocation13], 4
      %s89 = int_to_ptr.vmem [resolvable:$true] %s88
      %91 = dma.hbm_to_vmem [thread:$0]  %s8, 16, %s89, [#allocation12]
    $region37: #{tpu_custom_call.1} parent=1 // pred_fallthru
      _
    // Predicated region
    $region38: #{tpu_custom_call.1} parent=1 // pred_check
      _
    $region39: #{tpu_custom_call.1} parent=1 // pred_check_branch
      %93 = sbr.rel (0) target = $region41
    $region40: #{tpu_custom_call.1} parent=1 // pred_region
      _
    $region41: #{tpu_custom_call.1} parent=1 // pred_fallthru
      _
    // Predicated region
    $region42: #{tpu_custom_call.1} parent=1 // pred_check
      _
    $region43: #{tpu_custom_call.1} parent=1 // pred_check_branch
      %95 = sbr.rel (0) target = $region45
    $region44: #{tpu_custom_call.1} parent=1 // pred_region
      _
    $region45: #{tpu_custom_call.1} parent=1 // pred_fallthru
      _
    // Predicated region
    $region46: #{tpu_custom_call.1} parent=1 // pred_check
      _
    $region47: #{tpu_custom_call.1} parent=1 // pred_check_branch
      %97 = sbr.rel (0) target = $region49
    $region48: #{tpu_custom_call.1} parent=1 // pred_region
      _
    $region49: #{tpu_custom_call.1} parent=1 // pred_fallthru
      _
    // Predicated region
    $region50: #{tpu_custom_call.1} parent=1 // pred_check
      _
    $region51: #{tpu_custom_call.1} parent=1 // pred_check_branch
      %99 = sbr.rel (0) target = $region53
    $region52: #{tpu_custom_call.1} parent=1 // pred_region
      _
    $region53: #{tpu_custom_call.1} parent=1 // pred_fallthru
      _
    // Predicated region
    $region54: #{tpu_custom_call.1} parent=1 // pred_check
      _
    $region55: #{tpu_custom_call.1} parent=1 // pred_check_branch
      %101 = sbr.rel (0) target = $region57
    $region56: #{tpu_custom_call.1} parent=1 // pred_region
      %102 = dma.done [#allocation6], 256
    $region57: #{tpu_custom_call.1} parent=1 // pred_fallthru
      _
    // Predicated region
    $region58: #{tpu_custom_call.1} parent=1 // pred_check
      _
    $region59: #{tpu_custom_call.1} parent=1 // pred_check_branch
      %104 = sbr.rel (0) target = $region61
    $region60: #{tpu_custom_call.1} parent=1 // pred_region
      %105 = dma.done [#allocation9], 512
    $region61: #{tpu_custom_call.1} parent=1 // pred_fallthru
      _
    // Predicated region
    $region62: #{tpu_custom_call.1} parent=1 // pred_check
      _
    $region63: #{tpu_custom_call.1} parent=1 // pred_check_branch
      %107 = sbr.rel (0) target = $region65
    $region64: #{tpu_custom_call.1} parent=1 // pred_region
      %108 = dma.done [#allocation9], 512
    $region65: #{tpu_custom_call.1} parent=1 // pred_fallthru
      _
    // Predicated region
    $region66: #{tpu_custom_call.1} parent=1 // pred_check
      _
    $region67: #{tpu_custom_call.1} parent=1 // pred_check_branch
      %110 = sbr.rel (0) target = $region69
    $region68: #{tpu_custom_call.1} parent=1 // pred_region
      %111 = dma.done [#allocation12], 512
    $region69: #{tpu_custom_call.1} parent=1 // pred_fallthru
      _
    // Predicated region
    $region70: #{tpu_custom_call.1} parent=1 // pred_check
      _
    $region71: #{tpu_custom_call.1} parent=1 // pred_check_branch
      %113 = sbr.rel (0) target = $region73
    $region72: #{tpu_custom_call.1} parent=1 // pred_region
      %114 = dma.done [#allocation12], 16
    $region73: #{tpu_custom_call.1} parent=1 // pred_fallthru
      _
    %v115 = vld [vmem:[%s0] sm:$0xff]
    %v116 = vld [vmem:[%s0 + $0x8] sm:$0xff]
    %v117 = vld [vmem:[%s0 + $0x10] sm:$0xff]
    %v118 = vld [vmem:[%s0 + $0x18] sm:$0xff]
    %v119 = vld [vmem:[#allocation5] sm:$0xff]
    %v120 = vld [vmem:[#allocation5 + $0x8] sm:$0xff]
    %v121 = vld [vmem:[%s3] sm:$0x1]
    %v123 = vlaneseq
    %v124 = vshrl.u32 %v123, 7
    %v125 = vsub.s32 0, %v124
    %v126 = vrot.slane %v121, %v125
    %vm128 = vcmask 130048
    %v130 = vsel %vm128, %v115, 0
    %v133 = vsel %vm128, %v116, 0
    %v136 = vsel %vm128, %v117, 0
    %v139 = vsel %vm128, %v118, 0
    %141 = vmatprep.subr.mxu0 0.0
    %142 = vmatpush1.msra.mxu0 0.0
    %143 = vmatprep.subr.mxu0 0.0
    %144 = vmatpush1.msra.mxu0 0.0
    %145 = vmatprep.subr.mxu0 0.0
    %146 = vmatpush1.msra.mxu0 0.0
    %147 = vmatprep.subr.mxu0 0.0
    %148 = vmatpush1.msra.mxu0 0.0
    %149 = vmatprep.subr.mxu0 0.0
    %150 = vmatpush1.msra.mxu0 0.0
    %151 = vmatprep.subr.mxu0 0.0
    %152 = vmatpush1.msra.mxu0 0.0
    %153 = vmatprep.subr.mxu0 0.0
    %154 = vmatpush1.msra.mxu0 0.0
    %155 = vmatprep.subr.mxu0 0.0
    %156 = vmatpush1.msra.mxu0 0.0
    %157 = vmatprep.subr.mxu0 0.0
    %158 = vmatpush1.msra.mxu0 0.0
    %159 = vmatprep.subr.mxu0 0.0
    %160 = vmatpush1.msra.mxu0 0.0
    %161 = vmatprep.subr.mxu0 0.0
    %162 = vmatpush1.msra.mxu0 0.0
    %163 = vmatprep.subr.mxu0 0.0
    %164 = vmatpush1.msra.mxu0 0.0
    %165 = vmatprep.subr.mxu0 0.0
    %166 = vmatpush1.msra.mxu0 0.0
    %167 = vmatprep.subr.mxu0 0.0
    %168 = vmatpush1.msra.mxu0 0.0
    %169 = vmatprep.subr.mxu0 0.0
    %170 = vmatpush1.msra.mxu0 %v120
    %171 = vmatprep.subr.mxu0 0.0
    %172 = vmatpush1.msra.mxu0 %v119
    %173 = vmatprep.subr.mxu0 0.0
    %174 = vmatpush2.msra.mxu0 0.0
    %175 = vmatprep.subr.mxu0 0.0
    %176 = vmatpush2.msra.mxu0 0.0
    %177 = vmatprep.subr.mxu0 0.0
    %178 = vmatpush2.msra.mxu0 0.0
    %179 = vmatprep.subr.mxu0 0.0
    %180 = vmatpush2.msra.mxu0 0.0
    %181 = vmatprep.subr.mxu0 0.0
    %182 = vmatpush2.msra.mxu0 0.0
    %183 = vmatprep.subr.mxu0 0.0
    %184 = vmatpush2.msra.mxu0 0.0
    %185 = vmatprep.subr.mxu0 0.0
    %186 = vmatpush2.msra.mxu0 0.0
    %187 = vmatprep.subr.mxu0 0.0
    %188 = vmatpush2.msra.mxu0 0.0
    %189 = vmatprep.subr.mxu0 0.0
    %190 = vmatpush2.msra.mxu0 0.0
    %191 = vmatprep.subr.mxu0 0.0
    %192 = vmatpush2.msra.mxu0 0.0
    %193 = vmatprep.subr.mxu0 0.0
    %194 = vmatpush2.msra.mxu0 0.0
    %195 = vmatprep.subr.mxu0 0.0
    %196 = vmatpush2.msra.mxu0 0.0
    %197 = vmatprep.subr.mxu0 0.0
    %198 = vmatpush2.msra.mxu0 0.0
    %199 = vmatprep.subr.mxu0 0.0
    %200 = vmatpush2.msra.mxu0 0.0
    %201 = vmatprep.subr.mxu0 0.0
    %202 = vmatpush2.msra.mxu0 0.0
    %203 = vmatprep.subr.mxu0 0.0
    %204 = vmatpush2.msra.mxu0 0.0
    %205 = vmatprep.mubr.f32.mxu0 0.0
    %206 = vmatmul.mubr.f32.gmra.mxu0 %v130
    %v207 = vpop.f32.mrf.mxu0
    %v208 = vadd.f32 %v126, %v207
    %v209 = vpop.f32.mrf.mxu0
    %210 = vmatprep.mubr.f32.mxu0 0.0
    %211 = vmatmul.mubr.f32.gmra.mxu0 %v133
    %v212 = vpop.f32.mrf.mxu0
    %v213 = vadd.f32 %v126, %v212
    %v214 = vpop.f32.mrf.mxu0
    %215 = vmatprep.mubr.f32.mxu0 0.0
    %216 = vmatmul.mubr.f32.gmra.mxu0 %v136
    %v217 = vpop.f32.mrf.mxu0
    %v218 = vadd.f32 %v126, %v217
    %v219 = vpop.f32.mrf.mxu0
    %220 = vmatprep.mubr.f32.mxu0 0.0
    %221 = vmatmul.mubr.f32.gmra.mxu0 %v139
    %v222 = vpop.f32.mrf.mxu0
    %v223 = vadd.f32 %v126, %v222
    %v224 = vpop.f32.mrf.mxu0
    %225 = vdwg.mxu0
    %v226 = vld [vmem:[#allocation8] sm:$0xff]
    %v227 = vld [vmem:[#allocation8 + $0x8] sm:$0xff]
    %v228 = vld [vmem:[#allocation8 + $0x10] sm:$0xff]
    %v229 = vld [vmem:[#allocation8 + $0x18] sm:$0xff]
    %v230 = vld [vmem:[%s4] sm:$0x1]
    %v232 = vlaneseq
    %v233 = vshrl.u32 %v232, 7
    %v234 = vsub.s32 0, %v233
    %v235 = vrot.slane %v230, %v234
    %vm237 = vcmask 261120
    %v239 = vsel %vm237, 0.0, 0
    %241 = vmatprep.subr.mxu0 0.0
    %242 = vmatpush1.msra.mxu0 0.0
    %243 = vmatprep.subr.mxu0 0.0
    %244 = vmatpush1.msra.mxu0 0.0
    %245 = vmatprep.subr.mxu0 0.0
    %246 = vmatpush1.msra.mxu0 0.0
    %247 = vmatprep.subr.mxu0 0.0
    %248 = vmatpush1.msra.mxu0 0.0
    %249 = vmatprep.subr.mxu0 0.0
    %250 = vmatpush1.msra.mxu0 0.0
    %251 = vmatprep.subr.mxu0 0.0
    %252 = vmatpush1.msra.mxu0 0.0
    %253 = vmatprep.subr.mxu0 0.0
    %254 = vmatpush1.msra.mxu0 0.0
    %255 = vmatprep.subr.mxu0 0.0
    %256 = vmatpush1.msra.mxu0 0.0
    %257 = vmatprep.subr.mxu0 0.0
    %258 = vmatpush1.msra.mxu0 0.0
    %259 = vmatprep.subr.mxu0 0.0
    %260 = vmatpush1.msra.mxu0 0.0
    %261 = vmatprep.subr.mxu0 0.0
    %262 = vmatpush1.msra.mxu0 0.0
    %263 = vmatprep.subr.mxu0 0.0
    %264 = vmatpush1.msra.mxu0 0.0
    %265 = vmatprep.subr.mxu0 0.0
    %266 = vmatpush1.msra.mxu0 %v229
    %267 = vmatprep.subr.mxu0 0.0
    %268 = vmatpush1.msra.mxu0 %v228
    %269 = vmatprep.subr.mxu0 0.0
    %270 = vmatpush1.msra.mxu0 %v227
    %271 = vmatprep.subr.mxu0 0.0
    %272 = vmatpush1.msra.mxu0 %v226
    %273 = vmatprep.subr.mxu0 0.0
    %274 = vmatpush2.msra.mxu0 0.0
    %275 = vmatprep.subr.mxu0 0.0
    %276 = vmatpush2.msra.mxu0 0.0
    %277 = vmatprep.subr.mxu0 0.0
    %278 = vmatpush2.msra.mxu0 0.0
    %279 = vmatprep.subr.mxu0 0.0
    %280 = vmatpush2.msra.mxu0 0.0
    %281 = vmatprep.subr.mxu0 0.0
    %282 = vmatpush2.msra.mxu0 0.0
    %283 = vmatprep.subr.mxu0 0.0
    %284 = vmatpush2.msra.mxu0 0.0
    %285 = vmatprep.subr.mxu0 0.0
    %286 = vmatpush2.msra.mxu0 0.0
    %287 = vmatprep.subr.mxu0 0.0
    %288 = vmatpush2.msra.mxu0 0.0
    %289 = vmatprep.subr.mxu0 0.0
    %290 = vmatpush2.msra.mxu0 0.0
    %291 = vmatprep.subr.mxu0 0.0
    %292 = vmatpush2.msra.mxu0 0.0
    %293 = vmatprep.subr.mxu0 0.0
    %294 = vmatpush2.msra.mxu0 0.0
    %295 = vmatprep.subr.mxu0 0.0
    %296 = vmatpush2.msra.mxu0 0.0
    %297 = vmatprep.subr.mxu0 0.0
    %298 = vmatpush2.msra.mxu0 0.0
    %299 = vmatprep.subr.mxu0 0.0
    %300 = vmatpush2.msra.mxu0 0.0
    %301 = vmatprep.subr.mxu0 0.0
    %302 = vmatpush2.msra.mxu0 0.0
    %303 = vmatprep.subr.mxu0 0.0
    %304 = vmatpush2.msra.mxu0 0.0
    %305 = vmatprep.mubr.f32.mxu0 0.0
    %306 = vmatmul.mubr.f32.gmra.mxu0 %v239
    %v307 = vpop.f32.mrf.mxu0
    %v308 = vadd.f32 %v235, %v307
    %v309 = vpop.f32.mrf.mxu0
    %310 = vdwg.mxu0
    %v311 = vadd.f32 %v208, %v308
    %v312 = vsub.f32 0.0, %v311
    %v313 = vmul.f32 %v312, 1.442695
    %v314 = vpow.pop %v313
    %v315 = vadd.f32 %v314, 1.0
    %v316 = vrcp.pop %v315
    %318 = vrot.lane.b32.xlu0 %v308, 64
    %v319 = vpop.permute.xlu0 %318
    %v321 = vmul.f32 %v316, %v319
    %323 = vrot.lane.b32.xlu0 %v321, 64
    %v324 = vpop.permute.xlu0 %323
    %v326 = vadd.f32 %v208, %v324
    %v327 = vtanh.pop %v326
    %v328 = vsub.f32 1.0, %v316
    %330 = vrot.lane.b32.xlu0 %v327, 96
    %v331 = vpop.permute.xlu0 %330
    %v333 = vmul.f32 %v328, %v331
    %v334 = vmul.f32 %v316, 0.0
    %v335 = vadd.f32 %v333, %v334
    %337 = vrot.lane.b32.xlu0 %v335, 96
    %v338 = vpop.permute.xlu0 %337
    %vm340 = vcmask 257024
    %341 = vst.msk [vmem:[#allocation2] sm:$0xf] %vm340, %v338
    %v342 = vsel %vm237, %v338, 0
    %344 = vmatprep.subr.mxu0 0.0
    %345 = vmatpush1.msra.mxu0 0.0
    %346 = vmatprep.subr.mxu0 0.0
    %347 = vmatpush1.msra.mxu0 0.0
    %348 = vmatprep.subr.mxu0 0.0
    %349 = vmatpush1.msra.mxu0 0.0
    %350 = vmatprep.subr.mxu0 0.0
    %351 = vmatpush1.msra.mxu0 0.0
    %352 = vmatprep.subr.mxu0 0.0
    %353 = vmatpush1.msra.mxu0 0.0
    %354 = vmatprep.subr.mxu0 0.0
    %355 = vmatpush1.msra.mxu0 0.0
    %356 = vmatprep.subr.mxu0 0.0
    %357 = vmatpush1.msra.mxu0 0.0
    %358 = vmatprep.subr.mxu0 0.0
    %359 = vmatpush1.msra.mxu0 0.0
    %360 = vmatprep.subr.mxu0 0.0
    %361 = vmatpush1.msra.mxu0 0.0
    %362 = vmatprep.subr.mxu0 0.0
    %363 = vmatpush1.msra.mxu0 0.0
    %364 = vmatprep.subr.mxu0 0.0
    %365 = vmatpush1.msra.mxu0 0.0
    %366 = vmatprep.subr.mxu0 0.0
    %367 = vmatpush1.msra.mxu0 0.0
    %368 = vmatprep.subr.mxu0 0.0
    %369 = vmatpush1.msra.mxu0 %v229
    %370 = vmatprep.subr.mxu0 0.0
    %371 = vmatpush1.msra.mxu0 %v228
    %372 = vmatprep.subr.mxu0 0.0
    %373 = vmatpush1.msra.mxu0 %v227
    %374 = vmatprep.subr.mxu0 0.0
    %375 = vmatpush1.msra.mxu0 %v226
    %376 = vmatprep.subr.mxu0 0.0
    %377 = vmatpush2.msra.mxu0 0.0
    %378 = vmatprep.subr.mxu0 0.0
    %379 = vmatpush2.msra.mxu0 0.0
    %380 = vmatprep.subr.mxu0 0.0
    %381 = vmatpush2.msra.mxu0 0.0
    %382 = vmatprep.subr.mxu0 0.0
    %383 = vmatpush2.msra.mxu0 0.0
    %384 = vmatprep.subr.mxu0 0.0
    %385 = vmatpush2.msra.mxu0 0.0
    %386 = vmatprep.subr.mxu0 0.0
    %387 = vmatpush2.msra.mxu0 0.0
    %388 = vmatprep.subr.mxu0 0.0
    %389 = vmatpush2.msra.mxu0 0.0
    %390 = vmatprep.subr.mxu0 0.0
    %391 = vmatpush2.msra.mxu0 0.0
    %392 = vmatprep.subr.mxu0 0.0
    %393 = vmatpush2.msra.mxu0 0.0
    %394 = vmatprep.subr.mxu0 0.0
    %395 = vmatpush2.msra.mxu0 0.0
    %396 = vmatprep.subr.mxu0 0.0
    %397 = vmatpush2.msra.mxu0 0.0
    %398 = vmatprep.subr.mxu0 0.0
    %399 = vmatpush2.msra.mxu0 0.0
    %400 = vmatprep.subr.mxu0 0.0
    %401 = vmatpush2.msra.mxu0 0.0
    %402 = vmatprep.subr.mxu0 0.0
    %403 = vmatpush2.msra.mxu0 0.0
    %404 = vmatprep.subr.mxu0 0.0
    %405 = vmatpush2.msra.mxu0 0.0
    %406 = vmatprep.subr.mxu0 0.0
    %407 = vmatpush2.msra.mxu0 0.0
    %408 = vmatprep.mubr.f32.mxu0 0.0
    %409 = vmatmul.mubr.f32.gmra.mxu0 %v342
    %v410 = vpop.f32.mrf.mxu0
    %v411 = vadd.f32 %v235, %v410
    %v412 = vpop.f32.mrf.mxu0
    %413 = vdwg.mxu0
    %v415 = vrot.slane %v411, 4
    %v417 = vadd.f32 %v208, %v415
    %v418 = vsub.f32 0.0, %v417
    %v419 = vmul.f32 %v418, 1.442695
    %v420 = vpow.pop %v419
    %v421 = vadd.f32 %v420, 1.0
    %v422 = vrcp.pop %v421
    %423 = vrot.lane.b32.xlu0 %v415, 64
    %v424 = vpop.permute.xlu0 %423
    %v426 = vmul.f32 %v422, %v424
    %428 = vrot.lane.b32.xlu0 %v426, 64
    %v429 = vpop.permute.xlu0 %428
    %v431 = vadd.f32 %v208, %v429
    %v432 = vtanh.pop %v431
    %v433 = vsub.f32 1.0, %v422
    %435 = vrot.lane.b32.xlu0 %v432, 96
    %v436 = vpop.permute.xlu0 %435
    %v438 = vmul.f32 %v433, %v436
    %v439 = vrot.slane %v335, 4
    %v441 = vmul.f32 %v422, %v439
    %v442 = vadd.f32 %v438, %v441
    %444 = vrot.lane.b32.xlu0 %v442, 96
    %v445 = vpop.permute.xlu0 %444
    %vm447 = vcmask 261124
    %448 = vst.msk [vmem:[#allocation2] sm:$0xf0] %vm447, %v445
    %v449 = vrot.slane %v442, 4
    %450 = vrot.lane.b32.xlu0 %v449, 96
    %v451 = vpop.permute.xlu0 %450
    %v452 = vsel %vm237, %v451, 0
    %454 = vmatprep.subr.mxu0 0.0
    %455 = vmatpush1.msra.mxu0 0.0
    %456 = vmatprep.subr.mxu0 0.0
    %457 = vmatpush1.msra.mxu0 0.0
    %458 = vmatprep.subr.mxu0 0.0
    %459 = vmatpush1.msra.mxu0 0.0
    %460 = vmatprep.subr.mxu0 0.0
    %461 = vmatpush1.msra.mxu0 0.0
    %462 = vmatprep.subr.mxu0 0.0
    %463 = vmatpush1.msra.mxu0 0.0
    %464 = vmatprep.subr.mxu0 0.0
    %465 = vmatpush1.msra.mxu0 0.0
    %466 = vmatprep.subr.mxu0 0.0
    %467 = vmatpush1.msra.mxu0 0.0
    %468 = vmatprep.subr.mxu0 0.0
    %469 = vmatpush1.msra.mxu0 0.0
    %470 = vmatprep.subr.mxu0 0.0
    %471 = vmatpush1.msra.mxu0 0.0
    %472 = vmatprep.subr.mxu0 0.0
    %473 = vmatpush1.msra.mxu0 0.0
    %474 = vmatprep.subr.mxu0 0.0
    %475 = vmatpush1.msra.mxu0 0.0
    %476 = vmatprep.subr.mxu0 0.0
    %477 = vmatpush1.msra.mxu0 0.0
    %478 = vmatprep.subr.mxu0 0.0
    %479 = vmatpush1.msra.mxu0 %v229
    %480 = vmatprep.subr.mxu0 0.0
    %481 = vmatpush1.msra.mxu0 %v228
    %482 = vmatprep.subr.mxu0 0.0
    %483 = vmatpush1.msra.mxu0 %v227
    %484 = vmatprep.subr.mxu0 0.0
    %485 = vmatpush1.msra.mxu0 %v226
    %486 = vmatprep.subr.mxu0 0.0
    %487 = vmatpush2.msra.mxu0 0.0
    %488 = vmatprep.subr.mxu0 0.0
    %489 = vmatpush2.msra.mxu0 0.0
    %490 = vmatprep.subr.mxu0 0.0
    %491 = vmatpush2.msra.mxu0 0.0
    %492 = vmatprep.subr.mxu0 0.0
    %493 = vmatpush2.msra.mxu0 0.0
    %494 = vmatprep.subr.mxu0 0.0
    %495 = vmatpush2.msra.mxu0 0.0
    %496 = vmatprep.subr.mxu0 0.0
    %497 = vmatpush2.msra.mxu0 0.0
    %498 = vmatprep.subr.mxu0 0.0
    %499 = vmatpush2.msra.mxu0 0.0
    %500 = vmatprep.subr.mxu0 0.0
    %501 = vmatpush2.msra.mxu0 0.0
    %502 = vmatprep.subr.mxu0 0.0
    %503 = vmatpush2.msra.mxu0 0.0
    %504 = vmatprep.subr.mxu0 0.0
    %505 = vmatpush2.msra.mxu0 0.0
    %506 = vmatprep.subr.mxu0 0.0
    %507 = vmatpush2.msra.mxu0 0.0
    %508 = vmatprep.subr.mxu0 0.0
    %509 = vmatpush2.msra.mxu0 0.0
    %510 = vmatprep.subr.mxu0 0.0
    %511 = vmatpush2.msra.mxu0 0.0
    %512 = vmatprep.subr.mxu0 0.0
    %513 = vmatpush2.msra.mxu0 0.0
    %514 = vmatprep.subr.mxu0 0.0
    %515 = vmatpush2.msra.mxu0 0.0
    %516 = vmatprep.subr.mxu0 0.0
    %517 = vmatpush2.msra.mxu0 0.0
    %518 = vmatprep.mubr.f32.mxu0 0.0
    %519 = vmatmul.mubr.f32.gmra.mxu0 %v452
    %v520 = vpop.f32.mrf.mxu0
    %v521 = vadd.f32 %v235, %v520
    %v522 = vpop.f32.mrf.mxu0
    %523 = vdwg.mxu0
    %v524 = vadd.f32 %v213, %v521
    %v525 = vsub.f32 0.0, %v524
    %v526 = vmul.f32 %v525, 1.442695
    %v527 = vpow.pop %v526
    %v528 = vadd.f32 %v527, 1.0
    %v529 = vrcp.pop %v528
    %531 = vrot.lane.b32.xlu0 %v521, 64
    %v532 = vpop.permute.xlu0 %531
    %v534 = vmul.f32 %v529, %v532
    %536 = vrot.lane.b32.xlu0 %v534, 64
    %v537 = vpop.permute.xlu0 %536
    %v539 = vadd.f32 %v213, %v537
    %v540 = vtanh.pop %v539
    %v541 = vsub.f32 1.0, %v529
    %543 = vrot.lane.b32.xlu0 %v540, 96
    %v544 = vpop.permute.xlu0 %543
    %v546 = vmul.f32 %v541, %v544
    %v548 = vmul.f32 %v529, %v449
    %v549 = vadd.f32 %v546, %v548
    %551 = vrot.lane.b32.xlu0 %v549, 96
    %v552 = vpop.permute.xlu0 %551
    %554 = vst.msk [vmem:[#allocation2 + $0x8] sm:$0xf] %vm340, %v552
    %v555 = vsel %vm237, %v552, 0
    %557 = vmatprep.subr.mxu0 0.0
    %558 = vmatpush1.msra.mxu0 0.0
    %559 = vmatprep.subr.mxu0 0.0
    %560 = vmatpush1.msra.mxu0 0.0
    %561 = vmatprep.subr.mxu0 0.0
    %562 = vmatpush1.msra.mxu0 0.0
    %563 = vmatprep.subr.mxu0 0.0
    %564 = vmatpush1.msra.mxu0 0.0
    %565 = vmatprep.subr.mxu0 0.0
    %566 = vmatpush1.msra.mxu0 0.0
    %567 = vmatprep.subr.mxu0 0.0
    %568 = vmatpush1.msra.mxu0 0.0
    %569 = vmatprep.subr.mxu0 0.0
    %570 = vmatpush1.msra.mxu0 0.0
    %571 = vmatprep.subr.mxu0 0.0
    %572 = vmatpush1.msra.mxu0 0.0
    %573 = vmatprep.subr.mxu0 0.0
    %574 = vmatpush1.msra.mxu0 0.0
    %575 = vmatprep.subr.mxu0 0.0
    %576 = vmatpush1.msra.mxu0 0.0
    %577 = vmatprep.subr.mxu0 0.0
    %578 = vmatpush1.msra.mxu0 0.0
    %579 = vmatprep.subr.mxu0 0.0
    %580 = vmatpush1.msra.mxu0 0.0
    %581 = vmatprep.subr.mxu0 0.0
    %582 = vmatpush1.msra.mxu0 %v229
    %583 = vmatprep.subr.mxu0 0.0
    %584 = vmatpush1.msra.mxu0 %v228
    %585 = vmatprep.subr.mxu0 0.0
    %586 = vmatpush1.msra.mxu0 %v227
    %587 = vmatprep.subr.mxu0 0.0
    %588 = vmatpush1.msra.mxu0 %v226
    %589 = vmatprep.subr.mxu0 0.0
    %590 = vmatpush2.msra.mxu0 0.0
    %591 = vmatprep.subr.mxu0 0.0
    %592 = vmatpush2.msra.mxu0 0.0
    %593 = vmatprep.subr.mxu0 0.0
    %594 = vmatpush2.msra.mxu0 0.0
    %595 = vmatprep.subr.mxu0 0.0
    %596 = vmatpush2.msra.mxu0 0.0
    %597 = vmatprep.subr.mxu0 0.0
    %598 = vmatpush2.msra.mxu0 0.0
    %599 = vmatprep.subr.mxu0 0.0
    %600 = vmatpush2.msra.mxu0 0.0
    %601 = vmatprep.subr.mxu0 0.0
    %602 = vmatpush2.msra.mxu0 0.0
    %603 = vmatprep.subr.mxu0 0.0
    %604 = vmatpush2.msra.mxu0 0.0
    %605 = vmatprep.subr.mxu0 0.0
    %606 = vmatpush2.msra.mxu0 0.0
    %607 = vmatprep.subr.mxu0 0.0
    %608 = vmatpush2.msra.mxu0 0.0
    %609 = vmatprep.subr.mxu0 0.0
    %610 = vmatpush2.msra.mxu0 0.0
    %611 = vmatprep.subr.mxu0 0.0
    %612 = vmatpush2.msra.mxu0 0.0
    %613 = vmatprep.subr.mxu0 0.0
    %614 = vmatpush2.msra.mxu0 0.0
    %615 = vmatprep.subr.mxu0 0.0
    %616 = vmatpush2.msra.mxu0 0.0
    %617 = vmatprep.subr.mxu0 0.0
    %618 = vmatpush2.msra.mxu0 0.0
    %619 = vmatprep.subr.mxu0 0.0
    %620 = vmatpush2.msra.mxu0 0.0
    %621 = vmatprep.mubr.f32.mxu0 0.0
    %622 = vmatmul.mubr.f32.gmra.mxu0 %v555
    %v623 = vpop.f32.mrf.mxu0
    %v624 = vadd.f32 %v235, %v623
    %v625 = vpop.f32.mrf.mxu0
    %626 = vdwg.mxu0
    %v628 = vrot.slane %v624, 4
    %v630 = vadd.f32 %v213, %v628
    %v631 = vsub.f32 0.0, %v630
    %v632 = vmul.f32 %v631, 1.442695
    %v633 = vpow.pop %v632
    %v634 = vadd.f32 %v633, 1.0
    %v635 = vrcp.pop %v634
    %636 = vrot.lane.b32.xlu0 %v628, 64
    %v637 = vpop.permute.xlu0 %636
    %v639 = vmul.f32 %v635, %v637
    %641 = vrot.lane.b32.xlu0 %v639, 64
    %v642 = vpop.permute.xlu0 %641
    %v644 = vadd.f32 %v213, %v642
    %v645 = vtanh.pop %v644
    %v646 = vsub.f32 1.0, %v635
    %648 = vrot.lane.b32.xlu0 %v645, 96
    %v649 = vpop.permute.xlu0 %648
    %v651 = vmul.f32 %v646, %v649
    %v652 = vrot.slane %v549, 4
    %v654 = vmul.f32 %v635, %v652
    %v655 = vadd.f32 %v651, %v654
    %657 = vrot.lane.b32.xlu0 %v655, 96
    %v658 = vpop.permute.xlu0 %657
    %660 = vst.msk [vmem:[#allocation2 + $0x8] sm:$0xf0] %vm447, %v658
    %v661 = vrot.slane %v655, 4
    %662 = vrot.lane.b32.xlu0 %v661, 96
    %v663 = vpop.permute.xlu0 %662
    %v664 = vsel %vm237, %v663, 0
    %666 = vmatprep.subr.mxu0 0.0
    %667 = vmatpush1.msra.mxu0 0.0
    %668 = vmatprep.subr.mxu0 0.0
    %669 = vmatpush1.msra.mxu0 0.0
    %670 = vmatprep.subr.mxu0 0.0
    %671 = vmatpush1.msra.mxu0 0.0
    %672 = vmatprep.subr.mxu0 0.0
    %673 = vmatpush1.msra.mxu0 0.0
    %674 = vmatprep.subr.mxu0 0.0
    %675 = vmatpush1.msra.mxu0 0.0
    %676 = vmatprep.subr.mxu0 0.0
    %677 = vmatpush1.msra.mxu0 0.0
    %678 = vmatprep.subr.mxu0 0.0
    %679 = vmatpush1.msra.mxu0 0.0
    %680 = vmatprep.subr.mxu0 0.0
    %681 = vmatpush1.msra.mxu0 0.0
    %682 = vmatprep.subr.mxu0 0.0
    %683 = vmatpush1.msra.mxu0 0.0
    %684 = vmatprep.subr.mxu0 0.0
    %685 = vmatpush1.msra.mxu0 0.0
    %686 = vmatprep.subr.mxu0 0.0
    %687 = vmatpush1.msra.mxu0 0.0
    %688 = vmatprep.subr.mxu0 0.0
    %689 = vmatpush1.msra.mxu0 0.0
    %690 = vmatprep.subr.mxu0 0.0
    %691 = vmatpush1.msra.mxu0 %v229
    %692 = vmatprep.subr.mxu0 0.0
    %693 = vmatpush1.msra.mxu0 %v228
    %694 = vmatprep.subr.mxu0 0.0
    %695 = vmatpush1.msra.mxu0 %v227
    %696 = vmatprep.subr.mxu0 0.0
    %697 = vmatpush1.msra.mxu0 %v226
    %698 = vmatprep.subr.mxu0 0.0
    %699 = vmatpush2.msra.mxu0 0.0
    %700 = vmatprep.subr.mxu0 0.0
    %701 = vmatpush2.msra.mxu0 0.0
    %702 = vmatprep.subr.mxu0 0.0
    %703 = vmatpush2.msra.mxu0 0.0
    %704 = vmatprep.subr.mxu0 0.0
    %705 = vmatpush2.msra.mxu0 0.0
    %706 = vmatprep.subr.mxu0 0.0
    %707 = vmatpush2.msra.mxu0 0.0
    %708 = vmatprep.subr.mxu0 0.0
    %709 = vmatpush2.msra.mxu0 0.0
    %710 = vmatprep.subr.mxu0 0.0
    %711 = vmatpush2.msra.mxu0 0.0
    %712 = vmatprep.subr.mxu0 0.0
    %713 = vmatpush2.msra.mxu0 0.0
    %714 = vmatprep.subr.mxu0 0.0
    %715 = vmatpush2.msra.mxu0 0.0
    %716 = vmatprep.subr.mxu0 0.0
    %717 = vmatpush2.msra.mxu0 0.0
    %718 = vmatprep.subr.mxu0 0.0
    %719 = vmatpush2.msra.mxu0 0.0
    %720 = vmatprep.subr.mxu0 0.0
    %721 = vmatpush2.msra.mxu0 0.0
    %722 = vmatprep.subr.mxu0 0.0
    %723 = vmatpush2.msra.mxu0 0.0
    %724 = vmatprep.subr.mxu0 0.0
    %725 = vmatpush2.msra.mxu0 0.0
    %726 = vmatprep.subr.mxu0 0.0
    %727 = vmatpush2.msra.mxu0 0.0
    %728 = vmatprep.subr.mxu0 0.0
    %729 = vmatpush2.msra.mxu0 0.0
    %730 = vmatprep.mubr.f32.mxu0 0.0
    %731 = vmatmul.mubr.f32.gmra.mxu0 %v664
    %v732 = vpop.f32.mrf.mxu0
    %v733 = vadd.f32 %v235, %v732
    %v734 = vpop.f32.mrf.mxu0
    %735 = vdwg.mxu0
    %v736 = vadd.f32 %v218, %v733
    %v737 = vsub.f32 0.0, %v736
    %v738 = vmul.f32 %v737, 1.442695
    %v739 = vpow.pop %v738
    %v740 = vadd.f32 %v739, 1.0
    %v741 = vrcp.pop %v740
    %743 = vrot.lane.b32.xlu0 %v733, 64
    %v744 = vpop.permute.xlu0 %743
    %v746 = vmul.f32 %v741, %v744
    %748 = vrot.lane.b32.xlu0 %v746, 64
    %v749 = vpop.permute.xlu0 %748
    %v751 = vadd.f32 %v218, %v749
    %v752 = vtanh.pop %v751
    %v753 = vsub.f32 1.0, %v741
    %755 = vrot.lane.b32.xlu0 %v752, 96
    %v756 = vpop.permute.xlu0 %755
    %v758 = vmul.f32 %v753, %v756
    %v760 = vmul.f32 %v741, %v661
    %v761 = vadd.f32 %v758, %v760
    %763 = vrot.lane.b32.xlu0 %v761, 96
    %v764 = vpop.permute.xlu0 %763
    %766 = vst.msk [vmem:[#allocation2 + $0x10] sm:$0xf] %vm340, %v764
    %v767 = vsel %vm237, %v764, 0
    %769 = vmatprep.subr.mxu0 0.0
    %770 = vmatpush1.msra.mxu0 0.0
    %771 = vmatprep.subr.mxu0 0.0
    %772 = vmatpush1.msra.mxu0 0.0
    %773 = vmatprep.subr.mxu0 0.0
    %774 = vmatpush1.msra.mxu0 0.0
    %775 = vmatprep.subr.mxu0 0.0
    %776 = vmatpush1.msra.mxu0 0.0
    %777 = vmatprep.subr.mxu0 0.0
    %778 = vmatpush1.msra.mxu0 0.0
    %779 = vmatprep.subr.mxu0 0.0
    %780 = vmatpush1.msra.mxu0 0.0
    %781 = vmatprep.subr.mxu0 0.0
    %782 = vmatpush1.msra.mxu0 0.0
    %783 = vmatprep.subr.mxu0 0.0
    %784 = vmatpush1.msra.mxu0 0.0
    %785 = vmatprep.subr.mxu0 0.0
    %786 = vmatpush1.msra.mxu0 0.0
    %787 = vmatprep.subr.mxu0 0.0
    %788 = vmatpush1.msra.mxu0 0.0
    %789 = vmatprep.subr.mxu0 0.0
    %790 = vmatpush1.msra.mxu0 0.0
    %791 = vmatprep.subr.mxu0 0.0
    %792 = vmatpush1.msra.mxu0 0.0
    %793 = vmatprep.subr.mxu0 0.0
    %794 = vmatpush1.msra.mxu0 %v229
    %795 = vmatprep.subr.mxu0 0.0
    %796 = vmatpush1.msra.mxu0 %v228
    %797 = vmatprep.subr.mxu0 0.0
    %798 = vmatpush1.msra.mxu0 %v227
    %799 = vmatprep.subr.mxu0 0.0
    %800 = vmatpush1.msra.mxu0 %v226
    %801 = vmatprep.subr.mxu0 0.0
    %802 = vmatpush2.msra.mxu0 0.0
    %803 = vmatprep.subr.mxu0 0.0
    %804 = vmatpush2.msra.mxu0 0.0
    %805 = vmatprep.subr.mxu0 0.0
    %806 = vmatpush2.msra.mxu0 0.0
    %807 = vmatprep.subr.mxu0 0.0
    %808 = vmatpush2.msra.mxu0 0.0
    %809 = vmatprep.subr.mxu0 0.0
    %810 = vmatpush2.msra.mxu0 0.0
    %811 = vmatprep.subr.mxu0 0.0
    %812 = vmatpush2.msra.mxu0 0.0
    %813 = vmatprep.subr.mxu0 0.0
    %814 = vmatpush2.msra.mxu0 0.0
    %815 = vmatprep.subr.mxu0 0.0
    %816 = vmatpush2.msra.mxu0 0.0
    %817 = vmatprep.subr.mxu0 0.0
    %818 = vmatpush2.msra.mxu0 0.0
    %819 = vmatprep.subr.mxu0 0.0
    %820 = vmatpush2.msra.mxu0 0.0
    %821 = vmatprep.subr.mxu0 0.0
    %822 = vmatpush2.msra.mxu0 0.0
    %823 = vmatprep.subr.mxu0 0.0
    %824 = vmatpush2.msra.mxu0 0.0
    %825 = vmatprep.subr.mxu0 0.0
    %826 = vmatpush2.msra.mxu0 0.0
    %827 = vmatprep.subr.mxu0 0.0
    %828 = vmatpush2.msra.mxu0 0.0
    %829 = vmatprep.subr.mxu0 0.0
    %830 = vmatpush2.msra.mxu0 0.0
    %831 = vmatprep.subr.mxu0 0.0
    %832 = vmatpush2.msra.mxu0 0.0
    %833 = vmatprep.mubr.f32.mxu0 0.0
    %834 = vmatmul.mubr.f32.gmra.mxu0 %v767
    %v835 = vpop.f32.mrf.mxu0
    %v836 = vadd.f32 %v235, %v835
    %v837 = vpop.f32.mrf.mxu0
    %838 = vdwg.mxu0
    %v840 = vrot.slane %v836, 4
    %v842 = vadd.f32 %v218, %v840
    %v843 = vsub.f32 0.0, %v842
    %v844 = vmul.f32 %v843, 1.442695
    %v845 = vpow.pop %v844
    %v846 = vadd.f32 %v845, 1.0
    %v847 = vrcp.pop %v846
    %848 = vrot.lane.b32.xlu0 %v840, 64
    %v849 = vpop.permute.xlu0 %848
    %v851 = vmul.f32 %v847, %v849
    %853 = vrot.lane.b32.xlu0 %v851, 64
    %v854 = vpop.permute.xlu0 %853
    %v856 = vadd.f32 %v218, %v854
    %v857 = vtanh.pop %v856
    %v858 = vsub.f32 1.0, %v847
    %860 = vrot.lane.b32.xlu0 %v857, 96
    %v861 = vpop.permute.xlu0 %860
    %v863 = vmul.f32 %v858, %v861
    %v864 = vrot.slane %v761, 4
    %v866 = vmul.f32 %v847, %v864
    %v867 = vadd.f32 %v863, %v866
    %869 = vrot.lane.b32.xlu0 %v867, 96
    %v870 = vpop.permute.xlu0 %869
    %872 = vst.msk [vmem:[#allocation2 + $0x10] sm:$0xf0] %vm447, %v870
    %v873 = vrot.slane %v867, 4
    %874 = vrot.lane.b32.xlu0 %v873, 96
    %v875 = vpop.permute.xlu0 %874
    %v876 = vsel %vm237, %v875, 0
    %878 = vmatprep.subr.mxu0 0.0
    %879 = vmatpush1.msra.mxu0 0.0
    %880 = vmatprep.subr.mxu0 0.0
    %881 = vmatpush1.msra.mxu0 0.0
    %882 = vmatprep.subr.mxu0 0.0
    %883 = vmatpush1.msra.mxu0 0.0
    %884 = vmatprep.subr.mxu0 0.0
    %885 = vmatpush1.msra.mxu0 0.0
    %886 = vmatprep.subr.mxu0 0.0
    %887 = vmatpush1.msra.mxu0 0.0
    %888 = vmatprep.subr.mxu0 0.0
    %889 = vmatpush1.msra.mxu0 0.0
    %890 = vmatprep.subr.mxu0 0.0
    %891 = vmatpush1.msra.mxu0 0.0
    %892 = vmatprep.subr.mxu0 0.0
    %893 = vmatpush1.msra.mxu0 0.0
    %894 = vmatprep.subr.mxu0 0.0
    %895 = vmatpush1.msra.mxu0 0.0
    %896 = vmatprep.subr.mxu0 0.0
    %897 = vmatpush1.msra.mxu0 0.0
    %898 = vmatprep.subr.mxu0 0.0
    %899 = vmatpush1.msra.mxu0 0.0
    %900 = vmatprep.subr.mxu0 0.0
    %901 = vmatpush1.msra.mxu0 0.0
    %902 = vmatprep.subr.mxu0 0.0
    %903 = vmatpush1.msra.mxu0 %v229
    %904 = vmatprep.subr.mxu0 0.0
    %905 = vmatpush1.msra.mxu0 %v228
    %906 = vmatprep.subr.mxu0 0.0
    %907 = vmatpush1.msra.mxu0 %v227
    %908 = vmatprep.subr.mxu0 0.0
    %909 = vmatpush1.msra.mxu0 %v226
    %910 = vmatprep.subr.mxu0 0.0
    %911 = vmatpush2.msra.mxu0 0.0
    %912 = vmatprep.subr.mxu0 0.0
    %913 = vmatpush2.msra.mxu0 0.0
    %914 = vmatprep.subr.mxu0 0.0
    %915 = vmatpush2.msra.mxu0 0.0
    %916 = vmatprep.subr.mxu0 0.0
    %917 = vmatpush2.msra.mxu0 0.0
    %918 = vmatprep.subr.mxu0 0.0
    %919 = vmatpush2.msra.mxu0 0.0
    %920 = vmatprep.subr.mxu0 0.0
    %921 = vmatpush2.msra.mxu0 0.0
    %922 = vmatprep.subr.mxu0 0.0
    %923 = vmatpush2.msra.mxu0 0.0
    %924 = vmatprep.subr.mxu0 0.0
    %925 = vmatpush2.msra.mxu0 0.0
    %926 = vmatprep.subr.mxu0 0.0
    %927 = vmatpush2.msra.mxu0 0.0
    %928 = vmatprep.subr.mxu0 0.0
    %929 = vmatpush2.msra.mxu0 0.0
    %930 = vmatprep.subr.mxu0 0.0
    %931 = vmatpush2.msra.mxu0 0.0
    %932 = vmatprep.subr.mxu0 0.0
    %933 = vmatpush2.msra.mxu0 0.0
    %934 = vmatprep.subr.mxu0 0.0
    %935 = vmatpush2.msra.mxu0 0.0
    %936 = vmatprep.subr.mxu0 0.0
    %937 = vmatpush2.msra.mxu0 0.0
    %938 = vmatprep.subr.mxu0 0.0
    %939 = vmatpush2.msra.mxu0 0.0
    %940 = vmatprep.subr.mxu0 0.0
    %941 = vmatpush2.msra.mxu0 0.0
    %942 = vmatprep.mubr.f32.mxu0 0.0
    %943 = vmatmul.mubr.f32.gmra.mxu0 %v876
    %v944 = vpop.f32.mrf.mxu0
    %v945 = vadd.f32 %v235, %v944
    %v946 = vpop.f32.mrf.mxu0
    %947 = vdwg.mxu0
    %v948 = vadd.f32 %v223, %v945
    %v949 = vsub.f32 0.0, %v948
    %v950 = vmul.f32 %v949, 1.442695
    %v951 = vpow.pop %v950
    %v952 = vadd.f32 %v951, 1.0
    %v953 = vrcp.pop %v952
    %955 = vrot.lane.b32.xlu0 %v945, 64
    %v956 = vpop.permute.xlu0 %955
    %v958 = vmul.f32 %v953, %v956
    %960 = vrot.lane.b32.xlu0 %v958, 64
    %v961 = vpop.permute.xlu0 %960
    %v963 = vadd.f32 %v223, %v961
    %v964 = vtanh.pop %v963
    %v965 = vsub.f32 1.0, %v953
    %967 = vrot.lane.b32.xlu0 %v964, 96
    %v968 = vpop.permute.xlu0 %967
    %v970 = vmul.f32 %v965, %v968
    %v972 = vmul.f32 %v953, %v873
    %v973 = vadd.f32 %v970, %v972
    %975 = vrot.lane.b32.xlu0 %v973, 96
    %v976 = vpop.permute.xlu0 %975
    %978 = vst.msk [vmem:[#allocation2 + $0x18] sm:$0xf] %vm340, %v976
    %v979 = vsel %vm237, %v976, 0
    %981 = vmatprep.subr.mxu0 0.0
    %982 = vmatpush1.msra.mxu0 0.0
    %983 = vmatprep.subr.mxu0 0.0
    %984 = vmatpush1.msra.mxu0 0.0
    %985 = vmatprep.subr.mxu0 0.0
    %986 = vmatpush1.msra.mxu0 0.0
    %987 = vmatprep.subr.mxu0 0.0
    %988 = vmatpush1.msra.mxu0 0.0
    %989 = vmatprep.subr.mxu0 0.0
    %990 = vmatpush1.msra.mxu0 0.0
    %991 = vmatprep.subr.mxu0 0.0
    %992 = vmatpush1.msra.mxu0 0.0
    %993 = vmatprep.subr.mxu0 0.0
    %994 = vmatpush1.msra.mxu0 0.0
    %995 = vmatprep.subr.mxu0 0.0
    %996 = vmatpush1.msra.mxu0 0.0
    %997 = vmatprep.subr.mxu0 0.0
    %998 = vmatpush1.msra.mxu0 0.0
    %999 = vmatprep.subr.mxu0 0.0
    %1000 = vmatpush1.msra.mxu0 0.0
    %1001 = vmatprep.subr.mxu0 0.0
    %1002 = vmatpush1.msra.mxu0 0.0
    %1003 = vmatprep.subr.mxu0 0.0
    %1004 = vmatpush1.msra.mxu0 0.0
    %1005 = vmatprep.subr.mxu0 0.0
    %1006 = vmatpush1.msra.mxu0 %v229
    %1007 = vmatprep.subr.mxu0 0.0
    %1008 = vmatpush1.msra.mxu0 %v228
    %1009 = vmatprep.subr.mxu0 0.0
    %1010 = vmatpush1.msra.mxu0 %v227
    %1011 = vmatprep.subr.mxu0 0.0
    %1012 = vmatpush1.msra.mxu0 %v226
    %1013 = vmatprep.subr.mxu0 0.0
    %1014 = vmatpush2.msra.mxu0 0.0
    %1015 = vmatprep.subr.mxu0 0.0
    %1016 = vmatpush2.msra.mxu0 0.0
    %1017 = vmatprep.subr.mxu0 0.0
    %1018 = vmatpush2.msra.mxu0 0.0
    %1019 = vmatprep.subr.mxu0 0.0
    %1020 = vmatpush2.msra.mxu0 0.0
    %1021 = vmatprep.subr.mxu0 0.0
    %1022 = vmatpush2.msra.mxu0 0.0
    %1023 = vmatprep.subr.mxu0 0.0
    %1024 = vmatpush2.msra.mxu0 0.0
    %1025 = vmatprep.subr.mxu0 0.0
    %1026 = vmatpush2.msra.mxu0 0.0
    %1027 = vmatprep.subr.mxu0 0.0
    %1028 = vmatpush2.msra.mxu0 0.0
    %1029 = vmatprep.subr.mxu0 0.0
    %1030 = vmatpush2.msra.mxu0 0.0
    %1031 = vmatprep.subr.mxu0 0.0
    %1032 = vmatpush2.msra.mxu0 0.0
    %1033 = vmatprep.subr.mxu0 0.0
    %1034 = vmatpush2.msra.mxu0 0.0
    %1035 = vmatprep.subr.mxu0 0.0
    %1036 = vmatpush2.msra.mxu0 0.0
    %1037 = vmatprep.subr.mxu0 0.0
    %1038 = vmatpush2.msra.mxu0 0.0
    %1039 = vmatprep.subr.mxu0 0.0
    %1040 = vmatpush2.msra.mxu0 0.0
    %1041 = vmatprep.subr.mxu0 0.0
    %1042 = vmatpush2.msra.mxu0 0.0
    %1043 = vmatprep.subr.mxu0 0.0
    %1044 = vmatpush2.msra.mxu0 0.0
    %1045 = vmatprep.mubr.f32.mxu0 0.0
    %1046 = vmatmul.mubr.f32.gmra.mxu0 %v979
    %v1047 = vpop.f32.mrf.mxu0
    %v1048 = vadd.f32 %v235, %v1047
    %v1049 = vpop.f32.mrf.mxu0
    %1050 = vdwg.mxu0
    %v1052 = vrot.slane %v1048, 4
    %v1054 = vadd.f32 %v223, %v1052
    %v1055 = vsub.f32 0.0, %v1054
    %v1056 = vmul.f32 %v1055, 1.442695
    %v1057 = vpow.pop %v1056
    %v1058 = vadd.f32 %v1057, 1.0
    %v1059 = vrcp.pop %v1058
    %1060 = vrot.lane.b32.xlu0 %v1052, 64
    %v1061 = vpop.permute.xlu0 %1060
    %v1063 = vmul.f32 %v1059, %v1061
    %1065 = vrot.lane.b32.xlu0 %v1063, 64
    %v1066 = vpop.permute.xlu0 %1065
    %v1068 = vadd.f32 %v223, %v1066
    %v1069 = vtanh.pop %v1068
    %v1070 = vsub.f32 1.0, %v1059
    %1072 = vrot.lane.b32.xlu0 %v1069, 96
    %v1073 = vpop.permute.xlu0 %1072
    %v1075 = vmul.f32 %v1070, %v1073
    %v1076 = vrot.slane %v973, 4
    %v1078 = vmul.f32 %v1059, %v1076
    %v1079 = vadd.f32 %v1075, %v1078
    %1081 = vrot.lane.b32.xlu0 %v1079, 96
    %v1082 = vpop.permute.xlu0 %1081
    %1084 = vst.msk [vmem:[#allocation2 + $0x18] sm:$0xf0] %vm447, %v1082
    %1085 = vst.msk [vmem:[#allocation14 - $0x4] sm:$0xf0] %vm447, %v1082
    %v1086 = vld [vmem:[#allocation2] sm:$0xff]
    %v1087 = vld [vmem:[#allocation2 + $0x8] sm:$0xff]
    %v1088 = vld [vmem:[#allocation2 + $0x10] sm:$0xff]
    %v1089 = vld [vmem:[#allocation2 + $0x18] sm:$0xff]
    %v1090 = vld [vmem:[#allocation10] sm:$0xff]
    %v1091 = vld [vmem:[#allocation10 + $0x8] sm:$0xff]
    %v1092 = vld [vmem:[#allocation10 + $0x10] sm:$0xff]
    %v1093 = vld [vmem:[#allocation10 + $0x18] sm:$0xff]
    %v1094 = vld [vmem:[%s7] sm:$0x1]
    %v1096 = vlaneseq
    %v1097 = vshrl.u32 %v1096, 7
    %v1098 = vsub.s32 0, %v1097
    %v1099 = vrot.slane %v1094, %v1098
    %v1102 = vsel %vm237, %v1086, 0
    %v1105 = vsel %vm237, %v1087, 0
    %v1108 = vsel %vm237, %v1088, 0
    %v1111 = vsel %vm237, %v1089, 0
    %1113 = vmatprep.subr.mxu0 0.0
    %1114 = vmatpush1.msra.mxu0 0.0
    %1115 = vmatprep.subr.mxu0 0.0
    %1116 = vmatpush1.msra.mxu0 0.0
    %1117 = vmatprep.subr.mxu0 0.0
    %1118 = vmatpush1.msra.mxu0 0.0
    %1119 = vmatprep.subr.mxu0 0.0
    %1120 = vmatpush1.msra.mxu0 0.0
    %1121 = vmatprep.subr.mxu0 0.0
    %1122 = vmatpush1.msra.mxu0 0.0
    %1123 = vmatprep.subr.mxu0 0.0
    %1124 = vmatpush1.msra.mxu0 0.0
    %1125 = vmatprep.subr.mxu0 0.0
    %1126 = vmatpush1.msra.mxu0 0.0
    %1127 = vmatprep.subr.mxu0 0.0
    %1128 = vmatpush1.msra.mxu0 0.0
    %1129 = vmatprep.subr.mxu0 0.0
    %1130 = vmatpush1.msra.mxu0 0.0
    %1131 = vmatprep.subr.mxu0 0.0
    %1132 = vmatpush1.msra.mxu0 0.0
    %1133 = vmatprep.subr.mxu0 0.0
    %1134 = vmatpush1.msra.mxu0 0.0
    %1135 = vmatprep.subr.mxu0 0.0
    %1136 = vmatpush1.msra.mxu0 0.0
    %1137 = vmatprep.subr.mxu0 0.0
    %1138 = vmatpush1.msra.mxu0 %v1093
    %1139 = vmatprep.subr.mxu0 0.0
    %1140 = vmatpush1.msra.mxu0 %v1092
    %1141 = vmatprep.subr.mxu0 0.0
    %1142 = vmatpush1.msra.mxu0 %v1091
    %1143 = vmatprep.subr.mxu0 0.0
    %1144 = vmatpush1.msra.mxu0 %v1090
    %1145 = vmatprep.subr.mxu0 0.0
    %1146 = vmatpush2.msra.mxu0 0.0
    %1147 = vmatprep.subr.mxu0 0.0
    %1148 = vmatpush2.msra.mxu0 0.0
    %1149 = vmatprep.subr.mxu0 0.0
    %1150 = vmatpush2.msra.mxu0 0.0
    %1151 = vmatprep.subr.mxu0 0.0
    %1152 = vmatpush2.msra.mxu0 0.0
    %1153 = vmatprep.subr.mxu0 0.0
    %1154 = vmatpush2.msra.mxu0 0.0
    %1155 = vmatprep.subr.mxu0 0.0
    %1156 = vmatpush2.msra.mxu0 0.0
    %1157 = vmatprep.subr.mxu0 0.0
    %1158 = vmatpush2.msra.mxu0 0.0
    %1159 = vmatprep.subr.mxu0 0.0
    %1160 = vmatpush2.msra.mxu0 0.0
    %1161 = vmatprep.subr.mxu0 0.0
    %1162 = vmatpush2.msra.mxu0 0.0
    %1163 = vmatprep.subr.mxu0 0.0
    %1164 = vmatpush2.msra.mxu0 0.0
    %1165 = vmatprep.subr.mxu0 0.0
    %1166 = vmatpush2.msra.mxu0 0.0
    %1167 = vmatprep.subr.mxu0 0.0
    %1168 = vmatpush2.msra.mxu0 0.0
    %1169 = vmatprep.subr.mxu0 0.0
    %1170 = vmatpush2.msra.mxu0 0.0
    %1171 = vmatprep.subr.mxu0 0.0
    %1172 = vmatpush2.msra.mxu0 0.0
    %1173 = vmatprep.subr.mxu0 0.0
    %1174 = vmatpush2.msra.mxu0 0.0
    %1175 = vmatprep.subr.mxu0 0.0
    %1176 = vmatpush2.msra.mxu0 0.0
    %1177 = vmatprep.mubr.f32.mxu0 0.0
    %1178 = vmatmul.mubr.f32.gmra.mxu0 %v1102
    %v1179 = vpop.f32.mrf.mxu0
    %v1180 = vadd.f32 %v1099, %v1179
    %v1181 = vpop.f32.mrf.mxu0
    %1182 = vmatprep.mubr.f32.mxu0 0.0
    %1183 = vmatmul.mubr.f32.gmra.mxu0 %v1105
    %v1184 = vpop.f32.mrf.mxu0
    %v1185 = vadd.f32 %v1099, %v1184
    %v1186 = vpop.f32.mrf.mxu0
    %1187 = vmatprep.mubr.f32.mxu0 0.0
    %1188 = vmatmul.mubr.f32.gmra.mxu0 %v1108
    %v1189 = vpop.f32.mrf.mxu0
    %v1190 = vadd.f32 %v1099, %v1189
    %v1191 = vpop.f32.mrf.mxu0
    %1192 = vmatprep.mubr.f32.mxu0 0.0
    %1193 = vmatmul.mubr.f32.gmra.mxu0 %v1111
    %v1194 = vpop.f32.mrf.mxu0
    %v1195 = vadd.f32 %v1099, %v1194
    %v1196 = vpop.f32.mrf.mxu0
    %1197 = vdwg.mxu0
    %v1198 = vld [vmem:[#allocation11] sm:$0xff]
    %v1199 = vld [vmem:[#allocation11 + $0x8] sm:$0xff]
    %v1200 = vld [vmem:[#allocation11 + $0x10] sm:$0xff]
    %v1201 = vld [vmem:[#allocation11 + $0x18] sm:$0xff]
    %v1202 = vld [vmem:[#allocation13] sm:$0x1]
    %v1204 = vlaneseq
    %v1205 = vshrl.u32 %v1204, 7
    %v1206 = vsub.s32 0, %v1205
    %v1207 = vrot.slane %v1202, %v1206
    %1209 = vmatprep.subr.mxu0 0.0
    %1210 = vmatpush1.msra.mxu0 0.0
    %1211 = vmatprep.subr.mxu0 0.0
    %1212 = vmatpush1.msra.mxu0 0.0
    %1213 = vmatprep.subr.mxu0 0.0
    %1214 = vmatpush1.msra.mxu0 0.0
    %1215 = vmatprep.subr.mxu0 0.0
    %1216 = vmatpush1.msra.mxu0 0.0
    %1217 = vmatprep.subr.mxu0 0.0
    %1218 = vmatpush1.msra.mxu0 0.0
    %1219 = vmatprep.subr.mxu0 0.0
    %1220 = vmatpush1.msra.mxu0 0.0
    %1221 = vmatprep.subr.mxu0 0.0
    %1222 = vmatpush1.msra.mxu0 0.0
    %1223 = vmatprep.subr.mxu0 0.0
    %1224 = vmatpush1.msra.mxu0 0.0
    %1225 = vmatprep.subr.mxu0 0.0
    %1226 = vmatpush1.msra.mxu0 0.0
    %1227 = vmatprep.subr.mxu0 0.0
    %1228 = vmatpush1.msra.mxu0 0.0
    %1229 = vmatprep.subr.mxu0 0.0
    %1230 = vmatpush1.msra.mxu0 0.0
    %1231 = vmatprep.subr.mxu0 0.0
    %1232 = vmatpush1.msra.mxu0 0.0
    %1233 = vmatprep.subr.mxu0 0.0
    %1234 = vmatpush1.msra.mxu0 %v1201
    %1235 = vmatprep.subr.mxu0 0.0
    %1236 = vmatpush1.msra.mxu0 %v1200
    %1237 = vmatprep.subr.mxu0 0.0
    %1238 = vmatpush1.msra.mxu0 %v1199
    %1239 = vmatprep.subr.mxu0 0.0
    %1240 = vmatpush1.msra.mxu0 %v1198
    %1241 = vmatprep.subr.mxu0 0.0
    %1242 = vmatpush2.msra.mxu0 0.0
    %1243 = vmatprep.subr.mxu0 0.0
    %1244 = vmatpush2.msra.mxu0 0.0
    %1245 = vmatprep.subr.mxu0 0.0
    %1246 = vmatpush2.msra.mxu0 0.0
    %1247 = vmatprep.subr.mxu0 0.0
    %1248 = vmatpush2.msra.mxu0 0.0
    %1249 = vmatprep.subr.mxu0 0.0
    %1250 = vmatpush2.msra.mxu0 0.0
    %1251 = vmatprep.subr.mxu0 0.0
    %1252 = vmatpush2.msra.mxu0 0.0
    %1253 = vmatprep.subr.mxu0 0.0
    %1254 = vmatpush2.msra.mxu0 0.0
    %1255 = vmatprep.subr.mxu0 0.0
    %1256 = vmatpush2.msra.mxu0 0.0
    %1257 = vmatprep.subr.mxu0 0.0
    %1258 = vmatpush2.msra.mxu0 0.0
    %1259 = vmatprep.subr.mxu0 0.0
    %1260 = vmatpush2.msra.mxu0 0.0
    %1261 = vmatprep.subr.mxu0 0.0
    %1262 = vmatpush2.msra.mxu0 0.0
    %1263 = vmatprep.subr.mxu0 0.0
    %1264 = vmatpush2.msra.mxu0 0.0
    %1265 = vmatprep.subr.mxu0 0.0
    %1266 = vmatpush2.msra.mxu0 0.0
    %1267 = vmatprep.subr.mxu0 0.0
    %1268 = vmatpush2.msra.mxu0 0.0
    %1269 = vmatprep.subr.mxu0 0.0
    %1270 = vmatpush2.msra.mxu0 0.0
    %1271 = vmatprep.subr.mxu0 0.0
    %1272 = vmatpush2.msra.mxu0 0.0
    %1273 = vmatprep.mubr.f32.mxu0 0.0
    %1274 = vmatmul.mubr.f32.gmra.mxu0 %v239
    %v1275 = vpop.f32.mrf.mxu0
    %v1276 = vadd.f32 %v1207, %v1275
    %v1277 = vpop.f32.mrf.mxu0
    %1278 = vdwg.mxu0
    %v1279 = vadd.f32 %v1180, %v1276
    %v1280 = vsub.f32 0.0, %v1279
    %v1281 = vmul.f32 %v1280, 1.442695
    %v1282 = vpow.pop %v1281
    %v1283 = vadd.f32 %v1282, 1.0
    %v1284 = vrcp.pop %v1283
    %1286 = vrot.lane.b32.xlu0 %v1276, 64
    %v1287 = vpop.permute.xlu0 %1286
    %v1289 = vmul.f32 %v1284, %v1287
    %1291 = vrot.lane.b32.xlu0 %v1289, 64
    %v1292 = vpop.permute.xlu0 %1291
    %v1294 = vadd.f32 %v1180, %v1292
    %v1295 = vtanh.pop %v1294
    %v1296 = vsub.f32 1.0, %v1284
    %1298 = vrot.lane.b32.xlu0 %v1295, 96
    %v1299 = vpop.permute.xlu0 %1298
    %v1301 = vmul.f32 %v1296, %v1299
    %v1302 = vmul.f32 %v1284, 0.0
    %v1303 = vadd.f32 %v1301, %v1302
    %1305 = vrot.lane.b32.xlu0 %v1303, 96
    %v1306 = vpop.permute.xlu0 %1305
    %1308 = vst.msk [vmem:[#allocation3] sm:$0xf] %vm340, %v1306
    %v1309 = vsel %vm237, %v1306, 0
    %1311 = vmatprep.subr.mxu0 0.0
    %1312 = vmatpush1.msra.mxu0 0.0
    %1313 = vmatprep.subr.mxu0 0.0
    %1314 = vmatpush1.msra.mxu0 0.0
    %1315 = vmatprep.subr.mxu0 0.0
    %1316 = vmatpush1.msra.mxu0 0.0
    %1317 = vmatprep.subr.mxu0 0.0
    %1318 = vmatpush1.msra.mxu0 0.0
    %1319 = vmatprep.subr.mxu0 0.0
    %1320 = vmatpush1.msra.mxu0 0.0
    %1321 = vmatprep.subr.mxu0 0.0
    %1322 = vmatpush1.msra.mxu0 0.0
    %1323 = vmatprep.subr.mxu0 0.0
    %1324 = vmatpush1.msra.mxu0 0.0
    %1325 = vmatprep.subr.mxu0 0.0
    %1326 = vmatpush1.msra.mxu0 0.0
    %1327 = vmatprep.subr.mxu0 0.0
    %1328 = vmatpush1.msra.mxu0 0.0
    %1329 = vmatprep.subr.mxu0 0.0
    %1330 = vmatpush1.msra.mxu0 0.0
    %1331 = vmatprep.subr.mxu0 0.0
    %1332 = vmatpush1.msra.mxu0 0.0
    %1333 = vmatprep.subr.mxu0 0.0
    %1334 = vmatpush1.msra.mxu0 0.0
    %1335 = vmatprep.subr.mxu0 0.0
    %1336 = vmatpush1.msra.mxu0 %v1201
    %1337 = vmatprep.subr.mxu0 0.0
    %1338 = vmatpush1.msra.mxu0 %v1200
    %1339 = vmatprep.subr.mxu0 0.0
    %1340 = vmatpush1.msra.mxu0 %v1199
    %1341 = vmatprep.subr.mxu0 0.0
    %1342 = vmatpush1.msra.mxu0 %v1198
    %1343 = vmatprep.subr.mxu0 0.0
    %1344 = vmatpush2.msra.mxu0 0.0
    %1345 = vmatprep.subr.mxu0 0.0
    %1346 = vmatpush2.msra.mxu0 0.0
    %1347 = vmatprep.subr.mxu0 0.0
    %1348 = vmatpush2.msra.mxu0 0.0
    %1349 = vmatprep.subr.mxu0 0.0
    %1350 = vmatpush2.msra.mxu0 0.0
    %1351 = vmatprep.subr.mxu0 0.0
    %1352 = vmatpush2.msra.mxu0 0.0
    %1353 = vmatprep.subr.mxu0 0.0
    %1354 = vmatpush2.msra.mxu0 0.0
    %1355 = vmatprep.subr.mxu0 0.0
    %1356 = vmatpush2.msra.mxu0 0.0
    %1357 = vmatprep.subr.mxu0 0.0
    %1358 = vmatpush2.msra.mxu0 0.0
    %1359 = vmatprep.subr.mxu0 0.0
    %1360 = vmatpush2.msra.mxu0 0.0
    %1361 = vmatprep.subr.mxu0 0.0
    %1362 = vmatpush2.msra.mxu0 0.0
    %1363 = vmatprep.subr.mxu0 0.0
    %1364 = vmatpush2.msra.mxu0 0.0
    %1365 = vmatprep.subr.mxu0 0.0
    %1366 = vmatpush2.msra.mxu0 0.0
    %1367 = vmatprep.subr.mxu0 0.0
    %1368 = vmatpush2.msra.mxu0 0.0
    %1369 = vmatprep.subr.mxu0 0.0
    %1370 = vmatpush2.msra.mxu0 0.0
    %1371 = vmatprep.subr.mxu0 0.0
    %1372 = vmatpush2.msra.mxu0 0.0
    %1373 = vmatprep.subr.mxu0 0.0
    %1374 = vmatpush2.msra.mxu0 0.0
    %1375 = vmatprep.mubr.f32.mxu0 0.0
    %1376 = vmatmul.mubr.f32.gmra.mxu0 %v1309
    %v1377 = vpop.f32.mrf.mxu0
    %v1378 = vadd.f32 %v1207, %v1377
    %v1379 = vpop.f32.mrf.mxu0
    %1380 = vdwg.mxu0
    %v1382 = vrot.slane %v1378, 4
    %v1384 = vadd.f32 %v1180, %v1382
    %v1385 = vsub.f32 0.0, %v1384
    %v1386 = vmul.f32 %v1385, 1.442695
    %v1387 = vpow.pop %v1386
    %v1388 = vadd.f32 %v1387, 1.0
    %v1389 = vrcp.pop %v1388
    %1390 = vrot.lane.b32.xlu0 %v1382, 64
    %v1391 = vpop.permute.xlu0 %1390
    %v1393 = vmul.f32 %v1389, %v1391
    %1395 = vrot.lane.b32.xlu0 %v1393, 64
    %v1396 = vpop.permute.xlu0 %1395
    %v1398 = vadd.f32 %v1180, %v1396
    %v1399 = vtanh.pop %v1398
    %v1400 = vsub.f32 1.0, %v1389
    %1402 = vrot.lane.b32.xlu0 %v1399, 96
    %v1403 = vpop.permute.xlu0 %1402
    %v1405 = vmul.f32 %v1400, %v1403
    %v1406 = vrot.slane %v1303, 4
    %v1408 = vmul.f32 %v1389, %v1406
    %v1409 = vadd.f32 %v1405, %v1408
    %1411 = vrot.lane.b32.xlu0 %v1409, 96
    %v1412 = vpop.permute.xlu0 %1411
    %s1414 = scalar_lea.vmem [#allocation3], 4
    %1415 = vst.msk [vmem:[%s1414 - $0x4] sm:$0xf0] %vm447, %v1412
    %v1416 = vrot.slane %v1409, 4
    %1417 = vrot.lane.b32.xlu0 %v1416, 96
    %v1418 = vpop.permute.xlu0 %1417
    %v1419 = vsel %vm237, %v1418, 0
    %1421 = vmatprep.subr.mxu0 0.0
    %1422 = vmatpush1.msra.mxu0 0.0
    %1423 = vmatprep.subr.mxu0 0.0
    %1424 = vmatpush1.msra.mxu0 0.0
    %1425 = vmatprep.subr.mxu0 0.0
    %1426 = vmatpush1.msra.mxu0 0.0
    %1427 = vmatprep.subr.mxu0 0.0
    %1428 = vmatpush1.msra.mxu0 0.0
    %1429 = vmatprep.subr.mxu0 0.0
    %1430 = vmatpush1.msra.mxu0 0.0
    %1431 = vmatprep.subr.mxu0 0.0
    %1432 = vmatpush1.msra.mxu0 0.0
    %1433 = vmatprep.subr.mxu0 0.0
    %1434 = vmatpush1.msra.mxu0 0.0
    %1435 = vmatprep.subr.mxu0 0.0
    %1436 = vmatpush1.msra.mxu0 0.0
    %1437 = vmatprep.subr.mxu0 0.0
    %1438 = vmatpush1.msra.mxu0 0.0
    %1439 = vmatprep.subr.mxu0 0.0
    %1440 = vmatpush1.msra.mxu0 0.0
    %1441 = vmatprep.subr.mxu0 0.0
    %1442 = vmatpush1.msra.mxu0 0.0
    %1443 = vmatprep.subr.mxu0 0.0
    %1444 = vmatpush1.msra.mxu0 0.0
    %1445 = vmatprep.subr.mxu0 0.0
    %1446 = vmatpush1.msra.mxu0 %v1201
    %1447 = vmatprep.subr.mxu0 0.0
    %1448 = vmatpush1.msra.mxu0 %v1200
    %1449 = vmatprep.subr.mxu0 0.0
    %1450 = vmatpush1.msra.mxu0 %v1199
    %1451 = vmatprep.subr.mxu0 0.0
    %1452 = vmatpush1.msra.mxu0 %v1198
    %1453 = vmatprep.subr.mxu0 0.0
    %1454 = vmatpush2.msra.mxu0 0.0
    %1455 = vmatprep.subr.mxu0 0.0
    %1456 = vmatpush2.msra.mxu0 0.0
    %1457 = vmatprep.subr.mxu0 0.0
    %1458 = vmatpush2.msra.mxu0 0.0
    %1459 = vmatprep.subr.mxu0 0.0
    %1460 = vmatpush2.msra.mxu0 0.0
    %1461 = vmatprep.subr.mxu0 0.0
    %1462 = vmatpush2.msra.mxu0 0.0
    %1463 = vmatprep.subr.mxu0 0.0
    %1464 = vmatpush2.msra.mxu0 0.0
    %1465 = vmatprep.subr.mxu0 0.0
    %1466 = vmatpush2.msra.mxu0 0.0
    %1467 = vmatprep.subr.mxu0 0.0
    %1468 = vmatpush2.msra.mxu0 0.0
    %1469 = vmatprep.subr.mxu0 0.0
    %1470 = vmatpush2.msra.mxu0 0.0
    %1471 = vmatprep.subr.mxu0 0.0
    %1472 = vmatpush2.msra.mxu0 0.0
    %1473 = vmatprep.subr.mxu0 0.0
    %1474 = vmatpush2.msra.mxu0 0.0
    %1475 = vmatprep.subr.mxu0 0.0
    %1476 = vmatpush2.msra.mxu0 0.0
    %1477 = vmatprep.subr.mxu0 0.0
    %1478 = vmatpush2.msra.mxu0 0.0
    %1479 = vmatprep.subr.mxu0 0.0
    %1480 = vmatpush2.msra.mxu0 0.0
    %1481 = vmatprep.subr.mxu0 0.0
    %1482 = vmatpush2.msra.mxu0 0.0
    %1483 = vmatprep.subr.mxu0 0.0
    %1484 = vmatpush2.msra.mxu0 0.0
    %1485 = vmatprep.mubr.f32.mxu0 0.0
    %1486 = vmatmul.mubr.f32.gmra.mxu0 %v1419
    %v1487 = vpop.f32.mrf.mxu0
    %v1488 = vadd.f32 %v1207, %v1487
    %v1489 = vpop.f32.mrf.mxu0
    %1490 = vdwg.mxu0
    %v1491 = vadd.f32 %v1185, %v1488
    %v1492 = vsub.f32 0.0, %v1491
    %v1493 = vmul.f32 %v1492, 1.442695
    %v1494 = vpow.pop %v1493
    %v1495 = vadd.f32 %v1494, 1.0
    %v1496 = vrcp.pop %v1495
    %1498 = vrot.lane.b32.xlu0 %v1488, 64
    %v1499 = vpop.permute.xlu0 %1498
    %v1501 = vmul.f32 %v1496, %v1499
    %1503 = vrot.lane.b32.xlu0 %v1501, 64
    %v1504 = vpop.permute.xlu0 %1503
    %v1506 = vadd.f32 %v1185, %v1504
    %v1507 = vtanh.pop %v1506
    %v1508 = vsub.f32 1.0, %v1496
    %1510 = vrot.lane.b32.xlu0 %v1507, 96
    %v1511 = vpop.permute.xlu0 %1510
    %v1513 = vmul.f32 %v1508, %v1511
    %v1515 = vmul.f32 %v1496, %v1416
    %v1516 = vadd.f32 %v1513, %v1515
    %1518 = vrot.lane.b32.xlu0 %v1516, 96
    %v1519 = vpop.permute.xlu0 %1518
    %s1521 = scalar_lea.vmem [#allocation3], 8
    %1522 = vst.msk [vmem:[%s1521] sm:$0xf] %vm340, %v1519
    %v1523 = vsel %vm237, %v1519, 0
    %1525 = vmatprep.subr.mxu0 0.0
    %1526 = vmatpush1.msra.mxu0 0.0
    %1527 = vmatprep.subr.mxu0 0.0
    %1528 = vmatpush1.msra.mxu0 0.0
    %1529 = vmatprep.subr.mxu0 0.0
    %1530 = vmatpush1.msra.mxu0 0.0
    %1531 = vmatprep.subr.mxu0 0.0
    %1532 = vmatpush1.msra.mxu0 0.0
    %1533 = vmatprep.subr.mxu0 0.0
    %1534 = vmatpush1.msra.mxu0 0.0
    %1535 = vmatprep.subr.mxu0 0.0
    %1536 = vmatpush1.msra.mxu0 0.0
    %1537 = vmatprep.subr.mxu0 0.0
    %1538 = vmatpush1.msra.mxu0 0.0
    %1539 = vmatprep.subr.mxu0 0.0
    %1540 = vmatpush1.msra.mxu0 0.0
    %1541 = vmatprep.subr.mxu0 0.0
    %1542 = vmatpush1.msra.mxu0 0.0
    %1543 = vmatprep.subr.mxu0 0.0
    %1544 = vmatpush1.msra.mxu0 0.0
    %1545 = vmatprep.subr.mxu0 0.0
    %1546 = vmatpush1.msra.mxu0 0.0
    %1547 = vmatprep.subr.mxu0 0.0
    %1548 = vmatpush1.msra.mxu0 0.0
    %1549 = vmatprep.subr.mxu0 0.0
    %1550 = vmatpush1.msra.mxu0 %v1201
    %1551 = vmatprep.subr.mxu0 0.0
    %1552 = vmatpush1.msra.mxu0 %v1200
    %1553 = vmatprep.subr.mxu0 0.0
    %1554 = vmatpush1.msra.mxu0 %v1199
    %1555 = vmatprep.subr.mxu0 0.0
    %1556 = vmatpush1.msra.mxu0 %v1198
    %1557 = vmatprep.subr.mxu0 0.0
    %1558 = vmatpush2.msra.mxu0 0.0
    %1559 = vmatprep.subr.mxu0 0.0
    %1560 = vmatpush2.msra.mxu0 0.0
    %1561 = vmatprep.subr.mxu0 0.0
    %1562 = vmatpush2.msra.mxu0 0.0
    %1563 = vmatprep.subr.mxu0 0.0
    %1564 = vmatpush2.msra.mxu0 0.0
    %1565 = vmatprep.subr.mxu0 0.0
    %1566 = vmatpush2.msra.mxu0 0.0
    %1567 = vmatprep.subr.mxu0 0.0
    %1568 = vmatpush2.msra.mxu0 0.0
    %1569 = vmatprep.subr.mxu0 0.0
    %1570 = vmatpush2.msra.mxu0 0.0
    %1571 = vmatprep.subr.mxu0 0.0
    %1572 = vmatpush2.msra.mxu0 0.0
    %1573 = vmatprep.subr.mxu0 0.0
    %1574 = vmatpush2.msra.mxu0 0.0
    %1575 = vmatprep.subr.mxu0 0.0
    %1576 = vmatpush2.msra.mxu0 0.0
    %1577 = vmatprep.subr.mxu0 0.0
    %1578 = vmatpush2.msra.mxu0 0.0
    %1579 = vmatprep.subr.mxu0 0.0
    %1580 = vmatpush2.msra.mxu0 0.0
    %1581 = vmatprep.subr.mxu0 0.0
    %1582 = vmatpush2.msra.mxu0 0.0
    %1583 = vmatprep.subr.mxu0 0.0
    %1584 = vmatpush2.msra.mxu0 0.0
    %1585 = vmatprep.subr.mxu0 0.0
    %1586 = vmatpush2.msra.mxu0 0.0
    %1587 = vmatprep.subr.mxu0 0.0
    %1588 = vmatpush2.msra.mxu0 0.0
    %1589 = vmatprep.mubr.f32.mxu0 0.0
    %1590 = vmatmul.mubr.f32.gmra.mxu0 %v1523
    %v1591 = vpop.f32.mrf.mxu0
    %v1592 = vadd.f32 %v1207, %v1591
    %v1593 = vpop.f32.mrf.mxu0
    %1594 = vdwg.mxu0
    %v1596 = vrot.slane %v1592, 4
    %v1598 = vadd.f32 %v1185, %v1596
    %v1599 = vsub.f32 0.0, %v1598
    %v1600 = vmul.f32 %v1599, 1.442695
    %v1601 = vpow.pop %v1600
    %v1602 = vadd.f32 %v1601, 1.0
    %v1603 = vrcp.pop %v1602
    %1604 = vrot.lane.b32.xlu0 %v1596, 64
    %v1605 = vpop.permute.xlu0 %1604
    %v1607 = vmul.f32 %v1603, %v1605
    %1609 = vrot.lane.b32.xlu0 %v1607, 64
    %v1610 = vpop.permute.xlu0 %1609
    %v1612 = vadd.f32 %v1185, %v1610
    %v1613 = vtanh.pop %v1612
    %v1614 = vsub.f32 1.0, %v1603
    %1616 = vrot.lane.b32.xlu0 %v1613, 96
    %v1617 = vpop.permute.xlu0 %1616
    %v1619 = vmul.f32 %v1614, %v1617
    %v1620 = vrot.slane %v1516, 4
    %v1622 = vmul.f32 %v1603, %v1620
    %v1623 = vadd.f32 %v1619, %v1622
    %1625 = vrot.lane.b32.xlu0 %v1623, 96
    %v1626 = vpop.permute.xlu0 %1625
    %s1628 = scalar_lea.vmem [#allocation3], 12
    %1629 = vst.msk [vmem:[%s1628 - $0x4] sm:$0xf0] %vm447, %v1626
    %v1630 = vrot.slane %v1623, 4
    %1631 = vrot.lane.b32.xlu0 %v1630, 96
    %v1632 = vpop.permute.xlu0 %1631
    %v1633 = vsel %vm237, %v1632, 0
    %1635 = vmatprep.subr.mxu0 0.0
    %1636 = vmatpush1.msra.mxu0 0.0
    %1637 = vmatprep.subr.mxu0 0.0
    %1638 = vmatpush1.msra.mxu0 0.0
    %1639 = vmatprep.subr.mxu0 0.0
    %1640 = vmatpush1.msra.mxu0 0.0
    %1641 = vmatprep.subr.mxu0 0.0
    %1642 = vmatpush1.msra.mxu0 0.0
    %1643 = vmatprep.subr.mxu0 0.0
    %1644 = vmatpush1.msra.mxu0 0.0
    %1645 = vmatprep.subr.mxu0 0.0
    %1646 = vmatpush1.msra.mxu0 0.0
    %1647 = vmatprep.subr.mxu0 0.0
    %1648 = vmatpush1.msra.mxu0 0.0
    %1649 = vmatprep.subr.mxu0 0.0
    %1650 = vmatpush1.msra.mxu0 0.0
    %1651 = vmatprep.subr.mxu0 0.0
    %1652 = vmatpush1.msra.mxu0 0.0
    %1653 = vmatprep.subr.mxu0 0.0
    %1654 = vmatpush1.msra.mxu0 0.0
    %1655 = vmatprep.subr.mxu0 0.0
    %1656 = vmatpush1.msra.mxu0 0.0
    %1657 = vmatprep.subr.mxu0 0.0
    %1658 = vmatpush1.msra.mxu0 0.0
    %1659 = vmatprep.subr.mxu0 0.0
    %1660 = vmatpush1.msra.mxu0 %v1201
    %1661 = vmatprep.subr.mxu0 0.0
    %1662 = vmatpush1.msra.mxu0 %v1200
    %1663 = vmatprep.subr.mxu0 0.0
    %1664 = vmatpush1.msra.mxu0 %v1199
    %1665 = vmatprep.subr.mxu0 0.0
    %1666 = vmatpush1.msra.mxu0 %v1198
    %1667 = vmatprep.subr.mxu0 0.0
    %1668 = vmatpush2.msra.mxu0 0.0
    %1669 = vmatprep.subr.mxu0 0.0
    %1670 = vmatpush2.msra.mxu0 0.0
    %1671 = vmatprep.subr.mxu0 0.0
    %1672 = vmatpush2.msra.mxu0 0.0
    %1673 = vmatprep.subr.mxu0 0.0
    %1674 = vmatpush2.msra.mxu0 0.0
    %1675 = vmatprep.subr.mxu0 0.0
    %1676 = vmatpush2.msra.mxu0 0.0
    %1677 = vmatprep.subr.mxu0 0.0
    %1678 = vmatpush2.msra.mxu0 0.0
    %1679 = vmatprep.subr.mxu0 0.0
    %1680 = vmatpush2.msra.mxu0 0.0
    %1681 = vmatprep.subr.mxu0 0.0
    %1682 = vmatpush2.msra.mxu0 0.0
    %1683 = vmatprep.subr.mxu0 0.0
    %1684 = vmatpush2.msra.mxu0 0.0
    %1685 = vmatprep.subr.mxu0 0.0
    %1686 = vmatpush2.msra.mxu0 0.0
    %1687 = vmatprep.subr.mxu0 0.0
    %1688 = vmatpush2.msra.mxu0 0.0
    %1689 = vmatprep.subr.mxu0 0.0
    %1690 = vmatpush2.msra.mxu0 0.0
    %1691 = vmatprep.subr.mxu0 0.0
    %1692 = vmatpush2.msra.mxu0 0.0
    %1693 = vmatprep.subr.mxu0 0.0
    %1694 = vmatpush2.msra.mxu0 0.0
    %1695 = vmatprep.subr.mxu0 0.0
    %1696 = vmatpush2.msra.mxu0 0.0
    %1697 = vmatprep.subr.mxu0 0.0
    %1698 = vmatpush2.msra.mxu0 0.0
    %1699 = vmatprep.mubr.f32.mxu0 0.0
    %1700 = vmatmul.mubr.f32.gmra.mxu0 %v1633
    %v1701 = vpop.f32.mrf.mxu0
    %v1702 = vadd.f32 %v1207, %v1701
    %v1703 = vpop.f32.mrf.mxu0
    %1704 = vdwg.mxu0
    %v1705 = vadd.f32 %v1190, %v1702
    %v1706 = vsub.f32 0.0, %v1705
    %v1707 = vmul.f32 %v1706, 1.442695
    %v1708 = vpow.pop %v1707
    %v1709 = vadd.f32 %v1708, 1.0
    %v1710 = vrcp.pop %v1709
    %1712 = vrot.lane.b32.xlu0 %v1702, 64
    %v1713 = vpop.permute.xlu0 %1712
    %v1715 = vmul.f32 %v1710, %v1713
    %1717 = vrot.lane.b32.xlu0 %v1715, 64
    %v1718 = vpop.permute.xlu0 %1717
    %v1720 = vadd.f32 %v1190, %v1718
    %v1721 = vtanh.pop %v1720
    %v1722 = vsub.f32 1.0, %v1710
    %1724 = vrot.lane.b32.xlu0 %v1721, 96
    %v1725 = vpop.permute.xlu0 %1724
    %v1727 = vmul.f32 %v1722, %v1725
    %v1729 = vmul.f32 %v1710, %v1630
    %v1730 = vadd.f32 %v1727, %v1729
    %1732 = vrot.lane.b32.xlu0 %v1730, 96
    %v1733 = vpop.permute.xlu0 %1732
    %s1735 = scalar_lea.vmem [#allocation3], 16
    %1736 = vst.msk [vmem:[%s1735] sm:$0xf] %vm340, %v1733
    %v1737 = vsel %vm237, %v1733, 0
    %1739 = vmatprep.subr.mxu0 0.0
    %1740 = vmatpush1.msra.mxu0 0.0
    %1741 = vmatprep.subr.mxu0 0.0
    %1742 = vmatpush1.msra.mxu0 0.0
    %1743 = vmatprep.subr.mxu0 0.0
    %1744 = vmatpush1.msra.mxu0 0.0
    %1745 = vmatprep.subr.mxu0 0.0
    %1746 = vmatpush1.msra.mxu0 0.0
    %1747 = vmatprep.subr.mxu0 0.0
    %1748 = vmatpush1.msra.mxu0 0.0
    %1749 = vmatprep.subr.mxu0 0.0
    %1750 = vmatpush1.msra.mxu0 0.0
    %1751 = vmatprep.subr.mxu0 0.0
    %1752 = vmatpush1.msra.mxu0 0.0
    %1753 = vmatprep.subr.mxu0 0.0
    %1754 = vmatpush1.msra.mxu0 0.0
    %1755 = vmatprep.subr.mxu0 0.0
    %1756 = vmatpush1.msra.mxu0 0.0
    %1757 = vmatprep.subr.mxu0 0.0
    %1758 = vmatpush1.msra.mxu0 0.0
    %1759 = vmatprep.subr.mxu0 0.0
    %1760 = vmatpush1.msra.mxu0 0.0
    %1761 = vmatprep.subr.mxu0 0.0
    %1762 = vmatpush1.msra.mxu0 0.0
    %1763 = vmatprep.subr.mxu0 0.0
    %1764 = vmatpush1.msra.mxu0 %v1201
    %1765 = vmatprep.subr.mxu0 0.0
    %1766 = vmatpush1.msra.mxu0 %v1200
    %1767 = vmatprep.subr.mxu0 0.0
    %1768 = vmatpush1.msra.mxu0 %v1199
    %1769 = vmatprep.subr.mxu0 0.0
    %1770 = vmatpush1.msra.mxu0 %v1198
    %1771 = vmatprep.subr.mxu0 0.0
    %1772 = vmatpush2.msra.mxu0 0.0
    %1773 = vmatprep.subr.mxu0 0.0
    %1774 = vmatpush2.msra.mxu0 0.0
    %1775 = vmatprep.subr.mxu0 0.0
    %1776 = vmatpush2.msra.mxu0 0.0
    %1777 = vmatprep.subr.mxu0 0.0
    %1778 = vmatpush2.msra.mxu0 0.0
    %1779 = vmatprep.subr.mxu0 0.0
    %1780 = vmatpush2.msra.mxu0 0.0
    %1781 = vmatprep.subr.mxu0 0.0
    %1782 = vmatpush2.msra.mxu0 0.0
    %1783 = vmatprep.subr.mxu0 0.0
    %1784 = vmatpush2.msra.mxu0 0.0
    %1785 = vmatprep.subr.mxu0 0.0
    %1786 = vmatpush2.msra.mxu0 0.0
    %1787 = vmatprep.subr.mxu0 0.0
    %1788 = vmatpush2.msra.mxu0 0.0
    %1789 = vmatprep.subr.mxu0 0.0
    %1790 = vmatpush2.msra.mxu0 0.0
    %1791 = vmatprep.subr.mxu0 0.0
    %1792 = vmatpush2.msra.mxu0 0.0
    %1793 = vmatprep.subr.mxu0 0.0
    %1794 = vmatpush2.msra.mxu0 0.0
    %1795 = vmatprep.subr.mxu0 0.0
    %1796 = vmatpush2.msra.mxu0 0.0
    %1797 = vmatprep.subr.mxu0 0.0
    %1798 = vmatpush2.msra.mxu0 0.0
    %1799 = vmatprep.subr.mxu0 0.0
    %1800 = vmatpush2.msra.mxu0 0.0
    %1801 = vmatprep.subr.mxu0 0.0
    %1802 = vmatpush2.msra.mxu0 0.0
    %1803 = vmatprep.mubr.f32.mxu0 0.0
    %1804 = vmatmul.mubr.f32.gmra.mxu0 %v1737
    %v1805 = vpop.f32.mrf.mxu0
    %v1806 = vadd.f32 %v1207, %v1805
    %v1807 = vpop.f32.mrf.mxu0
    %1808 = vdwg.mxu0
    %v1810 = vrot.slane %v1806, 4
    %v1812 = vadd.f32 %v1190, %v1810
    %v1813 = vsub.f32 0.0, %v1812
    %v1814 = vmul.f32 %v1813, 1.442695
    %v1815 = vpow.pop %v1814
    %v1816 = vadd.f32 %v1815, 1.0
    %v1817 = vrcp.pop %v1816
    %1818 = vrot.lane.b32.xlu0 %v1810, 64
    %v1819 = vpop.permute.xlu0 %1818
    %v1821 = vmul.f32 %v1817, %v1819
    %1823 = vrot.lane.b32.xlu0 %v1821, 64
    %v1824 = vpop.permute.xlu0 %1823
    %v1826 = vadd.f32 %v1190, %v1824
    %v1827 = vtanh.pop %v1826
    %v1828 = vsub.f32 1.0, %v1817
    %1830 = vrot.lane.b32.xlu0 %v1827, 96
    %v1831 = vpop.permute.xlu0 %1830
    %v1833 = vmul.f32 %v1828, %v1831
    %v1834 = vrot.slane %v1730, 4
    %v1836 = vmul.f32 %v1817, %v1834
    %v1837 = vadd.f32 %v1833, %v1836
    %1839 = vrot.lane.b32.xlu0 %v1837, 96
    %v1840 = vpop.permute.xlu0 %1839
    %s1842 = scalar_lea.vmem [#allocation3], 20
    %1843 = vst.msk [vmem:[%s1842 - $0x4] sm:$0xf0] %vm447, %v1840
    %v1844 = vrot.slane %v1837, 4
    %1845 = vrot.lane.b32.xlu0 %v1844, 96
    %v1846 = vpop.permute.xlu0 %1845
    %v1847 = vsel %vm237, %v1846, 0
    %1849 = vmatprep.subr.mxu0 0.0
    %1850 = vmatpush1.msra.mxu0 0.0
    %1851 = vmatprep.subr.mxu0 0.0
    %1852 = vmatpush1.msra.mxu0 0.0
    %1853 = vmatprep.subr.mxu0 0.0
    %1854 = vmatpush1.msra.mxu0 0.0
    %1855 = vmatprep.subr.mxu0 0.0
    %1856 = vmatpush1.msra.mxu0 0.0
    %1857 = vmatprep.subr.mxu0 0.0
    %1858 = vmatpush1.msra.mxu0 0.0
    %1859 = vmatprep.subr.mxu0 0.0
    %1860 = vmatpush1.msra.mxu0 0.0
    %1861 = vmatprep.subr.mxu0 0.0
    %1862 = vmatpush1.msra.mxu0 0.0
    %1863 = vmatprep.subr.mxu0 0.0
    %1864 = vmatpush1.msra.mxu0 0.0
    %1865 = vmatprep.subr.mxu0 0.0
    %1866 = vmatpush1.msra.mxu0 0.0
    %1867 = vmatprep.subr.mxu0 0.0
    %1868 = vmatpush1.msra.mxu0 0.0
    %1869 = vmatprep.subr.mxu0 0.0
    %1870 = vmatpush1.msra.mxu0 0.0
    %1871 = vmatprep.subr.mxu0 0.0
    %1872 = vmatpush1.msra.mxu0 0.0
    %1873 = vmatprep.subr.mxu0 0.0
    %1874 = vmatpush1.msra.mxu0 %v1201
    %1875 = vmatprep.subr.mxu0 0.0
    %1876 = vmatpush1.msra.mxu0 %v1200
    %1877 = vmatprep.subr.mxu0 0.0
    %1878 = vmatpush1.msra.mxu0 %v1199
    %1879 = vmatprep.subr.mxu0 0.0
    %1880 = vmatpush1.msra.mxu0 %v1198
    %1881 = vmatprep.subr.mxu0 0.0
    %1882 = vmatpush2.msra.mxu0 0.0
    %1883 = vmatprep.subr.mxu0 0.0
    %1884 = vmatpush2.msra.mxu0 0.0
    %1885 = vmatprep.subr.mxu0 0.0
    %1886 = vmatpush2.msra.mxu0 0.0
    %1887 = vmatprep.subr.mxu0 0.0
    %1888 = vmatpush2.msra.mxu0 0.0
    %1889 = vmatprep.subr.mxu0 0.0
    %1890 = vmatpush2.msra.mxu0 0.0
    %1891 = vmatprep.subr.mxu0 0.0
    %1892 = vmatpush2.msra.mxu0 0.0
    %1893 = vmatprep.subr.mxu0 0.0
    %1894 = vmatpush2.msra.mxu0 0.0
    %1895 = vmatprep.subr.mxu0 0.0
    %1896 = vmatpush2.msra.mxu0 0.0
    %1897 = vmatprep.subr.mxu0 0.0
    %1898 = vmatpush2.msra.mxu0 0.0
    %1899 = vmatprep.subr.mxu0 0.0
    %1900 = vmatpush2.msra.mxu0 0.0
    %1901 = vmatprep.subr.mxu0 0.0
    %1902 = vmatpush2.msra.mxu0 0.0
    %1903 = vmatprep.subr.mxu0 0.0
    %1904 = vmatpush2.msra.mxu0 0.0
    %1905 = vmatprep.subr.mxu0 0.0
    %1906 = vmatpush2.msra.mxu0 0.0
    %1907 = vmatprep.subr.mxu0 0.0
    %1908 = vmatpush2.msra.mxu0 0.0
    %1909 = vmatprep.subr.mxu0 0.0
    %1910 = vmatpush2.msra.mxu0 0.0
    %1911 = vmatprep.subr.mxu0 0.0
    %1912 = vmatpush2.msra.mxu0 0.0
    %1913 = vmatprep.mubr.f32.mxu0 0.0
    %1914 = vmatmul.mubr.f32.gmra.mxu0 %v1847
    %v1915 = vpop.f32.mrf.mxu0
    %v1916 = vadd.f32 %v1207, %v1915
    %v1917 = vpop.f32.mrf.mxu0
    %1918 = vdwg.mxu0
    %v1919 = vadd.f32 %v1195, %v1916
    %v1920 = vsub.f32 0.0, %v1919
    %v1921 = vmul.f32 %v1920, 1.442695
    %v1922 = vpow.pop %v1921
    %v1923 = vadd.f32 %v1922, 1.0
    %v1924 = vrcp.pop %v1923
    %1926 = vrot.lane.b32.xlu0 %v1916, 64
    %v1927 = vpop.permute.xlu0 %1926
    %v1929 = vmul.f32 %v1924, %v1927
    %1931 = vrot.lane.b32.xlu0 %v1929, 64
    %v1932 = vpop.permute.xlu0 %1931
    %v1934 = vadd.f32 %v1195, %v1932
    %v1935 = vtanh.pop %v1934
    %v1936 = vsub.f32 1.0, %v1924
    %1938 = vrot.lane.b32.xlu0 %v1935, 96
    %v1939 = vpop.permute.xlu0 %1938
    %v1941 = vmul.f32 %v1936, %v1939
    %v1943 = vmul.f32 %v1924, %v1844
    %v1944 = vadd.f32 %v1941, %v1943
    %1946 = vrot.lane.b32.xlu0 %v1944, 96
    %v1947 = vpop.permute.xlu0 %1946
    %s1949 = scalar_lea.vmem [#allocation3], 24
    %1950 = vst.msk [vmem:[%s1949] sm:$0xf] %vm340, %v1947
    %v1951 = vsel %vm237, %v1947, 0
    %1953 = vmatprep.subr.mxu0 0.0
    %1954 = vmatpush1.msra.mxu0 0.0
    %1955 = vmatprep.subr.mxu0 0.0
    %1956 = vmatpush1.msra.mxu0 0.0
    %1957 = vmatprep.subr.mxu0 0.0
    %1958 = vmatpush1.msra.mxu0 0.0
    %1959 = vmatprep.subr.mxu0 0.0
    %1960 = vmatpush1.msra.mxu0 0.0
    %1961 = vmatprep.subr.mxu0 0.0
    %1962 = vmatpush1.msra.mxu0 0.0
    %1963 = vmatprep.subr.mxu0 0.0
    %1964 = vmatpush1.msra.mxu0 0.0
    %1965 = vmatprep.subr.mxu0 0.0
    %1966 = vmatpush1.msra.mxu0 0.0
    %1967 = vmatprep.subr.mxu0 0.0
    %1968 = vmatpush1.msra.mxu0 0.0
    %1969 = vmatprep.subr.mxu0 0.0
    %1970 = vmatpush1.msra.mxu0 0.0
    %1971 = vmatprep.subr.mxu0 0.0
    %1972 = vmatpush1.msra.mxu0 0.0
    %1973 = vmatprep.subr.mxu0 0.0
    %1974 = vmatpush1.msra.mxu0 0.0
    %1975 = vmatprep.subr.mxu0 0.0
    %1976 = vmatpush1.msra.mxu0 0.0
    %1977 = vmatprep.subr.mxu0 0.0
    %1978 = vmatpush1.msra.mxu0 %v1201
    %1979 = vmatprep.subr.mxu0 0.0
    %1980 = vmatpush1.msra.mxu0 %v1200
    %1981 = vmatprep.subr.mxu0 0.0
    %1982 = vmatpush1.msra.mxu0 %v1199
    %1983 = vmatprep.subr.mxu0 0.0
    %1984 = vmatpush1.msra.mxu0 %v1198
    %1985 = vmatprep.subr.mxu0 0.0
    %1986 = vmatpush2.msra.mxu0 0.0
    %1987 = vmatprep.subr.mxu0 0.0
    %1988 = vmatpush2.msra.mxu0 0.0
    %1989 = vmatprep.subr.mxu0 0.0
    %1990 = vmatpush2.msra.mxu0 0.0
    %1991 = vmatprep.subr.mxu0 0.0
    %1992 = vmatpush2.msra.mxu0 0.0
    %1993 = vmatprep.subr.mxu0 0.0
    %1994 = vmatpush2.msra.mxu0 0.0
    %1995 = vmatprep.subr.mxu0 0.0
    %1996 = vmatpush2.msra.mxu0 0.0
    %1997 = vmatprep.subr.mxu0 0.0
    %1998 = vmatpush2.msra.mxu0 0.0
    %1999 = vmatprep.subr.mxu0 0.0
    %2000 = vmatpush2.msra.mxu0 0.0
    %2001 = vmatprep.subr.mxu0 0.0
    %2002 = vmatpush2.msra.mxu0 0.0
    %2003 = vmatprep.subr.mxu0 0.0
    %2004 = vmatpush2.msra.mxu0 0.0
    %2005 = vmatprep.subr.mxu0 0.0
    %2006 = vmatpush2.msra.mxu0 0.0
    %2007 = vmatprep.subr.mxu0 0.0
    %2008 = vmatpush2.msra.mxu0 0.0
    %2009 = vmatprep.subr.mxu0 0.0
    %2010 = vmatpush2.msra.mxu0 0.0
    %2011 = vmatprep.subr.mxu0 0.0
    %2012 = vmatpush2.msra.mxu0 0.0
    %2013 = vmatprep.subr.mxu0 0.0
    %2014 = vmatpush2.msra.mxu0 0.0
    %2015 = vmatprep.subr.mxu0 0.0
    %2016 = vmatpush2.msra.mxu0 0.0
    %2017 = vmatprep.mubr.f32.mxu0 0.0
    %2018 = vmatmul.mubr.f32.gmra.mxu0 %v1951
    %v2019 = vpop.f32.mrf.mxu0
    %v2020 = vadd.f32 %v1207, %v2019
    %v2021 = vpop.f32.mrf.mxu0
    %2022 = vdwg.mxu0
    %v2024 = vrot.slane %v2020, 4
    %v2026 = vadd.f32 %v1195, %v2024
    %v2027 = vsub.f32 0.0, %v2026
    %v2028 = vmul.f32 %v2027, 1.442695
    %v2029 = vpow.pop %v2028
    %v2030 = vadd.f32 %v2029, 1.0
    %v2031 = vrcp.pop %v2030
    %2032 = vrot.lane.b32.xlu0 %v2024, 64
    %v2033 = vpop.permute.xlu0 %2032
    %v2035 = vmul.f32 %v2031, %v2033
    %2037 = vrot.lane.b32.xlu0 %v2035, 64
    %v2038 = vpop.permute.xlu0 %2037
    %v2040 = vadd.f32 %v1195, %v2038
    %v2041 = vtanh.pop %v2040
    %v2042 = vsub.f32 1.0, %v2031
    %2044 = vrot.lane.b32.xlu0 %v2041, 96
    %v2045 = vpop.permute.xlu0 %2044
    %v2047 = vmul.f32 %v2042, %v2045
    %v2048 = vrot.slane %v1944, 4
    %v2050 = vmul.f32 %v2031, %v2048
    %v2051 = vadd.f32 %v2047, %v2050
    %2053 = vrot.lane.b32.xlu0 %v2051, 96
    %v2054 = vpop.permute.xlu0 %2053
    %s2056 = scalar_lea.vmem [#allocation3], 28
    %2057 = vst.msk [vmem:[%s2056 - $0x4] sm:$0xf0] %vm447, %v2054
    %s2058 = scalar_lea.vmem [#allocation14], 4
    %2059 = vst.msk [vmem:[%s2058 - $0x4] sm:$0xf0] %vm447, %v2054
    %v2060 = vld [vmem:[#allocation3] sm:$0xf]
    %v2061 = vld [vmem:[#allocation3 + $0x4] sm:$0xf]
    %v2062 = vld [vmem:[#allocation3 + $0x8] sm:$0xf]
    %v2063 = vld [vmem:[#allocation3 + $0xc] sm:$0xf]
    %v2064 = vld [vmem:[#allocation3 + $0x10] sm:$0xf]
    %v2065 = vld [vmem:[#allocation3 + $0x14] sm:$0xf]
    %v2066 = vld [vmem:[#allocation3 + $0x18] sm:$0xf]
    %v2067 = vld [vmem:[#allocation3 + $0x1c] sm:$0xf]
    %v2068 = vld [vmem:[%s9] sm:$0xff]
    %v2069 = vld [vmem:[%s9 + $0x8] sm:$0xff]
    %v2070 = vld [vmem:[%s9 + $0x10] sm:$0xff]
    %v2071 = vld [vmem:[%s9 + $0x18] sm:$0xff]
    %s2072 = scalar_lea.vmem %s9, 32
    %v2073 = vld [vmem:[%s2072] sm:$0xff]
    %v2074 = vld [vmem:[%s2072 + $0x8] sm:$0xff]
    %v2075 = vld [vmem:[%s2072 + $0x10] sm:$0xff]
    %v2076 = vld [vmem:[%s2072 + $0x18] sm:$0xff]
    %v2085 = vrot.slane %v2060, 1
    %vm2086 = vcmask 1041409
    %v2087 = vsel %vm2086, %v2061, %v2085
    %v2088 = vrot.slane %v2062, 7
    %vm2089 = vcmask 1042434
    %v2090 = vsel %vm2089, %v2088, %v2087
    %v2091 = vrot.slane %v2063, 6
    %vm2092 = vcmask 1043459
    %v2093 = vsel %vm2092, %v2091, %v2090
    %v2094 = vrot.slane %v2064, 5
    %vm2095 = vcmask 1044484
    %v2096 = vsel %vm2095, %v2094, %v2093
    %v2097 = vrot.slane %v2065, 4
    %vm2098 = vcmask 1045509
    %v2099 = vsel %vm2098, %v2097, %v2096
    %v2100 = vrot.slane %v2066, 3
    %vm2101 = vcmask 1046534
    %v2102 = vsel %vm2101, %v2100, %v2099
    %v2103 = vrot.slane %v2067, 2
    %vm2104 = vcmask 1047559
    %v2105 = vsel %vm2104, %v2103, %v2102
    %v2106 = vsel %vm237, %v2105, 0
    %2108 = vmatprep.subr.mxu0 0.0
    %2109 = vmatpush1.msra.mxu0 0.0
    %2110 = vmatprep.subr.mxu0 0.0
    %2111 = vmatpush1.msra.mxu0 0.0
    %2112 = vmatprep.subr.mxu0 0.0
    %2113 = vmatpush1.msra.mxu0 0.0
    %2114 = vmatprep.subr.mxu0 0.0
    %2115 = vmatpush1.msra.mxu0 0.0
    %2116 = vmatprep.subr.mxu0 0.0
    %2117 = vmatpush1.msra.mxu0 0.0
    %2118 = vmatprep.subr.mxu0 0.0
    %2119 = vmatpush1.msra.mxu0 0.0
    %2120 = vmatprep.subr.mxu0 0.0
    %2121 = vmatpush1.msra.mxu0 0.0
    %2122 = vmatprep.subr.mxu0 0.0
    %2123 = vmatpush1.msra.mxu0 0.0
    %2124 = vmatprep.subr.mxu0 0.0
    %2125 = vmatpush1.msra.mxu0 0.0
    %2126 = vmatprep.subr.mxu0 0.0
    %2127 = vmatpush1.msra.mxu0 0.0
    %2128 = vmatprep.subr.mxu0 0.0
    %2129 = vmatpush1.msra.mxu0 0.0
    %2130 = vmatprep.subr.mxu0 0.0
    %2131 = vmatpush1.msra.mxu0 0.0
    %2132 = vmatprep.subr.mxu0 0.0
    %2133 = vmatpush1.msra.mxu0 %v2076
    %2134 = vmatprep.subr.mxu0 0.0
    %2135 = vmatpush1.msra.mxu0 %v2075
    %2136 = vmatprep.subr.mxu0 0.0
    %2137 = vmatpush1.msra.mxu0 %v2074
    %2138 = vmatprep.subr.mxu0 0.0
    %2139 = vmatpush1.msra.mxu0 %v2073
    %2140 = vmatprep.subr.mxu0 0.0
    %2141 = vmatpush2.msra.mxu0 0.0
    %2142 = vmatprep.subr.mxu0 0.0
    %2143 = vmatpush2.msra.mxu0 0.0
    %2144 = vmatprep.subr.mxu0 0.0
    %2145 = vmatpush2.msra.mxu0 0.0
    %2146 = vmatprep.subr.mxu0 0.0
    %2147 = vmatpush2.msra.mxu0 0.0
    %2148 = vmatprep.subr.mxu0 0.0
    %2149 = vmatpush2.msra.mxu0 0.0
    %2150 = vmatprep.subr.mxu0 0.0
    %2151 = vmatpush2.msra.mxu0 0.0
    %2152 = vmatprep.subr.mxu0 0.0
    %2153 = vmatpush2.msra.mxu0 0.0
    %2154 = vmatprep.subr.mxu0 0.0
    %2155 = vmatpush2.msra.mxu0 0.0
    %2156 = vmatprep.subr.mxu0 0.0
    %2157 = vmatpush2.msra.mxu0 0.0
    %2158 = vmatprep.subr.mxu0 0.0
    %2159 = vmatpush2.msra.mxu0 0.0
    %2160 = vmatprep.subr.mxu0 0.0
    %2161 = vmatpush2.msra.mxu0 0.0
    %2162 = vmatprep.subr.mxu0 0.0
    %2163 = vmatpush2.msra.mxu0 0.0
    %2164 = vmatprep.subr.mxu0 0.0
    %2165 = vmatpush2.msra.mxu0 0.0
    %2166 = vmatprep.subr.mxu0 0.0
    %2167 = vmatpush2.msra.mxu0 0.0
    %2168 = vmatprep.subr.mxu0 0.0
    %2169 = vmatpush2.msra.mxu0 0.0
    %2170 = vmatprep.subr.mxu0 0.0
    %2171 = vmatpush2.msra.mxu0 0.0
    %2172 = vmatprep.mubr.f32.mxu0 0.0
    %2173 = vmatmul.mubr.f32.gmra.mxu0 %v2106
    %v2174 = vpop.f32.mrf.mxu0
    %v2175 = vadd.f32 0.0, %v2174
    %v2176 = vpop.f32.mrf.mxu0
    %2177 = vdwg.mxu0
    %v2178 = vrot.slane %v2061, 7
    %v2179 = vsel %vm2086, %v2178, %v2060
    %v2180 = vrot.slane %v2062, 6
    %v2181 = vsel %vm2089, %v2180, %v2179
    %v2182 = vrot.slane %v2063, 5
    %v2183 = vsel %vm2092, %v2182, %v2181
    %v2184 = vrot.slane %v2064, 4
    %v2185 = vsel %vm2095, %v2184, %v2183
    %v2186 = vrot.slane %v2065, 3
    %v2187 = vsel %vm2098, %v2186, %v2185
    %v2188 = vrot.slane %v2066, 2
    %v2189 = vsel %vm2101, %v2188, %v2187
    %v2190 = vrot.slane %v2067, 1
    %v2191 = vsel %vm2104, %v2190, %v2189
    %v2192 = vsel %vm237, %v2191, 0
    %2194 = vmatprep.subr.mxu0 0.0
    %2195 = vmatpush1.msra.mxu0 0.0
    %2196 = vmatprep.subr.mxu0 0.0
    %2197 = vmatpush1.msra.mxu0 0.0
    %2198 = vmatprep.subr.mxu0 0.0
    %2199 = vmatpush1.msra.mxu0 0.0
    %2200 = vmatprep.subr.mxu0 0.0
    %2201 = vmatpush1.msra.mxu0 0.0
    %2202 = vmatprep.subr.mxu0 0.0
    %2203 = vmatpush1.msra.mxu0 0.0
    %2204 = vmatprep.subr.mxu0 0.0
    %2205 = vmatpush1.msra.mxu0 0.0
    %2206 = vmatprep.subr.mxu0 0.0
    %2207 = vmatpush1.msra.mxu0 0.0
    %2208 = vmatprep.subr.mxu0 0.0
    %2209 = vmatpush1.msra.mxu0 0.0
    %2210 = vmatprep.subr.mxu0 0.0
    %2211 = vmatpush1.msra.mxu0 0.0
    %2212 = vmatprep.subr.mxu0 0.0
    %2213 = vmatpush1.msra.mxu0 0.0
    %2214 = vmatprep.subr.mxu0 0.0
    %2215 = vmatpush1.msra.mxu0 0.0
    %2216 = vmatprep.subr.mxu0 0.0
    %2217 = vmatpush1.msra.mxu0 0.0
    %2218 = vmatprep.subr.mxu0 0.0
    %2219 = vmatpush1.msra.mxu0 %v2071
    %2220 = vmatprep.subr.mxu0 0.0
    %2221 = vmatpush1.msra.mxu0 %v2070
    %2222 = vmatprep.subr.mxu0 0.0
    %2223 = vmatpush1.msra.mxu0 %v2069
    %2224 = vmatprep.subr.mxu0 0.0
    %2225 = vmatpush1.msra.mxu0 %v2068
    %2226 = vmatprep.subr.mxu0 0.0
    %2227 = vmatpush2.msra.mxu0 0.0
    %2228 = vmatprep.subr.mxu0 0.0
    %2229 = vmatpush2.msra.mxu0 0.0
    %2230 = vmatprep.subr.mxu0 0.0
    %2231 = vmatpush2.msra.mxu0 0.0
    %2232 = vmatprep.subr.mxu0 0.0
    %2233 = vmatpush2.msra.mxu0 0.0
    %2234 = vmatprep.subr.mxu0 0.0
    %2235 = vmatpush2.msra.mxu0 0.0
    %2236 = vmatprep.subr.mxu0 0.0
    %2237 = vmatpush2.msra.mxu0 0.0
    %2238 = vmatprep.subr.mxu0 0.0
    %2239 = vmatpush2.msra.mxu0 0.0
    %2240 = vmatprep.subr.mxu0 0.0
    %2241 = vmatpush2.msra.mxu0 0.0
    %2242 = vmatprep.subr.mxu0 0.0
    %2243 = vmatpush2.msra.mxu0 0.0
    %2244 = vmatprep.subr.mxu0 0.0
    %2245 = vmatpush2.msra.mxu0 0.0
    %2246 = vmatprep.subr.mxu0 0.0
    %2247 = vmatpush2.msra.mxu0 0.0
    %2248 = vmatprep.subr.mxu0 0.0
    %2249 = vmatpush2.msra.mxu0 0.0
    %2250 = vmatprep.subr.mxu0 0.0
    %2251 = vmatpush2.msra.mxu0 0.0
    %2252 = vmatprep.subr.mxu0 0.0
    %2253 = vmatpush2.msra.mxu0 0.0
    %2254 = vmatprep.subr.mxu0 0.0
    %2255 = vmatpush2.msra.mxu0 0.0
    %2256 = vmatprep.subr.mxu0 0.0
    %2257 = vmatpush2.msra.mxu0 0.0
    %2258 = vmatprep.mubr.f32.mxu0 0.0
    %2259 = vmatmul.mubr.f32.gmra.mxu0 %v2192
    %v2260 = vpop.f32.mrf.mxu0
    %v2261 = vadd.f32 %v2175, %v2260
    %v2262 = vpop.f32.mrf.mxu0
    %2263 = vdwg.mxu0
    %s2264 = scalar_lea.vmem %s9, 64
    %v2265 = vld [vmem:[%s2264] sm:$0xff]
    %v2266 = vld [vmem:[%s2264 + $0x8] sm:$0xff]
    %v2267 = vld [vmem:[%s2264 + $0x10] sm:$0xff]
    %v2268 = vld [vmem:[%s2264 + $0x18] sm:$0xff]
    %v2269 = vrot.slane %v2060, 2
    %v2270 = vrot.slane %v2061, 1
    %v2271 = vsel %vm2086, %v2270, %v2269
    %v2272 = vsel %vm2089, %v2062, %v2271
    %v2273 = vrot.slane %v2063, 7
    %v2274 = vsel %vm2092, %v2273, %v2272
    %v2275 = vrot.slane %v2064, 6
    %v2276 = vsel %vm2095, %v2275, %v2274
    %v2277 = vrot.slane %v2065, 5
    %v2278 = vsel %vm2098, %v2277, %v2276
    %v2279 = vrot.slane %v2066, 4
    %v2280 = vsel %vm2101, %v2279, %v2278
    %v2281 = vrot.slane %v2067, 3
    %v2282 = vsel %vm2104, %v2281, %v2280
    %v2283 = vsel %vm237, %v2282, 0
    %2285 = vmatprep.subr.mxu0 0.0
    %2286 = vmatpush1.msra.mxu0 0.0
    %2287 = vmatprep.subr.mxu0 0.0
    %2288 = vmatpush1.msra.mxu0 0.0
    %2289 = vmatprep.subr.mxu0 0.0
    %2290 = vmatpush1.msra.mxu0 0.0
    %2291 = vmatprep.subr.mxu0 0.0
    %2292 = vmatpush1.msra.mxu0 0.0
    %2293 = vmatprep.subr.mxu0 0.0
    %2294 = vmatpush1.msra.mxu0 0.0
    %2295 = vmatprep.subr.mxu0 0.0
    %2296 = vmatpush1.msra.mxu0 0.0
    %2297 = vmatprep.subr.mxu0 0.0
    %2298 = vmatpush1.msra.mxu0 0.0
    %2299 = vmatprep.subr.mxu0 0.0
    %2300 = vmatpush1.msra.mxu0 0.0
    %2301 = vmatprep.subr.mxu0 0.0
    %2302 = vmatpush1.msra.mxu0 0.0
    %2303 = vmatprep.subr.mxu0 0.0
    %2304 = vmatpush1.msra.mxu0 0.0
    %2305 = vmatprep.subr.mxu0 0.0
    %2306 = vmatpush1.msra.mxu0 0.0
    %2307 = vmatprep.subr.mxu0 0.0
    %2308 = vmatpush1.msra.mxu0 0.0
    %2309 = vmatprep.subr.mxu0 0.0
    %2310 = vmatpush1.msra.mxu0 %v2268
    %2311 = vmatprep.subr.mxu0 0.0
    %2312 = vmatpush1.msra.mxu0 %v2267
    %2313 = vmatprep.subr.mxu0 0.0
    %2314 = vmatpush1.msra.mxu0 %v2266
    %2315 = vmatprep.subr.mxu0 0.0
    %2316 = vmatpush1.msra.mxu0 %v2265
    %2317 = vmatprep.subr.mxu0 0.0
    %2318 = vmatpush2.msra.mxu0 0.0
    %2319 = vmatprep.subr.mxu0 0.0
    %2320 = vmatpush2.msra.mxu0 0.0
    %2321 = vmatprep.subr.mxu0 0.0
    %2322 = vmatpush2.msra.mxu0 0.0
    %2323 = vmatprep.subr.mxu0 0.0
    %2324 = vmatpush2.msra.mxu0 0.0
    %2325 = vmatprep.subr.mxu0 0.0
    %2326 = vmatpush2.msra.mxu0 0.0
    %2327 = vmatprep.subr.mxu0 0.0
    %2328 = vmatpush2.msra.mxu0 0.0
    %2329 = vmatprep.subr.mxu0 0.0
    %2330 = vmatpush2.msra.mxu0 0.0
    %2331 = vmatprep.subr.mxu0 0.0
    %2332 = vmatpush2.msra.mxu0 0.0
    %2333 = vmatprep.subr.mxu0 0.0
    %2334 = vmatpush2.msra.mxu0 0.0
    %2335 = vmatprep.subr.mxu0 0.0
    %2336 = vmatpush2.msra.mxu0 0.0
    %2337 = vmatprep.subr.mxu0 0.0
    %2338 = vmatpush2.msra.mxu0 0.0
    %2339 = vmatprep.subr.mxu0 0.0
    %2340 = vmatpush2.msra.mxu0 0.0
    %2341 = vmatprep.subr.mxu0 0.0
    %2342 = vmatpush2.msra.mxu0 0.0
    %2343 = vmatprep.subr.mxu0 0.0
    %2344 = vmatpush2.msra.mxu0 0.0
    %2345 = vmatprep.subr.mxu0 0.0
    %2346 = vmatpush2.msra.mxu0 0.0
    %2347 = vmatprep.subr.mxu0 0.0
    %2348 = vmatpush2.msra.mxu0 0.0
    %2349 = vmatprep.mubr.f32.mxu0 0.0
    %2350 = vmatmul.mubr.f32.gmra.mxu0 %v2283
    %v2351 = vpop.f32.mrf.mxu0
    %v2352 = vadd.f32 0.0, %v2351
    %v2353 = vpop.f32.mrf.mxu0
    %2354 = vdwg.mxu0
    %v2355 = vadd.f32 %v2261, %v2352
    %s2356 = scalar_lea.vmem %s9, 96
    %v2357 = vld [vmem:[%s2356] sm:$0xff]
    %v2358 = vld [vmem:[%s2356 + $0x8] sm:$0xff]
    %v2359 = vld [vmem:[%s2356 + $0x10] sm:$0xff]
    %v2360 = vld [vmem:[%s2356 + $0x18] sm:$0xff]
    %v2361 = vrot.slane %v2060, 3
    %v2362 = vrot.slane %v2061, 2
    %v2363 = vsel %vm2086, %v2362, %v2361
    %v2364 = vrot.slane %v2062, 1
    %v2365 = vsel %vm2089, %v2364, %v2363
    %v2366 = vsel %vm2092, %v2063, %v2365
    %v2367 = vrot.slane %v2064, 7
    %v2368 = vsel %vm2095, %v2367, %v2366
    %v2369 = vrot.slane %v2065, 6
    %v2370 = vsel %vm2098, %v2369, %v2368
    %v2371 = vrot.slane %v2066, 5
    %v2372 = vsel %vm2101, %v2371, %v2370
    %v2373 = vrot.slane %v2067, 4
    %v2374 = vsel %vm2104, %v2373, %v2372
    %v2375 = vsel %vm237, %v2374, 0
    %2377 = vmatprep.subr.mxu0 0.0
    %2378 = vmatpush1.msra.mxu0 0.0
    %2379 = vmatprep.subr.mxu0 0.0
    %2380 = vmatpush1.msra.mxu0 0.0
    %2381 = vmatprep.subr.mxu0 0.0
    %2382 = vmatpush1.msra.mxu0 0.0
    %2383 = vmatprep.subr.mxu0 0.0
    %2384 = vmatpush1.msra.mxu0 0.0
    %2385 = vmatprep.subr.mxu0 0.0
    %2386 = vmatpush1.msra.mxu0 0.0
    %2387 = vmatprep.subr.mxu0 0.0
    %2388 = vmatpush1.msra.mxu0 0.0
    %2389 = vmatprep.subr.mxu0 0.0
    %2390 = vmatpush1.msra.mxu0 0.0
    %2391 = vmatprep.subr.mxu0 0.0
    %2392 = vmatpush1.msra.mxu0 0.0
    %2393 = vmatprep.subr.mxu0 0.0
    %2394 = vmatpush1.msra.mxu0 0.0
    %2395 = vmatprep.subr.mxu0 0.0
    %2396 = vmatpush1.msra.mxu0 0.0
    %2397 = vmatprep.subr.mxu0 0.0
    %2398 = vmatpush1.msra.mxu0 0.0
    %2399 = vmatprep.subr.mxu0 0.0
    %2400 = vmatpush1.msra.mxu0 0.0
    %2401 = vmatprep.subr.mxu0 0.0
    %2402 = vmatpush1.msra.mxu0 %v2360
    %2403 = vmatprep.subr.mxu0 0.0
    %2404 = vmatpush1.msra.mxu0 %v2359
    %2405 = vmatprep.subr.mxu0 0.0
    %2406 = vmatpush1.msra.mxu0 %v2358
    %2407 = vmatprep.subr.mxu0 0.0
    %2408 = vmatpush1.msra.mxu0 %v2357
    %2409 = vmatprep.subr.mxu0 0.0
    %2410 = vmatpush2.msra.mxu0 0.0
    %2411 = vmatprep.subr.mxu0 0.0
    %2412 = vmatpush2.msra.mxu0 0.0
    %2413 = vmatprep.subr.mxu0 0.0
    %2414 = vmatpush2.msra.mxu0 0.0
    %2415 = vmatprep.subr.mxu0 0.0
    %2416 = vmatpush2.msra.mxu0 0.0
    %2417 = vmatprep.subr.mxu0 0.0
    %2418 = vmatpush2.msra.mxu0 0.0
    %2419 = vmatprep.subr.mxu0 0.0
    %2420 = vmatpush2.msra.mxu0 0.0
    %2421 = vmatprep.subr.mxu0 0.0
    %2422 = vmatpush2.msra.mxu0 0.0
    %2423 = vmatprep.subr.mxu0 0.0
    %2424 = vmatpush2.msra.mxu0 0.0
    %2425 = vmatprep.subr.mxu0 0.0
    %2426 = vmatpush2.msra.mxu0 0.0
    %2427 = vmatprep.subr.mxu0 0.0
    %2428 = vmatpush2.msra.mxu0 0.0
    %2429 = vmatprep.subr.mxu0 0.0
    %2430 = vmatpush2.msra.mxu0 0.0
    %2431 = vmatprep.subr.mxu0 0.0
    %2432 = vmatpush2.msra.mxu0 0.0
    %2433 = vmatprep.subr.mxu0 0.0
    %2434 = vmatpush2.msra.mxu0 0.0
    %2435 = vmatprep.subr.mxu0 0.0
    %2436 = vmatpush2.msra.mxu0 0.0
    %2437 = vmatprep.subr.mxu0 0.0
    %2438 = vmatpush2.msra.mxu0 0.0
    %2439 = vmatprep.subr.mxu0 0.0
    %2440 = vmatpush2.msra.mxu0 0.0
    %2441 = vmatprep.mubr.f32.mxu0 0.0
    %2442 = vmatmul.mubr.f32.gmra.mxu0 %v2375
    %v2443 = vpop.f32.mrf.mxu0
    %v2444 = vadd.f32 0.0, %v2443
    %v2445 = vpop.f32.mrf.mxu0
    %2446 = vdwg.mxu0
    %v2447 = vadd.f32 %v2355, %v2444
    %v2448 = vld [vmem:[%s10] sm:$0x1]
    %v2450 = vlaneseq
    %v2451 = vshrl.u32 %v2450, 7
    %v2452 = vsub.s32 0, %v2451
    %v2453 = vrot.slane %v2448, %v2452
    %v2455 = vadd.f32 %v2447, %v2453
    %v2456 = vsub.f32 0.0, %v2455
    %v2457 = vmul.f32 %v2456, 1.442695
    %v2458 = vpow.pop %v2457
    %v2459 = vadd.f32 %v2458, 1.0
    %v2460 = vrcp.pop %v2459
    %v2461 = vld [vmem:[%s11] sm:$0xff]
    %v2462 = vld [vmem:[%s11 + $0x8] sm:$0xff]
    %v2463 = vld [vmem:[%s11 + $0x10] sm:$0xff]
    %v2464 = vld [vmem:[%s11 + $0x18] sm:$0xff]
    %v2465 = vld [vmem:[%s11 + $0x20] sm:$0xff]
    %v2466 = vld [vmem:[%s11 + $0x28] sm:$0xff]
    %v2467 = vld [vmem:[%s11 + $0x30] sm:$0xff]
    %v2468 = vld [vmem:[%s11 + $0x38] sm:$0xff]
    %v2469 = vld [vmem:[#allocation4] sm:$0x1]
    %v2471 = vlaneseq
    %v2472 = vshrl.u32 %v2471, 7
    %v2473 = vsub.s32 0, %v2472
    %v2474 = vrot.slane %v2469, %v2473
    %vm2476 = vcmask 523264
    %v2478 = vsel %vm2476, %v2460, 0
    %2480 = vmatprep.subr.mxu0 0.0
    %2481 = vmatpush1.msra.mxu0 0.0
    %2482 = vmatprep.subr.mxu0 0.0
    %2483 = vmatpush1.msra.mxu0 0.0
    %2484 = vmatprep.subr.mxu0 0.0
    %2485 = vmatpush1.msra.mxu0 0.0
    %2486 = vmatprep.subr.mxu0 0.0
    %2487 = vmatpush1.msra.mxu0 0.0
    %2488 = vmatprep.subr.mxu0 0.0
    %2489 = vmatpush1.msra.mxu0 0.0
    %2490 = vmatprep.subr.mxu0 0.0
    %2491 = vmatpush1.msra.mxu0 0.0
    %2492 = vmatprep.subr.mxu0 0.0
    %2493 = vmatpush1.msra.mxu0 0.0
    %2494 = vmatprep.subr.mxu0 0.0
    %2495 = vmatpush1.msra.mxu0 0.0
    %2496 = vmatprep.subr.mxu0 0.0
    %2497 = vmatpush1.msra.mxu0 %v2468
    %2498 = vmatprep.subr.mxu0 0.0
    %2499 = vmatpush1.msra.mxu0 %v2467
    %2500 = vmatprep.subr.mxu0 0.0
    %2501 = vmatpush1.msra.mxu0 %v2466
    %2502 = vmatprep.subr.mxu0 0.0
    %2503 = vmatpush1.msra.mxu0 %v2465
    %2504 = vmatprep.subr.mxu0 0.0
    %2505 = vmatpush1.msra.mxu0 %v2464
    %2506 = vmatprep.subr.mxu0 0.0
    %2507 = vmatpush1.msra.mxu0 %v2463
    %2508 = vmatprep.subr.mxu0 0.0
    %2509 = vmatpush1.msra.mxu0 %v2462
    %2510 = vmatprep.subr.mxu0 0.0
    %2511 = vmatpush1.msra.mxu0 %v2461
    %2512 = vmatprep.subr.mxu0 0.0
    %2513 = vmatpush2.msra.mxu0 0.0
    %2514 = vmatprep.subr.mxu0 0.0
    %2515 = vmatpush2.msra.mxu0 0.0
    %2516 = vmatprep.subr.mxu0 0.0
    %2517 = vmatpush2.msra.mxu0 0.0
    %2518 = vmatprep.subr.mxu0 0.0
    %2519 = vmatpush2.msra.mxu0 0.0
    %2520 = vmatprep.subr.mxu0 0.0
    %2521 = vmatpush2.msra.mxu0 0.0
    %2522 = vmatprep.subr.mxu0 0.0
    %2523 = vmatpush2.msra.mxu0 0.0
    %2524 = vmatprep.subr.mxu0 0.0
    %2525 = vmatpush2.msra.mxu0 0.0
    %2526 = vmatprep.subr.mxu0 0.0
    %2527 = vmatpush2.msra.mxu0 0.0
    %2528 = vmatprep.subr.mxu0 0.0
    %2529 = vmatpush2.msra.mxu0 0.0
    %2530 = vmatprep.subr.mxu0 0.0
    %2531 = vmatpush2.msra.mxu0 0.0
    %2532 = vmatprep.subr.mxu0 0.0
    %2533 = vmatpush2.msra.mxu0 0.0
    %2534 = vmatprep.subr.mxu0 0.0
    %2535 = vmatpush2.msra.mxu0 0.0
    %2536 = vmatprep.subr.mxu0 0.0
    %2537 = vmatpush2.msra.mxu0 0.0
    %2538 = vmatprep.subr.mxu0 0.0
    %2539 = vmatpush2.msra.mxu0 0.0
    %2540 = vmatprep.subr.mxu0 0.0
    %2541 = vmatpush2.msra.mxu0 0.0
    %2542 = vmatprep.subr.mxu0 0.0
    %2543 = vmatpush2.msra.mxu0 0.0
    %2544 = vmatprep.mubr.f32.mxu0 0.0
    %2545 = vmatmul.mubr.f32.gmra.mxu0 %v2478
    %v2546 = vpop.f32.mrf.mxu0
    %v2547 = vadd.f32 %v2474, %v2546
    %v2548 = vpop.f32.mrf.mxu0
    %2549 = vdwg.mxu0
    %v2550 = vsub.f32 0.0, %v2547
    %v2551 = vmul.f32 %v2550, 1.442695
    %v2552 = vpow.pop %v2551
    %v2553 = vadd.f32 %v2552, 1.0
    %v2554 = vrcp.pop %v2553
    %vm2555 = vcmask 7168
    %2556 = vst.msk [vmem:[%s13] sm:$0xff] %vm2555, %v2554
    // Predicated region
    $region74: #{tpu_custom_call.1} parent=1 // pred_check
      _
    $region75: #{tpu_custom_call.1} parent=1 // pred_check_branch
      %2558 = sbr.rel (0) target = $region77
    $region76: #{tpu_custom_call.1} parent=1 // pred_region
      _
    $region77: #{tpu_custom_call.1} parent=1 // pred_fallthru
      _
    // Predicated region
    $region78: #{tpu_custom_call.1} parent=1 // pred_check
      _
    $region79: #{tpu_custom_call.1} parent=1 // pred_check_branch
      %2560 = sbr.rel (0) target = $region81
    $region80: #{tpu_custom_call.1} parent=1 // pred_region
      %s2562 = ssub.s32 128, 128
      %2563 = vsyncadd [#allocation7], %s2562
      %s2564 = sshll.u32 [#allocation14], 4
      %s2565 = int_to_ptr.vmem [resolvable:$true] %s2564
      %2570 = dma.vmem_to_hbm [thread:$0]  %s2565, 128, %s14, [#allocation7], 64, 64, 4
    $region81: #{tpu_custom_call.1} parent=1 // pred_fallthru
      _
    // Predicated region
    $region82: #{tpu_custom_call.1} parent=1 // pred_check
      _
    $region83: #{tpu_custom_call.1} parent=1 // pred_check_branch
      %2572 = sbr.rel (0) target = $region85
    $region84: #{tpu_custom_call.1} parent=1 // pred_region
      _
    $region85: #{tpu_custom_call.1} parent=1 // pred_fallthru
      _
    // Predicated region
    $region86: #{tpu_custom_call.1} parent=1 // pred_check
      _
    $region87: #{tpu_custom_call.1} parent=1 // pred_check_branch
      %2574 = sbr.rel (0) target = $region89
    $region88: #{tpu_custom_call.1} parent=1 // pred_region
      %2575 = dma.done [#allocation7], 128
    $region89: #{tpu_custom_call.1} parent=1 // pred_fallthru
      _
    %2576 = vsyncpa [#allocation6], 1
    %2577 = vsyncpa [#allocation9], 1
    %2578 = vsyncpa [#allocation12], 1
    %2579 = vsyncpa [#allocation7], 1

</llo_original>
